<compile_context>
chip_gen: v7x
topology: tpu7x:2x2x1
jax: 0.10.0
libtpu: 0.0.40
codegen_flags: <defaults>
</compile_context>

<pallas_src>
import math
from functools import partial

import jax
import jax.numpy as jnp
from jax import lax
from jax.experimental import pallas as pl
from jax.experimental.pallas import tpu as pltpu


# ----------------------------------------------------------------------------
# Fused kernel factory
# ----------------------------------------------------------------------------
def _make_fused_kernel(n, H, num_layers, bidirectional, vocab):
    """One kernel: embedding lookup + [GRU layer x L] (both dirs) + fc1 + log_softmax."""
    dirs = 2 if bidirectional else 1
    HD = dirs * H            # carried hidden width   ([h_f | h_b] for bidir)
    G = 3 * HD               # gate width             ([r_f r_b z_f z_b n_f n_b] / [r z n])

    def kernel(seq_ref, *refs):
        h_scr = refs[-1]     # VMEM scratch (n, HD): per-layer output staging
        out_ref = refs[-2]
        w = refs[:-2]        # 4 per layer: (wih, gxb, whh, ghb_n), then fc_w, fc_b

        # ---- embedding gather fused as a one-hot (review #1) ----------------
        seq = seq_ref[...]                                          # (n, 1) int32
        iota_v = lax.broadcasted_iota(jnp.int32, (n, vocab), 1)
        onehot = jnp.where(iota_v == seq, 1.0, 0.0).astype(jnp.float32)  # (n, vocab)

        if bidirectional:
            # column c of the gate axis is "forward" iff it falls in
            # [0,H) u [2H,3H) u [4H,5H)   (layout [r_f r_b z_f z_b n_f n_b]).
            col = lax.broadcasted_iota(jnp.int32, (1, G), 1)
            fwd_mask = ((col < H)
                        | ((col >= 2 * H) & (col < 3 * H))
                        | ((col >= 4 * H) & (col < 5 * H)))

        x = onehot  # layer-0 LHS; its W_ih already has the embedding folded in
        for l in range(num_layers):
            wih_ref, gxb_ref, whh_ref, ghbn_ref = w[4 * l:4 * l + 4]

            # input-side gates for the whole sequence: one matmul per layer
            gx = jnp.dot(x, wih_ref[...],
                         preferred_element_type=jnp.float32) + gxb_ref[...]  # (n, G)

            # direction select hoisted out of the recurrence (review #2):
            # fwd gate columns read time step s, bwd columns read step n-1-s.
            rows = [gx[s:s + 1, :] for s in range(n)]
            if bidirectional:
                rows = [jnp.where(fwd_mask, rows[s], rows[n - 1 - s])
                        for s in range(n)]

            ghbn = ghbn_ref[...]                                    # (1, HD)  b_hh(n)
            h = jnp.zeros((1, HD), jnp.float32)
            for s in range(n):       # static unroll: n is a small compile-time const
                # recurrent RHS consumed straight from its ref (review #6)
                gh = jnp.dot(h, whh_ref[...],
                             preferred_element_type=jnp.float32)    # (1, G)
                rz = jax.nn.sigmoid(rows[s][:, :2 * HD] + gh[:, :2 * HD])
                r = rz[:, :HD]                                      # [r_f r_b] / [r]
                z = rz[:, HD:2 * HD]                                # [z_f z_b] / [z]
                ng = jnp.tanh(rows[s][:, 2 * HD:] + r * (gh[:, 2 * HD:] + ghbn))
                h = (1.0 - z) * ng + z * h
                # store per-step rows straight into VMEM scratch, already in
                # sequence order (fwd @ t=s, bwd @ t=n-1-s): no post-loop
                # reversal/concat, and live ranges stay bounded (review #6).
                if bidirectional:
                    h_scr[s:s + 1, :H] = h[:, :H]
                    h_scr[n - 1 - s:n - s, H:2 * H] = h[:, H:2 * H]
                else:
                    h_scr[s:s + 1, :] = h
            x = h_scr[...]                                          # (n, HD)

        # ---- fc1 + log_softmax ----------------------------------------------
        fc_w = w[-2][...]                     # (HD, T_pad), zero cols past T
        fc_b = w[-1][...]                     # (1, T_pad), -1e30 past T
        logits = jnp.dot(x, fc_w, preferred_element_type=jnp.float32) + fc_b
        m = jnp.max(logits, axis=1, keepdims=True)
        sh = logits - m
        lse = jnp.log(jnp.sum(jnp.exp(sh), axis=1, keepdims=True))
        out_ref[...] = sh - lse               # single lane-dense (n, T_pad) store

    return kernel


# ----------------------------------------------------------------------------
# Host-side parameter preparation (PyTorch layout -> fused-kernel layout)
# ----------------------------------------------------------------------------
def prepare_fused_params(params, num_layers, bidirectional, H, T):
    emb = params["embedding"].astype(jnp.float32)                   # (vocab, E)
    args = []
    for l in range(num_layers):
        p = params["gru"][l]
        if bidirectional:
            wih_f, whh_f, bih_f, bhh_f = p["w_ih_f"], p["w_hh_f"], p["b_ih_f"], p["b_hh_f"]
            wih_b, whh_b, bih_b, bhh_b = p["w_ih_b"], p["w_hh_b"], p["b_ih_b"], p["b_hh_b"]

            # gate-column order: [r_f r_b z_f z_b n_f n_b]
            wih_cat = jnp.concatenate(
                [wih_f[0:H].T, wih_b[0:H].T,
                 wih_f[H:2 * H].T, wih_b[H:2 * H].T,
                 wih_f[2 * H:3 * H].T, wih_b[2 * H:3 * H].T], axis=1)       # (E_in, 6H)

            gx_bias = jnp.concatenate(
                [bih_f[0:H] + bhh_f[0:H], bih_b[0:H] + bhh_b[0:H],
                 bih_f[H:2 * H] + bhh_f[H:2 * H], bih_b[H:2 * H] + bhh_b[H:2 * H],
                 bih_f[2 * H:3 * H], bih_b[2 * H:3 * H]])[None, :]          # (1, 6H)

            zH = jnp.zeros((H, H), jnp.float32)
            row_f = jnp.concatenate(
                [whh_f[0:H].T, zH, whh_f[H:2 * H].T, zH, whh_f[2 * H:3 * H].T, zH], axis=1)
            row_b = jnp.concatenate(
                [zH, whh_b[0:H].T, zH, whh_b[H:2 * H].T, zH, whh_b[2 * H:3 * H].T], axis=1)
            whh_blk = jnp.concatenate([row_f, row_b], axis=0)               # (2H, 6H)

            ghb_n = jnp.concatenate(
                [bhh_f[2 * H:3 * H], bhh_b[2 * H:3 * H]])[None, :]          # (1, 2H)
        else:
            wih, whh, bih, bhh = p["w_ih_f"], p["w_hh_f"], p["b_ih_f"], p["b_hh_f"]
            wih_cat = wih.T                                                 # (E_in, 3H)
            gx_bias = jnp.concatenate(
                [bih[0:H] + bhh[0:H], bih[H:2 * H] + bhh[H:2 * H],
                 bih[2 * H:3 * H]])[None, :]                                # (1, 3H)
            whh_blk = whh.T                                                 # (H, 3H)
            ghb_n = bhh[2 * H:3 * H][None, :]                               # (1, H)

        if l == 0:
            # Fold the embedding table into layer 0's input weight so the
            # in-kernel one-hot matmul does gather + input matmul at once.
            # HIGHEST precision keeps the fold bit-faithful to f32.
            wih_eff = jnp.dot(emb, wih_cat, precision=jax.lax.Precision.HIGHEST)
        else:
            wih_eff = wih_cat
        args += [wih_eff, gx_bias, whh_blk, ghb_n]

    # fc1, padded to a lane-dense output width (pad logits get bias -1e30 so
    # they vanish in the softmax; real columns are untouched).
    D = H * (2 if bidirectional else 1)
    T_pad = max(128, ((T + 127) // 128) * 128)
    fc_w = jnp.zeros((D, T_pad), jnp.float32).at[:, :T].set(params["fc_w"].T)
    fc_b = jnp.full((1, T_pad), -1e30, jnp.float32).at[0, :T].set(params["fc_b"])
    args += [fc_w, fc_b]
    return args, T_pad


# ----------------------------------------------------------------------------
# Wrapper
# ----------------------------------------------------------------------------
def _cost_estimate(n, vocab, H, num_layers, bidirectional, T_pad, fused_args):
    dirs = 2 if bidirectional else 1
    HD = dirs * H
    G = 3 * HD
    flops = 2 * n * vocab * G                      # layer-0 one-hot @ (E @ W_ih0)
    for l in range(num_layers):
        if l > 0:
            flops += 2 * n * HD * G                # input-side matmul
        flops += 2 * n * HD * G                    # recurrent matmuls over n steps
    flops += 2 * n * HD * T_pad                    # fc1
    transcendentals = num_layers * n * G + 2 * n * T_pad
    bytes_accessed = n * 4 + sum(int(a.size) * 4 for a in fused_args) + n * T_pad * 4
    return pl.CostEstimate(flops=flops, transcendentals=transcendentals,
                           bytes_accessed=bytes_accessed)


def gru_classifier1_forward(seq, fused_args, *, n, H, num_layers,
                            bidirectional, T, T_pad, vocab):
    """Mirrors GRUClassifier1.forward in eval mode (training=False)."""
    seq2d = seq.reshape(n, 1).astype(jnp.int32)
    HD = H * (2 if bidirectional else 1)

    kernel = _make_fused_kernel(n, H, num_layers, bidirectional, vocab)
    vmem = pl.BlockSpec(memory_space=pltpu.MemorySpace.VMEM)
    n_in = 1 + len(fused_args)

    out_pad = pl.pallas_call(
        kernel,
        out_shape=jax.ShapeDtypeStruct((n, T_pad), jnp.float32),
        in_specs=[vmem] * n_in,
        out_specs=vmem,
        scratch_shapes=[pltpu.VMEM((n, HD), jnp.float32)],
        cost_estimate=_cost_estimate(n, vocab, H, num_layers, bidirectional,
                                     T_pad, fused_args),
    )(seq2d, *fused_args)
    # Module output is (n, tagset_size); slice the lane-padded logits back.
    return out_pad[:, :T]


# ----------------------------------------------------------------------------
# Deterministic parameter init (PyTorch nn.GRU / nn.Linear layout)
# ----------------------------------------------------------------------------
def init_params(key, vocab_size, E, H, T, num_layers, bidirectional):
    dirs = 2 if bidirectional else 1
    bound = 1.0 / math.sqrt(H)
    keys = iter(jax.random.split(key, 1 + num_layers * dirs * 4 + 2))

    def u(shape, b):
        return jax.random.uniform(next(keys), shape, jnp.float32, -b, b)

    params = {
        "embedding": jax.random.normal(next(keys), (vocab_size, E), jnp.float32),
        "gru": [],
    }
    for l in range(num_layers):
        in_dim = E if l == 0 else H * dirs
        p = {}
        for suf in (("_f", "_b") if bidirectional else ("_f",)):
            p["w_ih" + suf] = u((3 * H, in_dim), bound)
            p["w_hh" + suf] = u((3 * H, H), bound)
            p["b_ih" + suf] = u((3 * H,), bound)
            p["b_hh" + suf] = u((3 * H,), bound)
        params["gru"].append(p)
    D = H * dirs
    fb = 1.0 / math.sqrt(D)
    params["fc_w"] = u((T, D), fb)
    params["fc_b"] = u((T,), fb)
    return params


# ----------------------------------------------------------------------------
# Pure-JAX reference (faithful to PyTorch nn.GRU semantics) for checking
# ----------------------------------------------------------------------------
def _gru_dir_ref(x, w_ih, w_hh, b_ih, b_hh):
    H = w_hh.shape[1]

    def step(h, x_t):
        gi = w_ih @ x_t + b_ih
        gh = w_hh @ h + b_hh
        r = jax.nn.sigmoid(gi[:H] + gh[:H])
        z = jax.nn.sigmoid(gi[H:2 * H] + gh[H:2 * H])
        ng = jnp.tanh(gi[2 * H:] + r * gh[2 * H:])
        h_new = (1.0 - z) * ng + z * h
        return h_new, h_new

    _, hs = lax.scan(step, jnp.zeros((H,), jnp.float32), x)
    return hs


def _forward_ref(seq, params, *, num_layers, bidirectional):
    x = params["embedding"][seq].astype(jnp.float32)
    for l in range(num_layers):
        p = params["gru"][l]
        fwd = _gru_dir_ref(x, p["w_ih_f"], p["w_hh_f"], p["b_ih_f"], p["b_hh_f"])
        if bidirectional:
            bwd = _gru_dir_ref(x[::-1], p["w_ih_b"], p["w_hh_b"],
                               p["b_ih_b"], p["b_hh_b"])[::-1]
            x = jnp.concatenate([fwd, bwd], axis=1)
        else:
            x = fwd
    logits = x @ params["fc_w"].T + params["fc_b"]
    return jax.nn.log_softmax(logits, axis=1)


# ----------------------------------------------------------------------------
if __name__ == "__main__":
    embedding_dim = 8
    hidden_dim = 32
    vocab_size = 50
    tagset_size = 5
    seq_len = 8

    key = jax.random.PRNGKey(0)
    k_param, k_seq, k_param2 = jax.random.split(key, 3)
    seq = jax.random.randint(k_seq, (seq_len,), 0, vocab_size, jnp.int32)

    # --- primary config: 2 layers, bidirectional ----------------------------
    num_gru_layers = 2
    is_bidirectional = True
    params = init_params(k_param, vocab_size, embedding_dim, hidden_dim,
                         tagset_size, num_gru_layers, is_bidirectional)
    fused_args, T_pad = prepare_fused_params(params, num_gru_layers,
                                             is_bidirectional, hidden_dim,
                                             tagset_size)
    fwd_fn = jax.jit(partial(gru_classifier1_forward, n=seq_len, H=hidden_dim,
                             num_layers=num_gru_layers,
                             bidirectional=is_bidirectional,
                             T=tagset_size, T_pad=T_pad, vocab=vocab_size))
    out = jax.block_until_ready(fwd_fn(seq, fused_args))
    ref = _forward_ref(seq, params, num_layers=num_gru_layers,
                       bidirectional=is_bidirectional)
    assert out.shape == (seq_len, tagset_size)
    assert bool(jnp.all(jnp.isfinite(out)))
    assert bool(jnp.allclose(out, ref, atol=1e-4, rtol=1e-4))

    # --- secondary config: 1 layer, unidirectional ---------------------------
    params_u = init_params(k_param2, vocab_size, embedding_dim, hidden_dim,
                           tagset_size, 1, False)
    fused_u, T_pad_u = prepare_fused_params(params_u, 1, False, hidden_dim,
                                            tagset_size)
    fwd_u = jax.jit(partial(gru_classifier1_forward, n=seq_len, H=hidden_dim,
                            num_layers=1, bidirectional=False,
                            T=tagset_size, T_pad=T_pad_u, vocab=vocab_size))
    out_u = jax.block_until_ready(fwd_u(seq, fused_u))
    ref_u = _forward_ref(seq, params_u, num_layers=1, bidirectional=False)
    assert out_u.shape == (seq_len, tagset_size)
    assert bool(jnp.all(jnp.isfinite(out_u)))
    assert bool(jnp.allclose(out_u, ref_u, atol=1e-4, rtol=1e-4))

    print("KERNEL_OK")
</pallas_src>

<mosaic_0001>
module attributes {stable_mosaic.version = 11 : i64} {
  func.func @kernel(%arg0: memref<8x1xi32, #tpu.memory_space<vmem>>, %arg1: memref<50x192xf32, #tpu.memory_space<vmem>>, %arg2: memref<1x192xf32, #tpu.memory_space<vmem>>, %arg3: memref<64x192xf32, #tpu.memory_space<vmem>>, %arg4: memref<1x64xf32, #tpu.memory_space<vmem>>, %arg5: memref<64x192xf32, #tpu.memory_space<vmem>>, %arg6: memref<1x192xf32, #tpu.memory_space<vmem>>, %arg7: memref<64x192xf32, #tpu.memory_space<vmem>>, %arg8: memref<1x64xf32, #tpu.memory_space<vmem>>, %arg9: memref<64x128xf32, #tpu.memory_space<vmem>>, %arg10: memref<1x128xf32, #tpu.memory_space<vmem>>, %arg11: memref<8x128xf32, #tpu.memory_space<vmem>>, %arg12: memref<8x64xf32, #tpu.memory_space<vmem>>) attributes {dimension_semantics = [], scalar_prefetch = 0 : i64, scratch_operands = 1 : i64, tpu.core_type = #tpu.core_type<tc>} {
    %c0 = arith.constant 0 : index
    %c0_0 = arith.constant 0 : index
    %0 = vector.load %arg0[%c0, %c0_0] : memref<8x1xi32, #tpu.memory_space<vmem>>, vector<8x1xi32>
    %1 = tpu.iota {dimensions = array<i32: 1>} : vector<8x50xi32>
    %2 = vector.broadcast %0 : vector<8x1xi32> to vector<8x50xi32>
    %3 = arith.cmpi eq, %1, %2 : vector<8x50xi32>
    %cst = arith.constant 1.000000e+00 : f32
    %cst_1 = arith.constant 0.000000e+00 : f32
    %4 = vector.broadcast %cst : f32 to vector<8x50xf32>
    %5 = vector.broadcast %cst_1 : f32 to vector<8x50xf32>
    %6 = arith.select %3, %4, %5 : vector<8x50xi1>, vector<8x50xf32>
    %7 = tpu.iota {dimensions = array<i32: 1>} : vector<1x192xi32>
    %c32_i32 = arith.constant 32 : i32
    %8 = vector.broadcast %c32_i32 : i32 to vector<1x192xi32>
    %9 = arith.cmpi slt, %7, %8 : vector<1x192xi32>
    %c64_i32 = arith.constant 64 : i32
    %10 = vector.broadcast %c64_i32 : i32 to vector<1x192xi32>
    %11 = arith.cmpi sge, %7, %10 : vector<1x192xi32>
    %c96_i32 = arith.constant 96 : i32
    %12 = vector.broadcast %c96_i32 : i32 to vector<1x192xi32>
    %13 = arith.cmpi slt, %7, %12 : vector<1x192xi32>
    %14 = arith.andi %11, %13 : vector<1x192xi1>
    %15 = arith.ori %9, %14 : vector<1x192xi1>
    %c128_i32 = arith.constant 128 : i32
    %16 = vector.broadcast %c128_i32 : i32 to vector<1x192xi32>
    %17 = arith.cmpi sge, %7, %16 : vector<1x192xi32>
    %c160_i32 = arith.constant 160 : i32
    %18 = vector.broadcast %c160_i32 : i32 to vector<1x192xi32>
    %19 = arith.cmpi slt, %7, %18 : vector<1x192xi32>
    %20 = arith.andi %17, %19 : vector<1x192xi1>
    %21 = arith.ori %15, %20 : vector<1x192xi1>
    %c0_2 = arith.constant 0 : index
    %c0_3 = arith.constant 0 : index
    %22 = vector.load %arg1[%c0_2, %c0_3] : memref<50x192xf32, #tpu.memory_space<vmem>>, vector<50x192xf32>
    %cst_4 = arith.constant dense<0.000000e+00> : vector<8x192xf32>
    %23 = tpu.matmul %6, %22, %cst_4 {dimension_numbers = #tpu.dot_dimension_numbers<[1], [0], [0], [1], [0, 0, 1, 1], [], []>} : vector<8x50xf32>, vector<50x192xf32>, vector<8x192xf32> -> vector<8x192xf32>
    %c0_5 = arith.constant 0 : index
    %c0_6 = arith.constant 0 : index
    %24 = vector.load %arg2[%c0_5, %c0_6] : memref<1x192xf32, #tpu.memory_space<vmem>>, vector<1x192xf32>
    %25 = vector.broadcast %24 : vector<1x192xf32> to vector<8x192xf32>
    %26 = arith.addf %23, %25 : vector<8x192xf32>
    %27 = vector.extract_strided_slice %26 {offsets = [0, 0], sizes = [1, 192], strides = [1, 1]} : vector<8x192xf32> to vector<1x192xf32>
    %28 = vector.extract_strided_slice %26 {offsets = [1, 0], sizes = [1, 192], strides = [1, 1]} : vector<8x192xf32> to vector<1x192xf32>
    %29 = vector.extract_strided_slice %26 {offsets = [2, 0], sizes = [1, 192], strides = [1, 1]} : vector<8x192xf32> to vector<1x192xf32>
    %30 = vector.extract_strided_slice %26 {offsets = [3, 0], sizes = [1, 192], strides = [1, 1]} : vector<8x192xf32> to vector<1x192xf32>
    %31 = vector.extract_strided_slice %26 {offsets = [4, 0], sizes = [1, 192], strides = [1, 1]} : vector<8x192xf32> to vector<1x192xf32>
    %32 = vector.extract_strided_slice %26 {offsets = [5, 0], sizes = [1, 192], strides = [1, 1]} : vector<8x192xf32> to vector<1x192xf32>
    %33 = vector.extract_strided_slice %26 {offsets = [6, 0], sizes = [1, 192], strides = [1, 1]} : vector<8x192xf32> to vector<1x192xf32>
    %34 = vector.extract_strided_slice %26 {offsets = [7, 0], sizes = [1, 192], strides = [1, 1]} : vector<8x192xf32> to vector<1x192xf32>
    %35 = arith.select %21, %27, %34 : vector<1x192xi1>, vector<1x192xf32>
    %36 = arith.select %21, %28, %33 : vector<1x192xi1>, vector<1x192xf32>
    %37 = arith.select %21, %29, %32 : vector<1x192xi1>, vector<1x192xf32>
    %38 = arith.select %21, %30, %31 : vector<1x192xi1>, vector<1x192xf32>
    %39 = arith.select %21, %31, %30 : vector<1x192xi1>, vector<1x192xf32>
    %40 = arith.select %21, %32, %29 : vector<1x192xi1>, vector<1x192xf32>
    %41 = arith.select %21, %33, %28 : vector<1x192xi1>, vector<1x192xf32>
    %42 = arith.select %21, %34, %27 : vector<1x192xi1>, vector<1x192xf32>
    %c0_7 = arith.constant 0 : index
    %c0_8 = arith.constant 0 : index
    %43 = vector.load %arg4[%c0_7, %c0_8] : memref<1x64xf32, #tpu.memory_space<vmem>>, vector<1x64xf32>
    %cst_9 = arith.constant 0.000000e+00 : f32
    %44 = vector.broadcast %cst_9 : f32 to vector<1x64xf32>
    %c0_10 = arith.constant 0 : index
    %c0_11 = arith.constant 0 : index
    %45 = vector.load %arg3[%c0_10, %c0_11] : memref<64x192xf32, #tpu.memory_space<vmem>>, vector<64x192xf32>
    %cst_12 = arith.constant dense<0.000000e+00> : vector<1x192xf32>
    %46 = tpu.matmul %44, %45, %cst_12 {dimension_numbers = #tpu.dot_dimension_numbers<[1], [0], [0], [1], [0, 0, 1, 1], [], []>} : vector<1x64xf32>, vector<64x192xf32>, vector<1x192xf32> -> vector<1x192xf32>
    %47 = vector.extract_strided_slice %35 {offsets = [0, 0], sizes = [1, 128], strides = [1, 1]} : vector<1x192xf32> to vector<1x128xf32>
    %48 = vector.extract_strided_slice %46 {offsets = [0, 0], sizes = [1, 128], strides = [1, 1]} : vector<1x192xf32> to vector<1x128xf32>
    %49 = arith.addf %47, %48 : vector<1x128xf32>
    %50 = arith.negf %49 : vector<1x128xf32>
    %51 = math.exp %50 : vector<1x128xf32>
    %cst_13 = arith.constant 1.000000e+00 : f32
    %52 = vector.broadcast %cst_13 : f32 to vector<1x128xf32>
    %53 = arith.addf %52, %51 : vector<1x128xf32>
    %54 = arith.divf %52, %53 : vector<1x128xf32>
    %55 = vector.extract_strided_slice %54 {offsets = [0, 0], sizes = [1, 64], strides = [1, 1]} : vector<1x128xf32> to vector<1x64xf32>
    %56 = vector.extract_strided_slice %54 {offsets = [0, 64], sizes = [1, 64], strides = [1, 1]} : vector<1x128xf32> to vector<1x64xf32>
    %57 = vector.extract_strided_slice %35 {offsets = [0, 128], sizes = [1, 64], strides = [1, 1]} : vector<1x192xf32> to vector<1x64xf32>
    %58 = vector.extract_strided_slice %46 {offsets = [0, 128], sizes = [1, 64], strides = [1, 1]} : vector<1x192xf32> to vector<1x64xf32>
    %59 = arith.addf %58, %43 : vector<1x64xf32>
    %60 = arith.mulf %55, %59 : vector<1x64xf32>
    %61 = arith.addf %57, %60 : vector<1x64xf32>
    %62 = math.tanh %61 : vector<1x64xf32>
    %cst_14 = arith.constant 1.000000e+00 : f32
    %63 = vector.broadcast %cst_14 : f32 to vector<1x64xf32>
    %64 = arith.subf %63, %56 : vector<1x64xf32>
    %65 = arith.mulf %64, %62 : vector<1x64xf32>
    %66 = arith.mulf %56, %44 : vector<1x64xf32>
    %67 = arith.addf %65, %66 : vector<1x64xf32>
    %68 = vector.extract_strided_slice %67 {offsets = [0, 0], sizes = [1, 32], strides = [1, 1]} : vector<1x64xf32> to vector<1x32xf32>
    %c0_15 = arith.constant 0 : index
    %c0_16 = arith.constant 0 : index
    %69 = vector.load %arg12[%c0_15, %c0_16] : memref<8x64xf32, #tpu.memory_space<vmem>>, vector<1x32xf32>
    tpu.vector_store %arg12[%c0_15, %c0_16], %68 {strides = array<i32>} : memref<8x64xf32, #tpu.memory_space<vmem>>, vector<1x32xf32>,
    %70 = vector.extract_strided_slice %67 {offsets = [0, 32], sizes = [1, 32], strides = [1, 1]} : vector<1x64xf32> to vector<1x32xf32>
    %c7 = arith.constant 7 : index
    %c32 = arith.constant 32 : index
    %71 = vector.load %arg12[%c7, %c32] : memref<8x64xf32, #tpu.memory_space<vmem>>, vector<1x32xf32>
    tpu.vector_store %arg12[%c7, %c32], %70 {strides = array<i32>} : memref<8x64xf32, #tpu.memory_space<vmem>>, vector<1x32xf32>,
    %c0_17 = arith.constant 0 : index
    %c0_18 = arith.constant 0 : index
    %72 = vector.load %arg3[%c0_17, %c0_18] : memref<64x192xf32, #tpu.memory_space<vmem>>, vector<64x192xf32>
    %cst_19 = arith.constant dense<0.000000e+00> : vector<1x192xf32>
    %73 = tpu.matmul %67, %72, %cst_19 {dimension_numbers = #tpu.dot_dimension_numbers<[1], [0], [0], [1], [0, 0, 1, 1], [], []>} : vector<1x64xf32>, vector<64x192xf32>, vector<1x192xf32> -> vector<1x192xf32>
    %74 = vector.extract_strided_slice %36 {offsets = [0, 0], sizes = [1, 128], strides = [1, 1]} : vector<1x192xf32> to vector<1x128xf32>
    %75 = vector.extract_strided_slice %73 {offsets = [0, 0], sizes = [1, 128], strides = [1, 1]} : vector<1x192xf32> to vector<1x128xf32>
    %76 = arith.addf %74, %75 : vector<1x128xf32>
    %77 = arith.negf %76 : vector<1x128xf32>
    %78 = math.exp %77 : vector<1x128xf32>
    %cst_20 = arith.constant 1.000000e+00 : f32
    %79 = vector.broadcast %cst_20 : f32 to vector<1x128xf32>
    %80 = arith.addf %79, %78 : vector<1x128xf32>
    %81 = arith.divf %79, %80 : vector<1x128xf32>
    %82 = vector.extract_strided_slice %81 {offsets = [0, 0], sizes = [1, 64], strides = [1, 1]} : vector<1x128xf32> to vector<1x64xf32>
    %83 = vector.extract_strided_slice %81 {offsets = [0, 64], sizes = [1, 64], strides = [1, 1]} : vector<1x128xf32> to vector<1x64xf32>
    %84 = vector.extract_strided_slice %36 {offsets = [0, 128], sizes = [1, 64], strides = [1, 1]} : vector<1x192xf32> to vector<1x64xf32>
    %85 = vector.extract_strided_slice %73 {offsets = [0, 128], sizes = [1, 64], strides = [1, 1]} : vector<1x192xf32> to vector<1x64xf32>
    %86 = arith.addf %85, %43 : vector<1x64xf32>
    %87 = arith.mulf %82, %86 : vector<1x64xf32>
    %88 = arith.addf %84, %87 : vector<1x64xf32>
    %89 = math.tanh %88 : vector<1x64xf32>
    %cst_21 = arith.constant 1.000000e+00 : f32
    %90 = vector.broadcast %cst_21 : f32 to vector<1x64xf32>
    %91 = arith.subf %90, %83 : vector<1x64xf32>
    %92 = arith.mulf %91, %89 : vector<1x64xf32>
    %93 = arith.mulf %83, %67 : vector<1x64xf32>
    %94 = arith.addf %92, %93 : vector<1x64xf32>
    %95 = vector.extract_strided_slice %94 {offsets = [0, 0], sizes = [1, 32], strides = [1, 1]} : vector<1x64xf32> to vector<1x32xf32>
    %c1 = arith.constant 1 : index
    %c0_22 = arith.constant 0 : index
    %96 = vector.load %arg12[%c1, %c0_22] : memref<8x64xf32, #tpu.memory_space<vmem>>, vector<1x32xf32>
    tpu.vector_store %arg12[%c1, %c0_22], %95 {strides = array<i32>} : memref<8x64xf32, #tpu.memory_space<vmem>>, vector<1x32xf32>,
    %97 = vector.extract_strided_slice %94 {offsets = [0, 32], sizes = [1, 32], strides = [1, 1]} : vector<1x64xf32> to vector<1x32xf32>
    %c6 = arith.constant 6 : index
    %c32_23 = arith.constant 32 : index
    %98 = vector.load %arg12[%c6, %c32_23] : memref<8x64xf32, #tpu.memory_space<vmem>>, vector<1x32xf32>
    tpu.vector_store %arg12[%c6, %c32_23], %97 {strides = array<i32>} : memref<8x64xf32, #tpu.memory_space<vmem>>, vector<1x32xf32>,
    %c0_24 = arith.constant 0 : index
    %c0_25 = arith.constant 0 : index
    %99 = vector.load %arg3[%c0_24, %c0_25] : memref<64x192xf32, #tpu.memory_space<vmem>>, vector<64x192xf32>
    %cst_26 = arith.constant dense<0.000000e+00> : vector<1x192xf32>
    %100 = tpu.matmul %94, %99, %cst_26 {dimension_numbers = #tpu.dot_dimension_numbers<[1], [0], [0], [1], [0, 0, 1, 1], [], []>} : vector<1x64xf32>, vector<64x192xf32>, vector<1x192xf32> -> vector<1x192xf32>
    %101 = vector.extract_strided_slice %37 {offsets = [0, 0], sizes = [1, 128], strides = [1, 1]} : vector<1x192xf32> to vector<1x128xf32>
    %102 = vector.extract_strided_slice %100 {offsets = [0, 0], sizes = [1, 128], strides = [1, 1]} : vector<1x192xf32> to vector<1x128xf32>
    %103 = arith.addf %101, %102 : vector<1x128xf32>
    %104 = arith.negf %103 : vector<1x128xf32>
    %105 = math.exp %104 : vector<1x128xf32>
    %cst_27 = arith.constant 1.000000e+00 : f32
    %106 = vector.broadcast %cst_27 : f32 to vector<1x128xf32>
    %107 = arith.addf %106, %105 : vector<1x128xf32>
    %108 = arith.divf %106, %107 : vector<1x128xf32>
    %109 = vector.extract_strided_slice %108 {offsets = [0, 0], sizes = [1, 64], strides = [1, 1]} : vector<1x128xf32> to vector<1x64xf32>
    %110 = vector.extract_strided_slice %108 {offsets = [0, 64], sizes = [1, 64], strides = [1, 1]} : vector<1x128xf32> to vector<1x64xf32>
    %111 = vector.extract_strided_slice %37 {offsets = [0, 128], sizes = [1, 64], strides = [1, 1]} : vector<1x192xf32> to vector<1x64xf32>
    %112 = vector.extract_strided_slice %100 {offsets = [0, 128], sizes = [1, 64], strides = [1, 1]} : vector<1x192xf32> to vector<1x64xf32>
    %113 = arith.addf %112, %43 : vector<1x64xf32>
    %114 = arith.mulf %109, %113 : vector<1x64xf32>
    %115 = arith.addf %111, %114 : vector<1x64xf32>
    %116 = math.tanh %115 : vector<1x64xf32>
    %cst_28 = arith.constant 1.000000e+00 : f32
    %117 = vector.broadcast %cst_28 : f32 to vector<1x64xf32>
    %118 = arith.subf %117, %110 : vector<1x64xf32>
    %119 = arith.mulf %118, %116 : vector<1x64xf32>
    %120 = arith.mulf %110, %94 : vector<1x64xf32>
    %121 = arith.addf %119, %120 : vector<1x64xf32>
    %122 = vector.extract_strided_slice %121 {offsets = [0, 0], sizes = [1, 32], strides = [1, 1]} : vector<1x64xf32> to vector<1x32xf32>
    %c2 = arith.constant 2 : index
    %c0_29 = arith.constant 0 : index
    %123 = vector.load %arg12[%c2, %c0_29] : memref<8x64xf32, #tpu.memory_space<vmem>>, vector<1x32xf32>
    tpu.vector_store %arg12[%c2, %c0_29], %122 {strides = array<i32>} : memref<8x64xf32, #tpu.memory_space<vmem>>, vector<1x32xf32>,
    %124 = vector.extract_strided_slice %121 {offsets = [0, 32], sizes = [1, 32], strides = [1, 1]} : vector<1x64xf32> to vector<1x32xf32>
    %c5 = arith.constant 5 : index
    %c32_30 = arith.constant 32 : index
    %125 = vector.load %arg12[%c5, %c32_30] : memref<8x64xf32, #tpu.memory_space<vmem>>, vector<1x32xf32>
    tpu.vector_store %arg12[%c5, %c32_30], %124 {strides = array<i32>} : memref<8x64xf32, #tpu.memory_space<vmem>>, vector<1x32xf32>,
    %c0_31 = arith.constant 0 : index
    %c0_32 = arith.constant 0 : index
    %126 = vector.load %arg3[%c0_31, %c0_32] : memref<64x192xf32, #tpu.memory_space<vmem>>, vector<64x192xf32>
    %cst_33 = arith.constant dense<0.000000e+00> : vector<1x192xf32>
    %127 = tpu.matmul %121, %126, %cst_33 {dimension_numbers = #tpu.dot_dimension_numbers<[1], [0], [0], [1], [0, 0, 1, 1], [], []>} : vector<1x64xf32>, vector<64x192xf32>, vector<1x192xf32> -> vector<1x192xf32>
    %128 = vector.extract_strided_slice %38 {offsets = [0, 0], sizes = [1, 128], strides = [1, 1]} : vector<1x192xf32> to vector<1x128xf32>
    %129 = vector.extract_strided_slice %127 {offsets = [0, 0], sizes = [1, 128], strides = [1, 1]} : vector<1x192xf32> to vector<1x128xf32>
    %130 = arith.addf %128, %129 : vector<1x128xf32>
    %131 = arith.negf %130 : vector<1x128xf32>
    %132 = math.exp %131 : vector<1x128xf32>
    %cst_34 = arith.constant 1.000000e+00 : f32
    %133 = vector.broadcast %cst_34 : f32 to vector<1x128xf32>
    %134 = arith.addf %133, %132 : vector<1x128xf32>
    %135 = arith.divf %133, %134 : vector<1x128xf32>
    %136 = vector.extract_strided_slice %135 {offsets = [0, 0], sizes = [1, 64], strides = [1, 1]} : vector<1x128xf32> to vector<1x64xf32>
    %137 = vector.extract_strided_slice %135 {offsets = [0, 64], sizes = [1, 64], strides = [1, 1]} : vector<1x128xf32> to vector<1x64xf32>
    %138 = vector.extract_strided_slice %38 {offsets = [0, 128], sizes = [1, 64], strides = [1, 1]} : vector<1x192xf32> to vector<1x64xf32>
    %139 = vector.extract_strided_slice %127 {offsets = [0, 128], sizes = [1, 64], strides = [1, 1]} : vector<1x192xf32> to vector<1x64xf32>
    %140 = arith.addf %139, %43 : vector<1x64xf32>
    %141 = arith.mulf %136, %140 : vector<1x64xf32>
    %142 = arith.addf %138, %141 : vector<1x64xf32>
    %143 = math.tanh %142 : vector<1x64xf32>
    %cst_35 = arith.constant 1.000000e+00 : f32
    %144 = vector.broadcast %cst_35 : f32 to vector<1x64xf32>
    %145 = arith.subf %144, %137 : vector<1x64xf32>
    %146 = arith.mulf %145, %143 : vector<1x64xf32>
    %147 = arith.mulf %137, %121 : vector<1x64xf32>
    %148 = arith.addf %146, %147 : vector<1x64xf32>
    %149 = vector.extract_strided_slice %148 {offsets = [0, 0], sizes = [1, 32], strides = [1, 1]} : vector<1x64xf32> to vector<1x32xf32>
    %c3 = arith.constant 3 : index
    %c0_36 = arith.constant 0 : index
    %150 = vector.load %arg12[%c3, %c0_36] : memref<8x64xf32, #tpu.memory_space<vmem>>, vector<1x32xf32>
    tpu.vector_store %arg12[%c3, %c0_36], %149 {strides = array<i32>} : memref<8x64xf32, #tpu.memory_space<vmem>>, vector<1x32xf32>,
    %151 = vector.extract_strided_slice %148 {offsets = [0, 32], sizes = [1, 32], strides = [1, 1]} : vector<1x64xf32> to vector<1x32xf32>
    %c4 = arith.constant 4 : index
    %c32_37 = arith.constant 32 : index
    %152 = vector.load %arg12[%c4, %c32_37] : memref<8x64xf32, #tpu.memory_space<vmem>>, vector<1x32xf32>
    tpu.vector_store %arg12[%c4, %c32_37], %151 {strides = array<i32>} : memref<8x64xf32, #tpu.memory_space<vmem>>, vector<1x32xf32>,
    %c0_38 = arith.constant 0 : index
    %c0_39 = arith.constant 0 : index
    %153 = vector.load %arg3[%c0_38, %c0_39] : memref<64x192xf32, #tpu.memory_space<vmem>>, vector<64x192xf32>
    %cst_40 = arith.constant dense<0.000000e+00> : vector<1x192xf32>
    %154 = tpu.matmul %148, %153, %cst_40 {dimension_numbers = #tpu.dot_dimension_numbers<[1], [0], [0], [1], [0, 0, 1, 1], [], []>} : vector<1x64xf32>, vector<64x192xf32>, vector<1x192xf32> -> vector<1x192xf32>
    %155 = vector.extract_strided_slice %39 {offsets = [0, 0], sizes = [1, 128], strides = [1, 1]} : vector<1x192xf32> to vector<1x128xf32>
    %156 = vector.extract_strided_slice %154 {offsets = [0, 0], sizes = [1, 128], strides = [1, 1]} : vector<1x192xf32> to vector<1x128xf32>
    %157 = arith.addf %155, %156 : vector<1x128xf32>
    %158 = arith.negf %157 : vector<1x128xf32>
    %159 = math.exp %158 : vector<1x128xf32>
    %cst_41 = arith.constant 1.000000e+00 : f32
    %160 = vector.broadcast %cst_41 : f32 to vector<1x128xf32>
    %161 = arith.addf %160, %159 : vector<1x128xf32>
    %162 = arith.divf %160, %161 : vector<1x128xf32>
    %163 = vector.extract_strided_slice %162 {offsets = [0, 0], sizes = [1, 64], strides = [1, 1]} : vector<1x128xf32> to vector<1x64xf32>
    %164 = vector.extract_strided_slice %162 {offsets = [0, 64], sizes = [1, 64], strides = [1, 1]} : vector<1x128xf32> to vector<1x64xf32>
    %165 = vector.extract_strided_slice %39 {offsets = [0, 128], sizes = [1, 64], strides = [1, 1]} : vector<1x192xf32> to vector<1x64xf32>
    %166 = vector.extract_strided_slice %154 {offsets = [0, 128], sizes = [1, 64], strides = [1, 1]} : vector<1x192xf32> to vector<1x64xf32>
    %167 = arith.addf %166, %43 : vector<1x64xf32>
    %168 = arith.mulf %163, %167 : vector<1x64xf32>
    %169 = arith.addf %165, %168 : vector<1x64xf32>
    %170 = math.tanh %169 : vector<1x64xf32>
    %cst_42 = arith.constant 1.000000e+00 : f32
    %171 = vector.broadcast %cst_42 : f32 to vector<1x64xf32>
    %172 = arith.subf %171, %164 : vector<1x64xf32>
    %173 = arith.mulf %172, %170 : vector<1x64xf32>
    %174 = arith.mulf %164, %148 : vector<1x64xf32>
    %175 = arith.addf %173, %174 : vector<1x64xf32>
    %176 = vector.extract_strided_slice %175 {offsets = [0, 0], sizes = [1, 32], strides = [1, 1]} : vector<1x64xf32> to vector<1x32xf32>
    %c4_43 = arith.constant 4 : index
    %c0_44 = arith.constant 0 : index
    %177 = vector.load %arg12[%c4_43, %c0_44] : memref<8x64xf32, #tpu.memory_space<vmem>>, vector<1x32xf32>
    tpu.vector_store %arg12[%c4_43, %c0_44], %176 {strides = array<i32>} : memref<8x64xf32, #tpu.memory_space<vmem>>, vector<1x32xf32>,
    %178 = vector.extract_strided_slice %175 {offsets = [0, 32], sizes = [1, 32], strides = [1, 1]} : vector<1x64xf32> to vector<1x32xf32>
    %c3_45 = arith.constant 3 : index
    %c32_46 = arith.constant 32 : index
    %179 = vector.load %arg12[%c3_45, %c32_46] : memref<8x64xf32, #tpu.memory_space<vmem>>, vector<1x32xf32>
    tpu.vector_store %arg12[%c3_45, %c32_46], %178 {strides = array<i32>} : memref<8x64xf32, #tpu.memory_space<vmem>>, vector<1x32xf32>,
    %c0_47 = arith.constant 0 : index
    %c0_48 = arith.constant 0 : index
    %180 = vector.load %arg3[%c0_47, %c0_48] : memref<64x192xf32, #tpu.memory_space<vmem>>, vector<64x192xf32>
    %cst_49 = arith.constant dense<0.000000e+00> : vector<1x192xf32>
    %181 = tpu.matmul %175, %180, %cst_49 {dimension_numbers = #tpu.dot_dimension_numbers<[1], [0], [0], [1], [0, 0, 1, 1], [], []>} : vector<1x64xf32>, vector<64x192xf32>, vector<1x192xf32> -> vector<1x192xf32>
    %182 = vector.extract_strided_slice %40 {offsets = [0, 0], sizes = [1, 128], strides = [1, 1]} : vector<1x192xf32> to vector<1x128xf32>
    %183 = vector.extract_strided_slice %181 {offsets = [0, 0], sizes = [1, 128], strides = [1, 1]} : vector<1x192xf32> to vector<1x128xf32>
    %184 = arith.addf %182, %183 : vector<1x128xf32>
    %185 = arith.negf %184 : vector<1x128xf32>
    %186 = math.exp %185 : vector<1x128xf32>
    %cst_50 = arith.constant 1.000000e+00 : f32
    %187 = vector.broadcast %cst_50 : f32 to vector<1x128xf32>
    %188 = arith.addf %187, %186 : vector<1x128xf32>
    %189 = arith.divf %187, %188 : vector<1x128xf32>
    %190 = vector.extract_strided_slice %189 {offsets = [0, 0], sizes = [1, 64], strides = [1, 1]} : vector<1x128xf32> to vector<1x64xf32>
    %191 = vector.extract_strided_slice %189 {offsets = [0, 64], sizes = [1, 64], strides = [1, 1]} : vector<1x128xf32> to vector<1x64xf32>
    %192 = vector.extract_strided_slice %40 {offsets = [0, 128], sizes = [1, 64], strides = [1, 1]} : vector<1x192xf32> to vector<1x64xf32>
    %193 = vector.extract_strided_slice %181 {offsets = [0, 128], sizes = [1, 64], strides = [1, 1]} : vector<1x192xf32> to vector<1x64xf32>
    %194 = arith.addf %193, %43 : vector<1x64xf32>
    %195 = arith.mulf %190, %194 : vector<1x64xf32>
    %196 = arith.addf %192, %195 : vector<1x64xf32>
    %197 = math.tanh %196 : vector<1x64xf32>
    %cst_51 = arith.constant 1.000000e+00 : f32
    %198 = vector.broadcast %cst_51 : f32 to vector<1x64xf32>
    %199 = arith.subf %198, %191 : vector<1x64xf32>
    %200 = arith.mulf %199, %197 : vector<1x64xf32>
    %201 = arith.mulf %191, %175 : vector<1x64xf32>
    %202 = arith.addf %200, %201 : vector<1x64xf32>
    %203 = vector.extract_strided_slice %202 {offsets = [0, 0], sizes = [1, 32], strides = [1, 1]} : vector<1x64xf32> to vector<1x32xf32>
    %c5_52 = arith.constant 5 : index
    %c0_53 = arith.constant 0 : index
    %204 = vector.load %arg12[%c5_52, %c0_53] : memref<8x64xf32, #tpu.memory_space<vmem>>, vector<1x32xf32>
    tpu.vector_store %arg12[%c5_52, %c0_53], %203 {strides = array<i32>} : memref<8x64xf32, #tpu.memory_space<vmem>>, vector<1x32xf32>,
    %205 = vector.extract_strided_slice %202 {offsets = [0, 32], sizes = [1, 32], strides = [1, 1]} : vector<1x64xf32> to vector<1x32xf32>
    %c2_54 = arith.constant 2 : index
    %c32_55 = arith.constant 32 : index
    %206 = vector.load %arg12[%c2_54, %c32_55] : memref<8x64xf32, #tpu.memory_space<vmem>>, vector<1x32xf32>
    tpu.vector_store %arg12[%c2_54, %c32_55], %205 {strides = array<i32>} : memref<8x64xf32, #tpu.memory_space<vmem>>, vector<1x32xf32>,
    %c0_56 = arith.constant 0 : index
    %c0_57 = arith.constant 0 : index
    %207 = vector.load %arg3[%c0_56, %c0_57] : memref<64x192xf32, #tpu.memory_space<vmem>>, vector<64x192xf32>
    %cst_58 = arith.constant dense<0.000000e+00> : vector<1x192xf32>
    %208 = tpu.matmul %202, %207, %cst_58 {dimension_numbers = #tpu.dot_dimension_numbers<[1], [0], [0], [1], [0, 0, 1, 1], [], []>} : vector<1x64xf32>, vector<64x192xf32>, vector<1x192xf32> -> vector<1x192xf32>
    %209 = vector.extract_strided_slice %41 {offsets = [0, 0], sizes = [1, 128], strides = [1, 1]} : vector<1x192xf32> to vector<1x128xf32>
    %210 = vector.extract_strided_slice %208 {offsets = [0, 0], sizes = [1, 128], strides = [1, 1]} : vector<1x192xf32> to vector<1x128xf32>
    %211 = arith.addf %209, %210 : vector<1x128xf32>
    %212 = arith.negf %211 : vector<1x128xf32>
    %213 = math.exp %212 : vector<1x128xf32>
    %cst_59 = arith.constant 1.000000e+00 : f32
    %214 = vector.broadcast %cst_59 : f32 to vector<1x128xf32>
    %215 = arith.addf %214, %213 : vector<1x128xf32>
    %216 = arith.divf %214, %215 : vector<1x128xf32>
    %217 = vector.extract_strided_slice %216 {offsets = [0, 0], sizes = [1, 64], strides = [1, 1]} : vector<1x128xf32> to vector<1x64xf32>
    %218 = vector.extract_strided_slice %216 {offsets = [0, 64], sizes = [1, 64], strides = [1, 1]} : vector<1x128xf32> to vector<1x64xf32>
    %219 = vector.extract_strided_slice %41 {offsets = [0, 128], sizes = [1, 64], strides = [1, 1]} : vector<1x192xf32> to vector<1x64xf32>
    %220 = vector.extract_strided_slice %208 {offsets = [0, 128], sizes = [1, 64], strides = [1, 1]} : vector<1x192xf32> to vector<1x64xf32>
    %221 = arith.addf %220, %43 : vector<1x64xf32>
    %222 = arith.mulf %217, %221 : vector<1x64xf32>
    %223 = arith.addf %219, %222 : vector<1x64xf32>
    %224 = math.tanh %223 : vector<1x64xf32>
    %cst_60 = arith.constant 1.000000e+00 : f32
    %225 = vector.broadcast %cst_60 : f32 to vector<1x64xf32>
    %226 = arith.subf %225, %218 : vector<1x64xf32>
    %227 = arith.mulf %226, %224 : vector<1x64xf32>
    %228 = arith.mulf %218, %202 : vector<1x64xf32>
    %229 = arith.addf %227, %228 : vector<1x64xf32>
    %230 = vector.extract_strided_slice %229 {offsets = [0, 0], sizes = [1, 32], strides = [1, 1]} : vector<1x64xf32> to vector<1x32xf32>
    %c6_61 = arith.constant 6 : index
    %c0_62 = arith.constant 0 : index
    %231 = vector.load %arg12[%c6_61, %c0_62] : memref<8x64xf32, #tpu.memory_space<vmem>>, vector<1x32xf32>
    tpu.vector_store %arg12[%c6_61, %c0_62], %230 {strides = array<i32>} : memref<8x64xf32, #tpu.memory_space<vmem>>, vector<1x32xf32>,
    %232 = vector.extract_strided_slice %229 {offsets = [0, 32], sizes = [1, 32], strides = [1, 1]} : vector<1x64xf32> to vector<1x32xf32>
    %c1_63 = arith.constant 1 : index
    %c32_64 = arith.constant 32 : index
    %233 = vector.load %arg12[%c1_63, %c32_64] : memref<8x64xf32, #tpu.memory_space<vmem>>, vector<1x32xf32>
    tpu.vector_store %arg12[%c1_63, %c32_64], %232 {strides = array<i32>} : memref<8x64xf32, #tpu.memory_space<vmem>>, vector<1x32xf32>,
    %c0_65 = arith.constant 0 : index
    %c0_66 = arith.constant 0 : index
    %234 = vector.load %arg3[%c0_65, %c0_66] : memref<64x192xf32, #tpu.memory_space<vmem>>, vector<64x192xf32>
    %cst_67 = arith.constant dense<0.000000e+00> : vector<1x192xf32>
    %235 = tpu.matmul %229, %234, %cst_67 {dimension_numbers = #tpu.dot_dimension_numbers<[1], [0], [0], [1], [0, 0, 1, 1], [], []>} : vector<1x64xf32>, vector<64x192xf32>, vector<1x192xf32> -> vector<1x192xf32>
    %236 = vector.extract_strided_slice %42 {offsets = [0, 0], sizes = [1, 128], strides = [1, 1]} : vector<1x192xf32> to vector<1x128xf32>
    %237 = vector.extract_strided_slice %235 {offsets = [0, 0], sizes = [1, 128], strides = [1, 1]} : vector<1x192xf32> to vector<1x128xf32>
    %238 = arith.addf %236, %237 : vector<1x128xf32>
    %239 = arith.negf %238 : vector<1x128xf32>
    %240 = math.exp %239 : vector<1x128xf32>
    %cst_68 = arith.constant 1.000000e+00 : f32
    %241 = vector.broadcast %cst_68 : f32 to vector<1x128xf32>
    %242 = arith.addf %241, %240 : vector<1x128xf32>
    %243 = arith.divf %241, %242 : vector<1x128xf32>
    %244 = vector.extract_strided_slice %243 {offsets = [0, 0], sizes = [1, 64], strides = [1, 1]} : vector<1x128xf32> to vector<1x64xf32>
    %245 = vector.extract_strided_slice %243 {offsets = [0, 64], sizes = [1, 64], strides = [1, 1]} : vector<1x128xf32> to vector<1x64xf32>
    %246 = vector.extract_strided_slice %42 {offsets = [0, 128], sizes = [1, 64], strides = [1, 1]} : vector<1x192xf32> to vector<1x64xf32>
    %247 = vector.extract_strided_slice %235 {offsets = [0, 128], sizes = [1, 64], strides = [1, 1]} : vector<1x192xf32> to vector<1x64xf32>
    %248 = arith.addf %247, %43 : vector<1x64xf32>
    %249 = arith.mulf %244, %248 : vector<1x64xf32>
    %250 = arith.addf %246, %249 : vector<1x64xf32>
    %251 = math.tanh %250 : vector<1x64xf32>
    %cst_69 = arith.constant 1.000000e+00 : f32
    %252 = vector.broadcast %cst_69 : f32 to vector<1x64xf32>
    %253 = arith.subf %252, %245 : vector<1x64xf32>
    %254 = arith.mulf %253, %251 : vector<1x64xf32>
    %255 = arith.mulf %245, %229 : vector<1x64xf32>
    %256 = arith.addf %254, %255 : vector<1x64xf32>
    %257 = vector.extract_strided_slice %256 {offsets = [0, 0], sizes = [1, 32], strides = [1, 1]} : vector<1x64xf32> to vector<1x32xf32>
    %c7_70 = arith.constant 7 : index
    %c0_71 = arith.constant 0 : index
    %258 = vector.load %arg12[%c7_70, %c0_71] : memref<8x64xf32, #tpu.memory_space<vmem>>, vector<1x32xf32>
    tpu.vector_store %arg12[%c7_70, %c0_71], %257 {strides = array<i32>} : memref<8x64xf32, #tpu.memory_space<vmem>>, vector<1x32xf32>,
    %259 = vector.extract_strided_slice %256 {offsets = [0, 32], sizes = [1, 32], strides = [1, 1]} : vector<1x64xf32> to vector<1x32xf32>
    %c0_72 = arith.constant 0 : index
    %c32_73 = arith.constant 32 : index
    %260 = vector.load %arg12[%c0_72, %c32_73] : memref<8x64xf32, #tpu.memory_space<vmem>>, vector<1x32xf32>
    tpu.vector_store %arg12[%c0_72, %c32_73], %259 {strides = array<i32>} : memref<8x64xf32, #tpu.memory_space<vmem>>, vector<1x32xf32>,
    %c0_74 = arith.constant 0 : index
    %c0_75 = arith.constant 0 : index
    %261 = vector.load %arg12[%c0_74, %c0_75] : memref<8x64xf32, #tpu.memory_space<vmem>>, vector<8x64xf32>
    %c0_76 = arith.constant 0 : index
    %c0_77 = arith.constant 0 : index
    %262 = vector.load %arg5[%c0_76, %c0_77] : memref<64x192xf32, #tpu.memory_space<vmem>>, vector<64x192xf32>
    %cst_78 = arith.constant dense<0.000000e+00> : vector<8x192xf32>
    %263 = tpu.matmul %261, %262, %cst_78 {dimension_numbers = #tpu.dot_dimension_numbers<[1], [0], [0], [1], [0, 0, 1, 1], [], []>} : vector<8x64xf32>, vector<64x192xf32>, vector<8x192xf32> -> vector<8x192xf32>
    %c0_79 = arith.constant 0 : index
    %c0_80 = arith.constant 0 : index
    %264 = vector.load %arg6[%c0_79, %c0_80] : memref<1x192xf32, #tpu.memory_space<vmem>>, vector<1x192xf32>
    %265 = vector.broadcast %264 : vector<1x192xf32> to vector<8x192xf32>
    %266 = arith.addf %263, %265 : vector<8x192xf32>
    %267 = vector.extract_strided_slice %266 {offsets = [0, 0], sizes = [1, 192], strides = [1, 1]} : vector<8x192xf32> to vector<1x192xf32>
    %268 = vector.extract_strided_slice %266 {offsets = [1, 0], sizes = [1, 192], strides = [1, 1]} : vector<8x192xf32> to vector<1x192xf32>
    %269 = vector.extract_strided_slice %266 {offsets = [2, 0], sizes = [1, 192], strides = [1, 1]} : vector<8x192xf32> to vector<1x192xf32>
    %270 = vector.extract_strided_slice %266 {offsets = [3, 0], sizes = [1, 192], strides = [1, 1]} : vector<8x192xf32> to vector<1x192xf32>
    %271 = vector.extract_strided_slice %266 {offsets = [4, 0], sizes = [1, 192], strides = [1, 1]} : vector<8x192xf32> to vector<1x192xf32>
    %272 = vector.extract_strided_slice %266 {offsets = [5, 0], sizes = [1, 192], strides = [1, 1]} : vector<8x192xf32> to vector<1x192xf32>
    %273 = vector.extract_strided_slice %266 {offsets = [6, 0], sizes = [1, 192], strides = [1, 1]} : vector<8x192xf32> to vector<1x192xf32>
    %274 = vector.extract_strided_slice %266 {offsets = [7, 0], sizes = [1, 192], strides = [1, 1]} : vector<8x192xf32> to vector<1x192xf32>
    %275 = arith.select %21, %267, %274 : vector<1x192xi1>, vector<1x192xf32>
    %276 = arith.select %21, %268, %273 : vector<1x192xi1>, vector<1x192xf32>
    %277 = arith.select %21, %269, %272 : vector<1x192xi1>, vector<1x192xf32>
    %278 = arith.select %21, %270, %271 : vector<1x192xi1>, vector<1x192xf32>
    %279 = arith.select %21, %271, %270 : vector<1x192xi1>, vector<1x192xf32>
    %280 = arith.select %21, %272, %269 : vector<1x192xi1>, vector<1x192xf32>
    %281 = arith.select %21, %273, %268 : vector<1x192xi1>, vector<1x192xf32>
    %282 = arith.select %21, %274, %267 : vector<1x192xi1>, vector<1x192xf32>
    %c0_81 = arith.constant 0 : index
    %c0_82 = arith.constant 0 : index
    %283 = vector.load %arg8[%c0_81, %c0_82] : memref<1x64xf32, #tpu.memory_space<vmem>>, vector<1x64xf32>
    %cst_83 = arith.constant 0.000000e+00 : f32
    %284 = vector.broadcast %cst_83 : f32 to vector<1x64xf32>
    %c0_84 = arith.constant 0 : index
    %c0_85 = arith.constant 0 : index
    %285 = vector.load %arg7[%c0_84, %c0_85] : memref<64x192xf32, #tpu.memory_space<vmem>>, vector<64x192xf32>
    %cst_86 = arith.constant dense<0.000000e+00> : vector<1x192xf32>
    %286 = tpu.matmul %284, %285, %cst_86 {dimension_numbers = #tpu.dot_dimension_numbers<[1], [0], [0], [1], [0, 0, 1, 1], [], []>} : vector<1x64xf32>, vector<64x192xf32>, vector<1x192xf32> -> vector<1x192xf32>
    %287 = vector.extract_strided_slice %275 {offsets = [0, 0], sizes = [1, 128], strides = [1, 1]} : vector<1x192xf32> to vector<1x128xf32>
    %288 = vector.extract_strided_slice %286 {offsets = [0, 0], sizes = [1, 128], strides = [1, 1]} : vector<1x192xf32> to vector<1x128xf32>
    %289 = arith.addf %287, %288 : vector<1x128xf32>
    %290 = arith.negf %289 : vector<1x128xf32>
    %291 = math.exp %290 : vector<1x128xf32>
    %cst_87 = arith.constant 1.000000e+00 : f32
    %292 = vector.broadcast %cst_87 : f32 to vector<1x128xf32>
    %293 = arith.addf %292, %291 : vector<1x128xf32>
    %294 = arith.divf %292, %293 : vector<1x128xf32>
    %295 = vector.extract_strided_slice %294 {offsets = [0, 0], sizes = [1, 64], strides = [1, 1]} : vector<1x128xf32> to vector<1x64xf32>
    %296 = vector.extract_strided_slice %294 {offsets = [0, 64], sizes = [1, 64], strides = [1, 1]} : vector<1x128xf32> to vector<1x64xf32>
    %297 = vector.extract_strided_slice %275 {offsets = [0, 128], sizes = [1, 64], strides = [1, 1]} : vector<1x192xf32> to vector<1x64xf32>
    %298 = vector.extract_strided_slice %286 {offsets = [0, 128], sizes = [1, 64], strides = [1, 1]} : vector<1x192xf32> to vector<1x64xf32>
    %299 = arith.addf %298, %283 : vector<1x64xf32>
    %300 = arith.mulf %295, %299 : vector<1x64xf32>
    %301 = arith.addf %297, %300 : vector<1x64xf32>
    %302 = math.tanh %301 : vector<1x64xf32>
    %cst_88 = arith.constant 1.000000e+00 : f32
    %303 = vector.broadcast %cst_88 : f32 to vector<1x64xf32>
    %304 = arith.subf %303, %296 : vector<1x64xf32>
    %305 = arith.mulf %304, %302 : vector<1x64xf32>
    %306 = arith.mulf %296, %284 : vector<1x64xf32>
    %307 = arith.addf %305, %306 : vector<1x64xf32>
    %308 = vector.extract_strided_slice %307 {offsets = [0, 0], sizes = [1, 32], strides = [1, 1]} : vector<1x64xf32> to vector<1x32xf32>
    %c0_89 = arith.constant 0 : index
    %c0_90 = arith.constant 0 : index
    %309 = vector.load %arg12[%c0_89, %c0_90] : memref<8x64xf32, #tpu.memory_space<vmem>>, vector<1x32xf32>
    tpu.vector_store %arg12[%c0_89, %c0_90], %308 {strides = array<i32>} : memref<8x64xf32, #tpu.memory_space<vmem>>, vector<1x32xf32>,
    %310 = vector.extract_strided_slice %307 {offsets = [0, 32], sizes = [1, 32], strides = [1, 1]} : vector<1x64xf32> to vector<1x32xf32>
    %c7_91 = arith.constant 7 : index
    %c32_92 = arith.constant 32 : index
    %311 = vector.load %arg12[%c7_91, %c32_92] : memref<8x64xf32, #tpu.memory_space<vmem>>, vector<1x32xf32>
    tpu.vector_store %arg12[%c7_91, %c32_92], %310 {strides = array<i32>} : memref<8x64xf32, #tpu.memory_space<vmem>>, vector<1x32xf32>,
    %c0_93 = arith.constant 0 : index
    %c0_94 = arith.constant 0 : index
    %312 = vector.load %arg7[%c0_93, %c0_94] : memref<64x192xf32, #tpu.memory_space<vmem>>, vector<64x192xf32>
    %cst_95 = arith.constant dense<0.000000e+00> : vector<1x192xf32>
    %313 = tpu.matmul %307, %312, %cst_95 {dimension_numbers = #tpu.dot_dimension_numbers<[1], [0], [0], [1], [0, 0, 1, 1], [], []>} : vector<1x64xf32>, vector<64x192xf32>, vector<1x192xf32> -> vector<1x192xf32>
    %314 = vector.extract_strided_slice %276 {offsets = [0, 0], sizes = [1, 128], strides = [1, 1]} : vector<1x192xf32> to vector<1x128xf32>
    %315 = vector.extract_strided_slice %313 {offsets = [0, 0], sizes = [1, 128], strides = [1, 1]} : vector<1x192xf32> to vector<1x128xf32>
    %316 = arith.addf %314, %315 : vector<1x128xf32>
    %317 = arith.negf %316 : vector<1x128xf32>
    %318 = math.exp %317 : vector<1x128xf32>
    %cst_96 = arith.constant 1.000000e+00 : f32
    %319 = vector.broadcast %cst_96 : f32 to vector<1x128xf32>
    %320 = arith.addf %319, %318 : vector<1x128xf32>
    %321 = arith.divf %319, %320 : vector<1x128xf32>
    %322 = vector.extract_strided_slice %321 {offsets = [0, 0], sizes = [1, 64], strides = [1, 1]} : vector<1x128xf32> to vector<1x64xf32>
    %323 = vector.extract_strided_slice %321 {offsets = [0, 64], sizes = [1, 64], strides = [1, 1]} : vector<1x128xf32> to vector<1x64xf32>
    %324 = vector.extract_strided_slice %276 {offsets = [0, 128], sizes = [1, 64], strides = [1, 1]} : vector<1x192xf32> to vector<1x64xf32>
    %325 = vector.extract_strided_slice %313 {offsets = [0, 128], sizes = [1, 64], strides = [1, 1]} : vector<1x192xf32> to vector<1x64xf32>
    %326 = arith.addf %325, %283 : vector<1x64xf32>
    %327 = arith.mulf %322, %326 : vector<1x64xf32>
    %328 = arith.addf %324, %327 : vector<1x64xf32>
    %329 = math.tanh %328 : vector<1x64xf32>
    %cst_97 = arith.constant 1.000000e+00 : f32
    %330 = vector.broadcast %cst_97 : f32 to vector<1x64xf32>
    %331 = arith.subf %330, %323 : vector<1x64xf32>
    %332 = arith.mulf %331, %329 : vector<1x64xf32>
    %333 = arith.mulf %323, %307 : vector<1x64xf32>
    %334 = arith.addf %332, %333 : vector<1x64xf32>
    %335 = vector.extract_strided_slice %334 {offsets = [0, 0], sizes = [1, 32], strides = [1, 1]} : vector<1x64xf32> to vector<1x32xf32>
    %c1_98 = arith.constant 1 : index
    %c0_99 = arith.constant 0 : index
    %336 = vector.load %arg12[%c1_98, %c0_99] : memref<8x64xf32, #tpu.memory_space<vmem>>, vector<1x32xf32>
    tpu.vector_store %arg12[%c1_98, %c0_99], %335 {strides = array<i32>} : memref<8x64xf32, #tpu.memory_space<vmem>>, vector<1x32xf32>,
    %337 = vector.extract_strided_slice %334 {offsets = [0, 32], sizes = [1, 32], strides = [1, 1]} : vector<1x64xf32> to vector<1x32xf32>
    %c6_100 = arith.constant 6 : index
    %c32_101 = arith.constant 32 : index
    %338 = vector.load %arg12[%c6_100, %c32_101] : memref<8x64xf32, #tpu.memory_space<vmem>>, vector<1x32xf32>
    tpu.vector_store %arg12[%c6_100, %c32_101], %337 {strides = array<i32>} : memref<8x64xf32, #tpu.memory_space<vmem>>, vector<1x32xf32>,
    %c0_102 = arith.constant 0 : index
    %c0_103 = arith.constant 0 : index
    %339 = vector.load %arg7[%c0_102, %c0_103] : memref<64x192xf32, #tpu.memory_space<vmem>>, vector<64x192xf32>
    %cst_104 = arith.constant dense<0.000000e+00> : vector<1x192xf32>
    %340 = tpu.matmul %334, %339, %cst_104 {dimension_numbers = #tpu.dot_dimension_numbers<[1], [0], [0], [1], [0, 0, 1, 1], [], []>} : vector<1x64xf32>, vector<64x192xf32>, vector<1x192xf32> -> vector<1x192xf32>
    %341 = vector.extract_strided_slice %277 {offsets = [0, 0], sizes = [1, 128], strides = [1, 1]} : vector<1x192xf32> to vector<1x128xf32>
    %342 = vector.extract_strided_slice %340 {offsets = [0, 0], sizes = [1, 128], strides = [1, 1]} : vector<1x192xf32> to vector<1x128xf32>
    %343 = arith.addf %341, %342 : vector<1x128xf32>
    %344 = arith.negf %343 : vector<1x128xf32>
    %345 = math.exp %344 : vector<1x128xf32>
    %cst_105 = arith.constant 1.000000e+00 : f32
    %346 = vector.broadcast %cst_105 : f32 to vector<1x128xf32>
    %347 = arith.addf %346, %345 : vector<1x128xf32>
    %348 = arith.divf %346, %347 : vector<1x128xf32>
    %349 = vector.extract_strided_slice %348 {offsets = [0, 0], sizes = [1, 64], strides = [1, 1]} : vector<1x128xf32> to vector<1x64xf32>
    %350 = vector.extract_strided_slice %348 {offsets = [0, 64], sizes = [1, 64], strides = [1, 1]} : vector<1x128xf32> to vector<1x64xf32>
    %351 = vector.extract_strided_slice %277 {offsets = [0, 128], sizes = [1, 64], strides = [1, 1]} : vector<1x192xf32> to vector<1x64xf32>
    %352 = vector.extract_strided_slice %340 {offsets = [0, 128], sizes = [1, 64], strides = [1, 1]} : vector<1x192xf32> to vector<1x64xf32>
    %353 = arith.addf %352, %283 : vector<1x64xf32>
    %354 = arith.mulf %349, %353 : vector<1x64xf32>
    %355 = arith.addf %351, %354 : vector<1x64xf32>
    %356 = math.tanh %355 : vector<1x64xf32>
    %cst_106 = arith.constant 1.000000e+00 : f32
    %357 = vector.broadcast %cst_106 : f32 to vector<1x64xf32>
    %358 = arith.subf %357, %350 : vector<1x64xf32>
    %359 = arith.mulf %358, %356 : vector<1x64xf32>
    %360 = arith.mulf %350, %334 : vector<1x64xf32>
    %361 = arith.addf %359, %360 : vector<1x64xf32>
    %362 = vector.extract_strided_slice %361 {offsets = [0, 0], sizes = [1, 32], strides = [1, 1]} : vector<1x64xf32> to vector<1x32xf32>
    %c2_107 = arith.constant 2 : index
    %c0_108 = arith.constant 0 : index
    %363 = vector.load %arg12[%c2_107, %c0_108] : memref<8x64xf32, #tpu.memory_space<vmem>>, vector<1x32xf32>
    tpu.vector_store %arg12[%c2_107, %c0_108], %362 {strides = array<i32>} : memref<8x64xf32, #tpu.memory_space<vmem>>, vector<1x32xf32>,
    %364 = vector.extract_strided_slice %361 {offsets = [0, 32], sizes = [1, 32], strides = [1, 1]} : vector<1x64xf32> to vector<1x32xf32>
    %c5_109 = arith.constant 5 : index
    %c32_110 = arith.constant 32 : index
    %365 = vector.load %arg12[%c5_109, %c32_110] : memref<8x64xf32, #tpu.memory_space<vmem>>, vector<1x32xf32>
    tpu.vector_store %arg12[%c5_109, %c32_110], %364 {strides = array<i32>} : memref<8x64xf32, #tpu.memory_space<vmem>>, vector<1x32xf32>,
    %c0_111 = arith.constant 0 : index
    %c0_112 = arith.constant 0 : index
    %366 = vector.load %arg7[%c0_111, %c0_112] : memref<64x192xf32, #tpu.memory_space<vmem>>, vector<64x192xf32>
    %cst_113 = arith.constant dense<0.000000e+00> : vector<1x192xf32>
    %367 = tpu.matmul %361, %366, %cst_113 {dimension_numbers = #tpu.dot_dimension_numbers<[1], [0], [0], [1], [0, 0, 1, 1], [], []>} : vector<1x64xf32>, vector<64x192xf32>, vector<1x192xf32> -> vector<1x192xf32>
    %368 = vector.extract_strided_slice %278 {offsets = [0, 0], sizes = [1, 128], strides = [1, 1]} : vector<1x192xf32> to vector<1x128xf32>
    %369 = vector.extract_strided_slice %367 {offsets = [0, 0], sizes = [1, 128], strides = [1, 1]} : vector<1x192xf32> to vector<1x128xf32>
    %370 = arith.addf %368, %369 : vector<1x128xf32>
    %371 = arith.negf %370 : vector<1x128xf32>
    %372 = math.exp %371 : vector<1x128xf32>
    %cst_114 = arith.constant 1.000000e+00 : f32
    %373 = vector.broadcast %cst_114 : f32 to vector<1x128xf32>
    %374 = arith.addf %373, %372 : vector<1x128xf32>
    %375 = arith.divf %373, %374 : vector<1x128xf32>
    %376 = vector.extract_strided_slice %375 {offsets = [0, 0], sizes = [1, 64], strides = [1, 1]} : vector<1x128xf32> to vector<1x64xf32>
    %377 = vector.extract_strided_slice %375 {offsets = [0, 64], sizes = [1, 64], strides = [1, 1]} : vector<1x128xf32> to vector<1x64xf32>
    %378 = vector.extract_strided_slice %278 {offsets = [0, 128], sizes = [1, 64], strides = [1, 1]} : vector<1x192xf32> to vector<1x64xf32>
    %379 = vector.extract_strided_slice %367 {offsets = [0, 128], sizes = [1, 64], strides = [1, 1]} : vector<1x192xf32> to vector<1x64xf32>
    %380 = arith.addf %379, %283 : vector<1x64xf32>
    %381 = arith.mulf %376, %380 : vector<1x64xf32>
    %382 = arith.addf %378, %381 : vector<1x64xf32>
    %383 = math.tanh %382 : vector<1x64xf32>
    %cst_115 = arith.constant 1.000000e+00 : f32
    %384 = vector.broadcast %cst_115 : f32 to vector<1x64xf32>
    %385 = arith.subf %384, %377 : vector<1x64xf32>
    %386 = arith.mulf %385, %383 : vector<1x64xf32>
    %387 = arith.mulf %377, %361 : vector<1x64xf32>
    %388 = arith.addf %386, %387 : vector<1x64xf32>
    %389 = vector.extract_strided_slice %388 {offsets = [0, 0], sizes = [1, 32], strides = [1, 1]} : vector<1x64xf32> to vector<1x32xf32>
    %c3_116 = arith.constant 3 : index
    %c0_117 = arith.constant 0 : index
    %390 = vector.load %arg12[%c3_116, %c0_117] : memref<8x64xf32, #tpu.memory_space<vmem>>, vector<1x32xf32>
    tpu.vector_store %arg12[%c3_116, %c0_117], %389 {strides = array<i32>} : memref<8x64xf32, #tpu.memory_space<vmem>>, vector<1x32xf32>,
    %391 = vector.extract_strided_slice %388 {offsets = [0, 32], sizes = [1, 32], strides = [1, 1]} : vector<1x64xf32> to vector<1x32xf32>
    %c4_118 = arith.constant 4 : index
    %c32_119 = arith.constant 32 : index
    %392 = vector.load %arg12[%c4_118, %c32_119] : memref<8x64xf32, #tpu.memory_space<vmem>>, vector<1x32xf32>
    tpu.vector_store %arg12[%c4_118, %c32_119], %391 {strides = array<i32>} : memref<8x64xf32, #tpu.memory_space<vmem>>, vector<1x32xf32>,
    %c0_120 = arith.constant 0 : index
    %c0_121 = arith.constant 0 : index
    %393 = vector.load %arg7[%c0_120, %c0_121] : memref<64x192xf32, #tpu.memory_space<vmem>>, vector<64x192xf32>
    %cst_122 = arith.constant dense<0.000000e+00> : vector<1x192xf32>
    %394 = tpu.matmul %388, %393, %cst_122 {dimension_numbers = #tpu.dot_dimension_numbers<[1], [0], [0], [1], [0, 0, 1, 1], [], []>} : vector<1x64xf32>, vector<64x192xf32>, vector<1x192xf32> -> vector<1x192xf32>
    %395 = vector.extract_strided_slice %279 {offsets = [0, 0], sizes = [1, 128], strides = [1, 1]} : vector<1x192xf32> to vector<1x128xf32>
    %396 = vector.extract_strided_slice %394 {offsets = [0, 0], sizes = [1, 128], strides = [1, 1]} : vector<1x192xf32> to vector<1x128xf32>
    %397 = arith.addf %395, %396 : vector<1x128xf32>
    %398 = arith.negf %397 : vector<1x128xf32>
    %399 = math.exp %398 : vector<1x128xf32>
    %cst_123 = arith.constant 1.000000e+00 : f32
    %400 = vector.broadcast %cst_123 : f32 to vector<1x128xf32>
    %401 = arith.addf %400, %399 : vector<1x128xf32>
    %402 = arith.divf %400, %401 : vector<1x128xf32>
    %403 = vector.extract_strided_slice %402 {offsets = [0, 0], sizes = [1, 64], strides = [1, 1]} : vector<1x128xf32> to vector<1x64xf32>
    %404 = vector.extract_strided_slice %402 {offsets = [0, 64], sizes = [1, 64], strides = [1, 1]} : vector<1x128xf32> to vector<1x64xf32>
    %405 = vector.extract_strided_slice %279 {offsets = [0, 128], sizes = [1, 64], strides = [1, 1]} : vector<1x192xf32> to vector<1x64xf32>
    %406 = vector.extract_strided_slice %394 {offsets = [0, 128], sizes = [1, 64], strides = [1, 1]} : vector<1x192xf32> to vector<1x64xf32>
    %407 = arith.addf %406, %283 : vector<1x64xf32>
    %408 = arith.mulf %403, %407 : vector<1x64xf32>
    %409 = arith.addf %405, %408 : vector<1x64xf32>
    %410 = math.tanh %409 : vector<1x64xf32>
    %cst_124 = arith.constant 1.000000e+00 : f32
    %411 = vector.broadcast %cst_124 : f32 to vector<1x64xf32>
    %412 = arith.subf %411, %404 : vector<1x64xf32>
    %413 = arith.mulf %412, %410 : vector<1x64xf32>
    %414 = arith.mulf %404, %388 : vector<1x64xf32>
    %415 = arith.addf %413, %414 : vector<1x64xf32>
    %416 = vector.extract_strided_slice %415 {offsets = [0, 0], sizes = [1, 32], strides = [1, 1]} : vector<1x64xf32> to vector<1x32xf32>
    %c4_125 = arith.constant 4 : index
    %c0_126 = arith.constant 0 : index
    %417 = vector.load %arg12[%c4_125, %c0_126] : memref<8x64xf32, #tpu.memory_space<vmem>>, vector<1x32xf32>
    tpu.vector_store %arg12[%c4_125, %c0_126], %416 {strides = array<i32>} : memref<8x64xf32, #tpu.memory_space<vmem>>, vector<1x32xf32>,
    %418 = vector.extract_strided_slice %415 {offsets = [0, 32], sizes = [1, 32], strides = [1, 1]} : vector<1x64xf32> to vector<1x32xf32>
    %c3_127 = arith.constant 3 : index
    %c32_128 = arith.constant 32 : index
    %419 = vector.load %arg12[%c3_127, %c32_128] : memref<8x64xf32, #tpu.memory_space<vmem>>, vector<1x32xf32>
    tpu.vector_store %arg12[%c3_127, %c32_128], %418 {strides = array<i32>} : memref<8x64xf32, #tpu.memory_space<vmem>>, vector<1x32xf32>,
    %c0_129 = arith.constant 0 : index
    %c0_130 = arith.constant 0 : index
    %420 = vector.load %arg7[%c0_129, %c0_130] : memref<64x192xf32, #tpu.memory_space<vmem>>, vector<64x192xf32>
    %cst_131 = arith.constant dense<0.000000e+00> : vector<1x192xf32>
    %421 = tpu.matmul %415, %420, %cst_131 {dimension_numbers = #tpu.dot_dimension_numbers<[1], [0], [0], [1], [0, 0, 1, 1], [], []>} : vector<1x64xf32>, vector<64x192xf32>, vector<1x192xf32> -> vector<1x192xf32>
    %422 = vector.extract_strided_slice %280 {offsets = [0, 0], sizes = [1, 128], strides = [1, 1]} : vector<1x192xf32> to vector<1x128xf32>
    %423 = vector.extract_strided_slice %421 {offsets = [0, 0], sizes = [1, 128], strides = [1, 1]} : vector<1x192xf32> to vector<1x128xf32>
    %424 = arith.addf %422, %423 : vector<1x128xf32>
    %425 = arith.negf %424 : vector<1x128xf32>
    %426 = math.exp %425 : vector<1x128xf32>
    %cst_132 = arith.constant 1.000000e+00 : f32
    %427 = vector.broadcast %cst_132 : f32 to vector<1x128xf32>
    %428 = arith.addf %427, %426 : vector<1x128xf32>
    %429 = arith.divf %427, %428 : vector<1x128xf32>
    %430 = vector.extract_strided_slice %429 {offsets = [0, 0], sizes = [1, 64], strides = [1, 1]} : vector<1x128xf32> to vector<1x64xf32>
    %431 = vector.extract_strided_slice %429 {offsets = [0, 64], sizes = [1, 64], strides = [1, 1]} : vector<1x128xf32> to vector<1x64xf32>
    %432 = vector.extract_strided_slice %280 {offsets = [0, 128], sizes = [1, 64], strides = [1, 1]} : vector<1x192xf32> to vector<1x64xf32>
    %433 = vector.extract_strided_slice %421 {offsets = [0, 128], sizes = [1, 64], strides = [1, 1]} : vector<1x192xf32> to vector<1x64xf32>
    %434 = arith.addf %433, %283 : vector<1x64xf32>
    %435 = arith.mulf %430, %434 : vector<1x64xf32>
    %436 = arith.addf %432, %435 : vector<1x64xf32>
    %437 = math.tanh %436 : vector<1x64xf32>
    %cst_133 = arith.constant 1.000000e+00 : f32
    %438 = vector.broadcast %cst_133 : f32 to vector<1x64xf32>
    %439 = arith.subf %438, %431 : vector<1x64xf32>
    %440 = arith.mulf %439, %437 : vector<1x64xf32>
    %441 = arith.mulf %431, %415 : vector<1x64xf32>
    %442 = arith.addf %440, %441 : vector<1x64xf32>
    %443 = vector.extract_strided_slice %442 {offsets = [0, 0], sizes = [1, 32], strides = [1, 1]} : vector<1x64xf32> to vector<1x32xf32>
    %c5_134 = arith.constant 5 : index
    %c0_135 = arith.constant 0 : index
    %444 = vector.load %arg12[%c5_134, %c0_135] : memref<8x64xf32, #tpu.memory_space<vmem>>, vector<1x32xf32>
    tpu.vector_store %arg12[%c5_134, %c0_135], %443 {strides = array<i32>} : memref<8x64xf32, #tpu.memory_space<vmem>>, vector<1x32xf32>,
    %445 = vector.extract_strided_slice %442 {offsets = [0, 32], sizes = [1, 32], strides = [1, 1]} : vector<1x64xf32> to vector<1x32xf32>
    %c2_136 = arith.constant 2 : index
    %c32_137 = arith.constant 32 : index
    %446 = vector.load %arg12[%c2_136, %c32_137] : memref<8x64xf32, #tpu.memory_space<vmem>>, vector<1x32xf32>
    tpu.vector_store %arg12[%c2_136, %c32_137], %445 {strides = array<i32>} : memref<8x64xf32, #tpu.memory_space<vmem>>, vector<1x32xf32>,
    %c0_138 = arith.constant 0 : index
    %c0_139 = arith.constant 0 : index
    %447 = vector.load %arg7[%c0_138, %c0_139] : memref<64x192xf32, #tpu.memory_space<vmem>>, vector<64x192xf32>
    %cst_140 = arith.constant dense<0.000000e+00> : vector<1x192xf32>
    %448 = tpu.matmul %442, %447, %cst_140 {dimension_numbers = #tpu.dot_dimension_numbers<[1], [0], [0], [1], [0, 0, 1, 1], [], []>} : vector<1x64xf32>, vector<64x192xf32>, vector<1x192xf32> -> vector<1x192xf32>
    %449 = vector.extract_strided_slice %281 {offsets = [0, 0], sizes = [1, 128], strides = [1, 1]} : vector<1x192xf32> to vector<1x128xf32>
    %450 = vector.extract_strided_slice %448 {offsets = [0, 0], sizes = [1, 128], strides = [1, 1]} : vector<1x192xf32> to vector<1x128xf32>
    %451 = arith.addf %449, %450 : vector<1x128xf32>
    %452 = arith.negf %451 : vector<1x128xf32>
    %453 = math.exp %452 : vector<1x128xf32>
    %cst_141 = arith.constant 1.000000e+00 : f32
    %454 = vector.broadcast %cst_141 : f32 to vector<1x128xf32>
    %455 = arith.addf %454, %453 : vector<1x128xf32>
    %456 = arith.divf %454, %455 : vector<1x128xf32>
    %457 = vector.extract_strided_slice %456 {offsets = [0, 0], sizes = [1, 64], strides = [1, 1]} : vector<1x128xf32> to vector<1x64xf32>
    %458 = vector.extract_strided_slice %456 {offsets = [0, 64], sizes = [1, 64], strides = [1, 1]} : vector<1x128xf32> to vector<1x64xf32>
    %459 = vector.extract_strided_slice %281 {offsets = [0, 128], sizes = [1, 64], strides = [1, 1]} : vector<1x192xf32> to vector<1x64xf32>
    %460 = vector.extract_strided_slice %448 {offsets = [0, 128], sizes = [1, 64], strides = [1, 1]} : vector<1x192xf32> to vector<1x64xf32>
    %461 = arith.addf %460, %283 : vector<1x64xf32>
    %462 = arith.mulf %457, %461 : vector<1x64xf32>
    %463 = arith.addf %459, %462 : vector<1x64xf32>
    %464 = math.tanh %463 : vector<1x64xf32>
    %cst_142 = arith.constant 1.000000e+00 : f32
    %465 = vector.broadcast %cst_142 : f32 to vector<1x64xf32>
    %466 = arith.subf %465, %458 : vector<1x64xf32>
    %467 = arith.mulf %466, %464 : vector<1x64xf32>
    %468 = arith.mulf %458, %442 : vector<1x64xf32>
    %469 = arith.addf %467, %468 : vector<1x64xf32>
    %470 = vector.extract_strided_slice %469 {offsets = [0, 0], sizes = [1, 32], strides = [1, 1]} : vector<1x64xf32> to vector<1x32xf32>
    %c6_143 = arith.constant 6 : index
    %c0_144 = arith.constant 0 : index
    %471 = vector.load %arg12[%c6_143, %c0_144] : memref<8x64xf32, #tpu.memory_space<vmem>>, vector<1x32xf32>
    tpu.vector_store %arg12[%c6_143, %c0_144], %470 {strides = array<i32>} : memref<8x64xf32, #tpu.memory_space<vmem>>, vector<1x32xf32>,
    %472 = vector.extract_strided_slice %469 {offsets = [0, 32], sizes = [1, 32], strides = [1, 1]} : vector<1x64xf32> to vector<1x32xf32>
    %c1_145 = arith.constant 1 : index
    %c32_146 = arith.constant 32 : index
    %473 = vector.load %arg12[%c1_145, %c32_146] : memref<8x64xf32, #tpu.memory_space<vmem>>, vector<1x32xf32>
    tpu.vector_store %arg12[%c1_145, %c32_146], %472 {strides = array<i32>} : memref<8x64xf32, #tpu.memory_space<vmem>>, vector<1x32xf32>,
    %c0_147 = arith.constant 0 : index
    %c0_148 = arith.constant 0 : index
    %474 = vector.load %arg7[%c0_147, %c0_148] : memref<64x192xf32, #tpu.memory_space<vmem>>, vector<64x192xf32>
    %cst_149 = arith.constant dense<0.000000e+00> : vector<1x192xf32>
    %475 = tpu.matmul %469, %474, %cst_149 {dimension_numbers = #tpu.dot_dimension_numbers<[1], [0], [0], [1], [0, 0, 1, 1], [], []>} : vector<1x64xf32>, vector<64x192xf32>, vector<1x192xf32> -> vector<1x192xf32>
    %476 = vector.extract_strided_slice %282 {offsets = [0, 0], sizes = [1, 128], strides = [1, 1]} : vector<1x192xf32> to vector<1x128xf32>
    %477 = vector.extract_strided_slice %475 {offsets = [0, 0], sizes = [1, 128], strides = [1, 1]} : vector<1x192xf32> to vector<1x128xf32>
    %478 = arith.addf %476, %477 : vector<1x128xf32>
    %479 = arith.negf %478 : vector<1x128xf32>
    %480 = math.exp %479 : vector<1x128xf32>
    %cst_150 = arith.constant 1.000000e+00 : f32
    %481 = vector.broadcast %cst_150 : f32 to vector<1x128xf32>
    %482 = arith.addf %481, %480 : vector<1x128xf32>
    %483 = arith.divf %481, %482 : vector<1x128xf32>
    %484 = vector.extract_strided_slice %483 {offsets = [0, 0], sizes = [1, 64], strides = [1, 1]} : vector<1x128xf32> to vector<1x64xf32>
    %485 = vector.extract_strided_slice %483 {offsets = [0, 64], sizes = [1, 64], strides = [1, 1]} : vector<1x128xf32> to vector<1x64xf32>
    %486 = vector.extract_strided_slice %282 {offsets = [0, 128], sizes = [1, 64], strides = [1, 1]} : vector<1x192xf32> to vector<1x64xf32>
    %487 = vector.extract_strided_slice %475 {offsets = [0, 128], sizes = [1, 64], strides = [1, 1]} : vector<1x192xf32> to vector<1x64xf32>
    %488 = arith.addf %487, %283 : vector<1x64xf32>
    %489 = arith.mulf %484, %488 : vector<1x64xf32>
    %490 = arith.addf %486, %489 : vector<1x64xf32>
    %491 = math.tanh %490 : vector<1x64xf32>
    %cst_151 = arith.constant 1.000000e+00 : f32
    %492 = vector.broadcast %cst_151 : f32 to vector<1x64xf32>
    %493 = arith.subf %492, %485 : vector<1x64xf32>
    %494 = arith.mulf %493, %491 : vector<1x64xf32>
    %495 = arith.mulf %485, %469 : vector<1x64xf32>
    %496 = arith.addf %494, %495 : vector<1x64xf32>
    %497 = vector.extract_strided_slice %496 {offsets = [0, 0], sizes = [1, 32], strides = [1, 1]} : vector<1x64xf32> to vector<1x32xf32>
    %c7_152 = arith.constant 7 : index
    %c0_153 = arith.constant 0 : index
    %498 = vector.load %arg12[%c7_152, %c0_153] : memref<8x64xf32, #tpu.memory_space<vmem>>, vector<1x32xf32>
    tpu.vector_store %arg12[%c7_152, %c0_153], %497 {strides = array<i32>} : memref<8x64xf32, #tpu.memory_space<vmem>>, vector<1x32xf32>,
    %499 = vector.extract_strided_slice %496 {offsets = [0, 32], sizes = [1, 32], strides = [1, 1]} : vector<1x64xf32> to vector<1x32xf32>
    %c0_154 = arith.constant 0 : index
    %c32_155 = arith.constant 32 : index
    %500 = vector.load %arg12[%c0_154, %c32_155] : memref<8x64xf32, #tpu.memory_space<vmem>>, vector<1x32xf32>
    tpu.vector_store %arg12[%c0_154, %c32_155], %499 {strides = array<i32>} : memref<8x64xf32, #tpu.memory_space<vmem>>, vector<1x32xf32>,
    %c0_156 = arith.constant 0 : index
    %c0_157 = arith.constant 0 : index
    %501 = vector.load %arg12[%c0_156, %c0_157] : memref<8x64xf32, #tpu.memory_space<vmem>>, vector<8x64xf32>
    %c0_158 = arith.constant 0 : index
    %c0_159 = arith.constant 0 : index
    %502 = vector.load %arg9[%c0_158, %c0_159] : memref<64x128xf32, #tpu.memory_space<vmem>>, vector<64x128xf32>
    %c0_160 = arith.constant 0 : index
    %c0_161 = arith.constant 0 : index
    %503 = vector.load %arg10[%c0_160, %c0_161] : memref<1x128xf32, #tpu.memory_space<vmem>>, vector<1x128xf32>
    %cst_162 = arith.constant dense<0.000000e+00> : vector<8x128xf32>
    %504 = tpu.matmul %501, %502, %cst_162 {dimension_numbers = #tpu.dot_dimension_numbers<[1], [0], [0], [1], [0, 0, 1, 1], [], []>} : vector<8x64xf32>, vector<64x128xf32>, vector<8x128xf32> -> vector<8x128xf32>
    %505 = vector.broadcast %503 : vector<1x128xf32> to vector<8x128xf32>
    %506 = arith.addf %504, %505 : vector<8x128xf32>
    %cst_163 = arith.constant dense<0xFF800000> : vector<8xf32>
    %507 = vector.multi_reduction <maximumf>, %506, %cst_163 [1] : vector<8x128xf32> to vector<8xf32>
    %508 = vector.shape_cast %507 : vector<8xf32> to vector<8x1xf32>
    %509 = vector.broadcast %508 : vector<8x1xf32> to vector<8x128xf32>
    %510 = arith.subf %506, %509 : vector<8x128xf32>
    %511 = math.exp %510 : vector<8x128xf32>
    %cst_164 = arith.constant dense<0.000000e+00> : vector<8xf32>
    %512 = vector.multi_reduction <add>, %511, %cst_164 [1] : vector<8x128xf32> to vector<8xf32>
    %513 = vector.shape_cast %512 : vector<8xf32> to vector<8x1xf32>
    %514 = math.log %513 : vector<8x1xf32>
    %515 = vector.broadcast %514 : vector<8x1xf32> to vector<8x128xf32>
    %516 = arith.subf %510, %515 : vector<8x128xf32>
    %c0_165 = arith.constant 0 : index
    %c0_166 = arith.constant 0 : index
    %517 = vector.load %arg11[%c0_165, %c0_166] : memref<8x128xf32, #tpu.memory_space<vmem>>, vector<8x128xf32>
    tpu.vector_store %arg11[%c0_165, %c0_166], %516 {strides = array<i32>} : memref<8x128xf32, #tpu.memory_space<vmem>>, vector<8x128xf32>,
    return
  }
}

</mosaic_0001>

<llo_original>
// kernel: gru_classifier1_forward.1
$region0: #{gru_classifier1_forward.1}
  #allocation0 [shape = 'u32[]', space=smem, size = 0x4, offset = 0x4, fixed_abs, tag = 'smem constant byte address 0x4 - core index']
  #allocation1 [shape = 'u32[144,128]{1,0:T(1,128)}', space=vmem, size = 0x12000, scoped, tag = 'internal scratch']
  #allocation2 [shape = 'f32[8,64]{1,0:T(8,128)}', space=vmem, size = 0x1000, scoped, tag = 'scratch operand']
  %s0 = inlined_call_operand.vmem [shape: s32[8,1], index: 0, kind: input, shape index: {}]
  %s1 = inlined_call_operand.hbm [shape: f32[50,192], index: 1, kind: input, shape index: {}]
  %s2 = inlined_call_operand.vmem [shape: f32[1,192], index: 2, kind: input, shape index: {}]
  %s3 = inlined_call_operand.hbm [shape: f32[64,192], index: 3, kind: input, shape index: {}]
  %s4 = inlined_call_operand.vmem [shape: f32[1,64], index: 4, kind: input, shape index: {}]
  %s5 = inlined_call_operand.hbm [shape: f32[64,192], index: 5, kind: input, shape index: {}]
  %s6 = inlined_call_operand.vmem [shape: f32[1,192], index: 6, kind: input, shape index: {}]
  %s7 = inlined_call_operand.hbm [shape: f32[64,192], index: 7, kind: input, shape index: {}]
  %s8 = inlined_call_operand.vmem [shape: f32[1,64], index: 8, kind: input, shape index: {}]
  %s9 = inlined_call_operand.hbm [shape: f32[64,128], index: 9, kind: input, shape index: {}]
  %s10 = inlined_call_operand.vmem [shape: f32[1,128], index: 10, kind: input, shape index: {}]
  %s11 = inlined_call_operand.hbm [shape: f32[8,128], index: 11, kind: output, shape index: {}]
  %s12 = sld [smem:[#allocation0]]
  $region74: #{gru_classifier1_forward.1} parent=0
    _
  %s14 = ssub.s32 1, %s12
  %s15 = scalar_select 0, %s14, %s12
  $region1: #{gru_classifier1_forward.1} parent=0
    #allocation3 [shape = 'u8[57344]{0}', space=vmem, size = 0xe000, scoped, tag = 'input window, operand 1, single buffered']
    #allocation4 [shape = 's32[1]{0}', space=sflag, size = 0x4, scoped, tag = 'scoped memory for gru_classifier1_forward.1']
    #allocation5 [shape = 's32[1]{0}', space=sflag, size = 0x4, scoped, tag = 'scoped memory for gru_classifier1_forward.1']
    #allocation6 [shape = 'u8[65536]{0}', space=vmem, size = 0x10000, scoped, tag = 'input window, operand 3, single buffered']
    #allocation7 [shape = 's32[1]{0}', space=sflag, size = 0x4, scoped, tag = 'scoped memory for gru_classifier1_forward.1']
    #allocation8 [shape = 'u8[65536]{0}', space=vmem, size = 0x10000, scoped, tag = 'input window, operand 5, single buffered']
    #allocation9 [shape = 'u8[65536]{0}', space=vmem, size = 0x10000, scoped, tag = 'input window, operand 7, single buffered']
    #allocation10 [shape = 's32[1]{0}', space=sflag, size = 0x4, scoped, tag = 'scoped memory for gru_classifier1_forward.1']
    #allocation11 [shape = 'u8[32768]{0}', space=vmem, size = 0x8000, scoped, tag = 'input window, operand 9, single buffered']
    #allocation12 [shape = 'u8[4096]{0}', space=vmem, size = 0x1000, scoped, tag = 'output window, operand 0, single buffered']
    %16 = vsyncpa [#allocation4], 0
    %17 = vsyncpa [#allocation7], 0
    %18 = vsyncpa [#allocation10], 0
    %19 = vsyncpa [#allocation5], 0
    // Predicated region
    $region2: #{gru_classifier1_forward.1} parent=1 // pred_check
      _
    $region3: #{gru_classifier1_forward.1} parent=1 // pred_check_branch
      %21 = sbr.rel (0) target = $region5
    $region4: #{gru_classifier1_forward.1} parent=1 // pred_region
      _
    $region5: #{gru_classifier1_forward.1} parent=1 // pred_fallthru
      _
    // Predicated region
    $region6: #{gru_classifier1_forward.1} parent=1 // pred_check
      _
    $region7: #{gru_classifier1_forward.1} parent=1 // pred_check_branch
      %23 = sbr.rel (0) target = $region9
    $region8: #{gru_classifier1_forward.1} parent=1 // pred_region
      %s25 = ssub.s32 1792, 1792
      %26 = vsyncadd [#allocation4], %s25
      %s27 = sshll.u32 [#allocation3], 4
      %s28 = int_to_ptr.vmem [resolvable:$true] %s27
      %33 = dma.hbm_to_vmem [thread:$0]  %s1, 1792, %s28, [#allocation4], 256, 256, 16
    $region9: #{gru_classifier1_forward.1} parent=1 // pred_fallthru
      _
    // Predicated region
    $region10: #{gru_classifier1_forward.1} parent=1 // pred_check
      _
    $region11: #{gru_classifier1_forward.1} parent=1 // pred_check_branch
      %35 = sbr.rel (0) target = $region13
    $region12: #{gru_classifier1_forward.1} parent=1 // pred_region
      _
    $region13: #{gru_classifier1_forward.1} parent=1 // pred_fallthru
      _
    // Predicated region
    $region14: #{gru_classifier1_forward.1} parent=1 // pred_check
      _
    $region15: #{gru_classifier1_forward.1} parent=1 // pred_check_branch
      %37 = sbr.rel (0) target = $region17
    $region16: #{gru_classifier1_forward.1} parent=1 // pred_region
      %s39 = ssub.s32 2048, 2048
      %40 = vsyncadd [#allocation7], %s39
      %s41 = sshll.u32 [#allocation6], 4
      %s42 = int_to_ptr.vmem [resolvable:$true] %s41
      %47 = dma.hbm_to_vmem [thread:$0]  %s3, 2048, %s42, [#allocation7], 256, 256, 16
    $region17: #{gru_classifier1_forward.1} parent=1 // pred_fallthru
      _
    // Predicated region
    $region18: #{gru_classifier1_forward.1} parent=1 // pred_check
      _
    $region19: #{gru_classifier1_forward.1} parent=1 // pred_check_branch
      %49 = sbr.rel (0) target = $region21
    $region20: #{gru_classifier1_forward.1} parent=1 // pred_region
      _
    $region21: #{gru_classifier1_forward.1} parent=1 // pred_fallthru
      _
    // Predicated region
    $region22: #{gru_classifier1_forward.1} parent=1 // pred_check
      _
    $region23: #{gru_classifier1_forward.1} parent=1 // pred_check_branch
      %51 = sbr.rel (0) target = $region25
    $region24: #{gru_classifier1_forward.1} parent=1 // pred_region
      %s53 = ssub.s32 2048, 2048
      %54 = vsyncadd [#allocation7], %s53
      %s55 = sshll.u32 [#allocation8], 4
      %s56 = int_to_ptr.vmem [resolvable:$true] %s55
      %61 = dma.hbm_to_vmem [thread:$0]  %s5, 2048, %s56, [#allocation7], 256, 256, 16
    $region25: #{gru_classifier1_forward.1} parent=1 // pred_fallthru
      _
    // Predicated region
    $region26: #{gru_classifier1_forward.1} parent=1 // pred_check
      _
    $region27: #{gru_classifier1_forward.1} parent=1 // pred_check_branch
      %63 = sbr.rel (0) target = $region29
    $region28: #{gru_classifier1_forward.1} parent=1 // pred_region
      _
    $region29: #{gru_classifier1_forward.1} parent=1 // pred_fallthru
      _
    // Predicated region
    $region30: #{gru_classifier1_forward.1} parent=1 // pred_check
      _
    $region31: #{gru_classifier1_forward.1} parent=1 // pred_check_branch
      %65 = sbr.rel (0) target = $region33
    $region32: #{gru_classifier1_forward.1} parent=1 // pred_region
      %s67 = ssub.s32 2048, 2048
      %68 = vsyncadd [#allocation10], %s67
      %s69 = sshll.u32 [#allocation9], 4
      %s70 = int_to_ptr.vmem [resolvable:$true] %s69
      %75 = dma.hbm_to_vmem [thread:$0]  %s7, 2048, %s70, [#allocation10], 256, 256, 16
    $region33: #{gru_classifier1_forward.1} parent=1 // pred_fallthru
      _
    // Predicated region
    $region34: #{gru_classifier1_forward.1} parent=1 // pred_check
      _
    $region35: #{gru_classifier1_forward.1} parent=1 // pred_check_branch
      %77 = sbr.rel (0) target = $region37
    $region36: #{gru_classifier1_forward.1} parent=1 // pred_region
      _
    $region37: #{gru_classifier1_forward.1} parent=1 // pred_fallthru
      _
    // Predicated region
    $region38: #{gru_classifier1_forward.1} parent=1 // pred_check
      _
    $region39: #{gru_classifier1_forward.1} parent=1 // pred_check_branch
      %79 = sbr.rel (0) target = $region41
    $region40: #{gru_classifier1_forward.1} parent=1 // pred_region
      %s81 = ssub.s32 1024, 1024
      %82 = vsyncadd [#allocation10], %s81
      %s83 = sshll.u32 [#allocation11], 4
      %s84 = int_to_ptr.vmem [resolvable:$true] %s83
      %89 = dma.hbm_to_vmem [thread:$0]  %s9, 1024, %s84, [#allocation10], 128, 128, 8
    $region41: #{gru_classifier1_forward.1} parent=1 // pred_fallthru
      _
    // Predicated region
    $region42: #{gru_classifier1_forward.1} parent=1 // pred_check
      _
    $region43: #{gru_classifier1_forward.1} parent=1 // pred_check_branch
      %91 = sbr.rel (0) target = $region45
    $region44: #{gru_classifier1_forward.1} parent=1 // pred_region
      _
    $region45: #{gru_classifier1_forward.1} parent=1 // pred_fallthru
      _
    // Predicated region
    $region46: #{gru_classifier1_forward.1} parent=1 // pred_check
      _
    $region47: #{gru_classifier1_forward.1} parent=1 // pred_check_branch
      %93 = sbr.rel (0) target = $region49
    $region48: #{gru_classifier1_forward.1} parent=1 // pred_region
      %94 = dma.done [#allocation4], 1792
    $region49: #{gru_classifier1_forward.1} parent=1 // pred_fallthru
      _
    // Predicated region
    $region50: #{gru_classifier1_forward.1} parent=1 // pred_check
      _
    $region51: #{gru_classifier1_forward.1} parent=1 // pred_check_branch
      %96 = sbr.rel (0) target = $region53
    $region52: #{gru_classifier1_forward.1} parent=1 // pred_region
      %97 = dma.done [#allocation7], 2048
    $region53: #{gru_classifier1_forward.1} parent=1 // pred_fallthru
      _
    // Predicated region
    $region54: #{gru_classifier1_forward.1} parent=1 // pred_check
      _
    $region55: #{gru_classifier1_forward.1} parent=1 // pred_check_branch
      %99 = sbr.rel (0) target = $region57
    $region56: #{gru_classifier1_forward.1} parent=1 // pred_region
      %100 = dma.done [#allocation7], 2048
    $region57: #{gru_classifier1_forward.1} parent=1 // pred_fallthru
      _
    // Predicated region
    $region58: #{gru_classifier1_forward.1} parent=1 // pred_check
      _
    $region59: #{gru_classifier1_forward.1} parent=1 // pred_check_branch
      %102 = sbr.rel (0) target = $region61
    $region60: #{gru_classifier1_forward.1} parent=1 // pred_region
      %103 = dma.done [#allocation10], 2048
    $region61: #{gru_classifier1_forward.1} parent=1 // pred_fallthru
      _
    // Predicated region
    $region62: #{gru_classifier1_forward.1} parent=1 // pred_check
      _
    $region63: #{gru_classifier1_forward.1} parent=1 // pred_check_branch
      %105 = sbr.rel (0) target = $region65
    $region64: #{gru_classifier1_forward.1} parent=1 // pred_region
      %106 = dma.done [#allocation10], 1024
    $region65: #{gru_classifier1_forward.1} parent=1 // pred_fallthru
      _
    %v107 = vld [vmem:[%s0] sm:$0xff]
    %v108 = vlaneseq
    %v109 = vand.u32 %v108, 127
    %110 = vset.pattern.permute.xlu0 0
    %111 = vperm.xlu0 %110, %v107
    %v112 = vpop.permute.xlu0 %111
    %vm113 = vcmp.eq.s32.totalorder %v109, %v112
    %v114 = vsel %vm113, 1.0, 0.0
    %v115 = vadd.s32 %v109, 128
    %vm116 = vcmp.lt.s32.totalorder %v109, 32
    %vm117 = vcmp.lt.s32.totalorder %v115, 32
    %vm118 = vcmp.ge.s32.totalorder %v109, 64
    %vm119 = vcmp.ge.s32.totalorder %v115, 64
    %vm120 = vcmp.lt.s32.totalorder %v109, 96
    %vm121 = vcmp.lt.s32.totalorder %v115, 96
    %vm122 = vmand %vm118, %vm120
    %vm123 = vmand %vm119, %vm121
    %vm124 = vmor %vm116, %vm122
    %vm125 = vmor %vm117, %vm123
    %vm126 = vcmp.ge.s32.totalorder %v109, 128
    %vm127 = vcmp.ge.s32.totalorder %v115, 128
    %vm128 = vcmp.lt.s32.totalorder %v109, 160
    %vm129 = vcmp.lt.s32.totalorder %v115, 160
    %vm130 = vmand %vm126, %vm128
    %vm131 = vmand %vm127, %vm129
    %vm132 = vmor %vm124, %vm130
    %vm133 = vmor %vm125, %vm131
    %v134 = vld [vmem:[#allocation3] sm:$0xff]
    %v135 = vld [vmem:[#allocation3 + $0x8] sm:$0xff]
    %v136 = vld [vmem:[#allocation3 + $0x10] sm:$0xff]
    %v137 = vld [vmem:[#allocation3 + $0x18] sm:$0xff]
    %v138 = vld [vmem:[#allocation3 + $0x20] sm:$0xff]
    %v139 = vld [vmem:[#allocation3 + $0x28] sm:$0xff]
    %v140 = vld [vmem:[#allocation3 + $0x30] sm:$0xff]
    %v141 = vld [vmem:[#allocation3 + $0x38] sm:$0xff]
    %v142 = vld [vmem:[#allocation3 + $0x40] sm:$0xff]
    %v143 = vld [vmem:[#allocation3 + $0x48] sm:$0xff]
    %v144 = vld [vmem:[#allocation3 + $0x50] sm:$0xff]
    %v145 = vld [vmem:[#allocation3 + $0x58] sm:$0xff]
    %v146 = vld [vmem:[#allocation3 + $0x60] sm:$0x3]
    %v147 = vld [vmem:[#allocation3 + $0x68] sm:$0x3]
    %v148 = vld [vmem:[%s2] sm:$0x3]
    %v150 = vlaneseq
    %v151 = vshrl.u32 %v150, 7
    %v152 = vsub.s32 0, %v151
    %v153 = vrot.slane %v148, %v152
    %v154 = vlaneseq
    %v155 = vshrl.u32 %v154, 7
    %v156 = vsub.s32 1, %v155
    %v157 = vrot.slane %v148, %v156
    %vm160 = vcmask 408576
    %v162 = vsel %vm160, %v114, 0
    %vm164 = vcmask 1041408
    %v166 = vsel %vm164, %v146, 0
    %v169 = vsel %vm164, %v147, 0
    %171 = vmatprep.subr.mxu0 %v135
    %172 = vmatpush1.msra.mxu0 %v134
    %173 = vmatprep.subr.mxu0 %v137
    %174 = vmatpush1.msra.mxu0 %v136
    %175 = vmatprep.subr.mxu0 %v139
    %176 = vmatpush1.msra.mxu0 %v138
    %177 = vmatprep.subr.mxu0 %v141
    %178 = vmatpush1.msra.mxu0 %v140
    %179 = vmatprep.subr.mxu0 %v143
    %180 = vmatpush1.msra.mxu0 %v142
    %181 = vmatprep.subr.mxu0 %v145
    %182 = vmatpush1.msra.mxu0 %v144
    %183 = vmatprep.subr.mxu0 %v169
    %184 = vmatpush1.msra.mxu0 %v166
    %185 = vmatprep.subr.mxu0 0.0
    %186 = vmatpush1.msra.mxu0 0.0
    %187 = vmatprep.subr.mxu0 0.0
    %188 = vmatpush1.msra.mxu0 0.0
    %189 = vmatprep.subr.mxu0 0.0
    %190 = vmatpush1.msra.mxu0 0.0
    %191 = vmatprep.subr.mxu0 0.0
    %192 = vmatpush1.msra.mxu0 0.0
    %193 = vmatprep.subr.mxu0 0.0
    %194 = vmatpush1.msra.mxu0 0.0
    %195 = vmatprep.subr.mxu0 0.0
    %196 = vmatpush1.msra.mxu0 0.0
    %197 = vmatprep.subr.mxu0 0.0
    %198 = vmatpush1.msra.mxu0 0.0
    %199 = vmatprep.subr.mxu0 0.0
    %200 = vmatpush1.msra.mxu0 0.0
    %201 = vmatprep.subr.mxu0 0.0
    %202 = vmatpush1.msra.mxu0 0.0
    %203 = vmatprep.subr.mxu0 0.0
    %204 = vmatpush1.msra.mxu0 0.0
    %205 = vmatprep.subr.mxu0 0.0
    %206 = vmatpush1.msra.mxu0 0.0
    %207 = vmatprep.subr.mxu0 0.0
    %208 = vmatpush1.msra.mxu0 0.0
    %209 = vmatprep.subr.mxu0 0.0
    %210 = vmatpush1.msra.mxu0 0.0
    %211 = vmatprep.subr.mxu0 0.0
    %212 = vmatpush1.msra.mxu0 0.0
    %213 = vmatprep.subr.mxu0 0.0
    %214 = vmatpush1.msra.mxu0 0.0
    %215 = vmatprep.subr.mxu0 0.0
    %216 = vmatpush1.msra.mxu0 0.0
    %217 = vmatprep.subr.mxu0 0.0
    %218 = vmatpush1.msra.mxu0 0.0
    %219 = vmatprep.subr.mxu0 0.0
    %220 = vmatpush1.msra.mxu0 0.0
    %221 = vmatprep.subr.mxu0 0.0
    %222 = vmatpush1.msra.mxu0 0.0
    %223 = vmatprep.subr.mxu0 0.0
    %224 = vmatpush1.msra.mxu0 0.0
    %225 = vmatprep.subr.mxu0 0.0
    %226 = vmatpush1.msra.mxu0 0.0
    %227 = vmatprep.subr.mxu0 0.0
    %228 = vmatpush1.msra.mxu0 0.0
    %229 = vmatprep.subr.mxu0 0.0
    %230 = vmatpush1.msra.mxu0 0.0
    %231 = vmatprep.subr.mxu0 0.0
    %232 = vmatpush1.msra.mxu0 0.0
    %233 = vmatprep.subr.mxu0 0.0
    %234 = vmatpush1.msra.mxu0 0.0
    %235 = vmatprep.mubr.f32.mxu0 0.0
    %236 = vmatmul.mubr.f32.gmra.mrb[0].mxu0 %v162
    %v237 = vpop.f32.mrb[0].mxu0
    %v238 = vadd.f32 %v153, %v237
    %v239 = vpop.f32.mrb[0].mxu0
    %v240 = vadd.f32 %v157, %v239
    %241 = vdwg.mxu0
    %v244 = vrot.slane %v238, 7
    %v245 = vrot.slane %v240, 7
    %v248 = vsel %vm132, %v238, %v244
    %v249 = vsel %vm133, %v240, %v245
    %v250 = vrot.slane %v238, 5
    %v251 = vrot.slane %v240, 5
    %v254 = vsel %vm132, %v238, %v250
    %v255 = vsel %vm133, %v240, %v251
    %v256 = vrot.slane %v238, 3
    %v257 = vrot.slane %v240, 3
    %v260 = vsel %vm132, %v238, %v256
    %v261 = vsel %vm133, %v240, %v257
    %v262 = vrot.slane %v238, 1
    %v263 = vrot.slane %v240, 1
    %v266 = vsel %vm132, %v238, %v262
    %v267 = vsel %vm133, %v240, %v263
    %v268 = vld [vmem:[%s4] sm:$0x1]
    %v269 = vld [vmem:[#allocation6] sm:$0xff]
    %v270 = vld [vmem:[#allocation6 + $0x8] sm:$0xff]
    %v271 = vld [vmem:[#allocation6 + $0x10] sm:$0xff]
    %v272 = vld [vmem:[#allocation6 + $0x18] sm:$0xff]
    %v273 = vld [vmem:[#allocation6 + $0x20] sm:$0xff]
    %v274 = vld [vmem:[#allocation6 + $0x28] sm:$0xff]
    %v275 = vld [vmem:[#allocation6 + $0x30] sm:$0xff]
    %v276 = vld [vmem:[#allocation6 + $0x38] sm:$0xff]
    %v277 = vld [vmem:[#allocation6 + $0x40] sm:$0xff]
    %v278 = vld [vmem:[#allocation6 + $0x48] sm:$0xff]
    %v279 = vld [vmem:[#allocation6 + $0x50] sm:$0xff]
    %v280 = vld [vmem:[#allocation6 + $0x58] sm:$0xff]
    %v281 = vld [vmem:[#allocation6 + $0x60] sm:$0xff]
    %v282 = vld [vmem:[#allocation6 + $0x68] sm:$0xff]
    %v283 = vld [vmem:[#allocation6 + $0x70] sm:$0xff]
    %v284 = vld [vmem:[#allocation6 + $0x78] sm:$0xff]
    %vm285 = vcmask 523264
    %v287 = vsel %vm285, 0.0, 0
    %289 = vmatprep.subr.mxu0 %v270
    %290 = vmatpush1.msra.mxu0 %v269
    %291 = vmatprep.subr.mxu0 %v272
    %292 = vmatpush1.msra.mxu0 %v271
    %293 = vmatprep.subr.mxu0 %v274
    %294 = vmatpush1.msra.mxu0 %v273
    %295 = vmatprep.subr.mxu0 %v276
    %296 = vmatpush1.msra.mxu0 %v275
    %297 = vmatprep.subr.mxu0 %v278
    %298 = vmatpush1.msra.mxu0 %v277
    %299 = vmatprep.subr.mxu0 %v280
    %300 = vmatpush1.msra.mxu0 %v279
    %301 = vmatprep.subr.mxu0 %v282
    %302 = vmatpush1.msra.mxu0 %v281
    %303 = vmatprep.subr.mxu0 %v284
    %304 = vmatpush1.msra.mxu0 %v283
    %305 = vmatprep.subr.mxu0 0.0
    %306 = vmatpush1.msra.mxu0 0.0
    %307 = vmatprep.subr.mxu0 0.0
    %308 = vmatpush1.msra.mxu0 0.0
    %309 = vmatprep.subr.mxu0 0.0
    %310 = vmatpush1.msra.mxu0 0.0
    %311 = vmatprep.subr.mxu0 0.0
    %312 = vmatpush1.msra.mxu0 0.0
    %313 = vmatprep.subr.mxu0 0.0
    %314 = vmatpush1.msra.mxu0 0.0
    %315 = vmatprep.subr.mxu0 0.0
    %316 = vmatpush1.msra.mxu0 0.0
    %317 = vmatprep.subr.mxu0 0.0
    %318 = vmatpush1.msra.mxu0 0.0
    %319 = vmatprep.subr.mxu0 0.0
    %320 = vmatpush1.msra.mxu0 0.0
    %321 = vmatprep.subr.mxu0 0.0
    %322 = vmatpush1.msra.mxu0 0.0
    %323 = vmatprep.subr.mxu0 0.0
    %324 = vmatpush1.msra.mxu0 0.0
    %325 = vmatprep.subr.mxu0 0.0
    %326 = vmatpush1.msra.mxu0 0.0
    %327 = vmatprep.subr.mxu0 0.0
    %328 = vmatpush1.msra.mxu0 0.0
    %329 = vmatprep.subr.mxu0 0.0
    %330 = vmatpush1.msra.mxu0 0.0
    %331 = vmatprep.subr.mxu0 0.0
    %332 = vmatpush1.msra.mxu0 0.0
    %333 = vmatprep.subr.mxu0 0.0
    %334 = vmatpush1.msra.mxu0 0.0
    %335 = vmatprep.subr.mxu0 0.0
    %336 = vmatpush1.msra.mxu0 0.0
    %337 = vmatprep.subr.mxu0 0.0
    %338 = vmatpush1.msra.mxu0 0.0
    %339 = vmatprep.subr.mxu0 0.0
    %340 = vmatpush1.msra.mxu0 0.0
    %341 = vmatprep.subr.mxu0 0.0
    %342 = vmatpush1.msra.mxu0 0.0
    %343 = vmatprep.subr.mxu0 0.0
    %344 = vmatpush1.msra.mxu0 0.0
    %345 = vmatprep.subr.mxu0 0.0
    %346 = vmatpush1.msra.mxu0 0.0
    %347 = vmatprep.subr.mxu0 0.0
    %348 = vmatpush1.msra.mxu0 0.0
    %349 = vmatprep.subr.mxu0 0.0
    %350 = vmatpush1.msra.mxu0 0.0
    %351 = vmatprep.subr.mxu0 0.0
    %352 = vmatpush1.msra.mxu0 0.0
    %353 = vmatprep.mubr.f32.mxu0 0.0
    %354 = vmatmul.mubr.f32.gmra.mrb[0].mxu0 %v287
    %v355 = vpop.f32.mrb[0].mxu0
    %v356 = vadd.f32 0.0, %v355
    %v357 = vpop.f32.mrb[0].mxu0
    %v358 = vadd.f32 0.0, %v357
    %359 = vdwg.mxu0
    %v360 = vadd.f32 %v248, %v356
    %v361 = vxor.u32 %v360, 2147483648
    %v362 = vmul.f32 %v361, 1.442695
    %v363 = vpow.pop %v362
    %v364 = vadd.f32 %v363, 1.0
    %v365 = vrcp.pop %v364
    %v366 = vmul.f32 1.0, %v365
    %v367 = vadd.f32 %v358, %v268
    %v368 = vmul.f32 %v366, %v367
    %v369 = vadd.f32 %v249, %v368
    %v370 = vtanh.pop %v369
    %v371 = vsub.f32 1.0, %v366
    %373 = vrot.lane.b32.xlu0 %v370, 64
    %v374 = vpop.permute.xlu0 %373
    %v376 = vmul.f32 %v371, %v374
    %v377 = vmul.f32 %v366, 0.0
    %v378 = vadd.f32 %v376, %v377
    %380 = vrot.lane.b32.xlu0 %v378, 64
    %v381 = vpop.permute.xlu0 %380
    %vm383 = vcmask 253952
    %384 = vst.msk [vmem:[#allocation2] sm:$0x1] %vm383, %v381
    %vm385 = vcmask 516352
    %386 = vst.msk [vmem:[#allocation2 + $0x7] sm:$0x1] %vm385, %v381
    %v387 = vld [vmem:[#allocation6] sm:$0xff]
    %v388 = vld [vmem:[#allocation6 + $0x8] sm:$0xff]
    %v389 = vld [vmem:[#allocation6 + $0x10] sm:$0xff]
    %v390 = vld [vmem:[#allocation6 + $0x18] sm:$0xff]
    %v391 = vld [vmem:[#allocation6 + $0x20] sm:$0xff]
    %v392 = vld [vmem:[#allocation6 + $0x28] sm:$0xff]
    %v393 = vld [vmem:[#allocation6 + $0x30] sm:$0xff]
    %v394 = vld [vmem:[#allocation6 + $0x38] sm:$0xff]
    %v395 = vld [vmem:[#allocation6 + $0x40] sm:$0xff]
    %v396 = vld [vmem:[#allocation6 + $0x48] sm:$0xff]
    %v397 = vld [vmem:[#allocation6 + $0x50] sm:$0xff]
    %v398 = vld [vmem:[#allocation6 + $0x58] sm:$0xff]
    %v399 = vld [vmem:[#allocation6 + $0x60] sm:$0xff]
    %v400 = vld [vmem:[#allocation6 + $0x68] sm:$0xff]
    %v401 = vld [vmem:[#allocation6 + $0x70] sm:$0xff]
    %v402 = vld [vmem:[#allocation6 + $0x78] sm:$0xff]
    %v403 = vsel %vm285, %v381, 0
    %405 = vmatprep.subr.mxu0 %v388
    %406 = vmatpush1.msra.mxu0 %v387
    %407 = vmatprep.subr.mxu0 %v390
    %408 = vmatpush1.msra.mxu0 %v389
    %409 = vmatprep.subr.mxu0 %v392
    %410 = vmatpush1.msra.mxu0 %v391
    %411 = vmatprep.subr.mxu0 %v394
    %412 = vmatpush1.msra.mxu0 %v393
    %413 = vmatprep.subr.mxu0 %v396
    %414 = vmatpush1.msra.mxu0 %v395
    %415 = vmatprep.subr.mxu0 %v398
    %416 = vmatpush1.msra.mxu0 %v397
    %417 = vmatprep.subr.mxu0 %v400
    %418 = vmatpush1.msra.mxu0 %v399
    %419 = vmatprep.subr.mxu0 %v402
    %420 = vmatpush1.msra.mxu0 %v401
    %421 = vmatprep.subr.mxu0 0.0
    %422 = vmatpush1.msra.mxu0 0.0
    %423 = vmatprep.subr.mxu0 0.0
    %424 = vmatpush1.msra.mxu0 0.0
    %425 = vmatprep.subr.mxu0 0.0
    %426 = vmatpush1.msra.mxu0 0.0
    %427 = vmatprep.subr.mxu0 0.0
    %428 = vmatpush1.msra.mxu0 0.0
    %429 = vmatprep.subr.mxu0 0.0
    %430 = vmatpush1.msra.mxu0 0.0
    %431 = vmatprep.subr.mxu0 0.0
    %432 = vmatpush1.msra.mxu0 0.0
    %433 = vmatprep.subr.mxu0 0.0
    %434 = vmatpush1.msra.mxu0 0.0
    %435 = vmatprep.subr.mxu0 0.0
    %436 = vmatpush1.msra.mxu0 0.0
    %437 = vmatprep.subr.mxu0 0.0
    %438 = vmatpush1.msra.mxu0 0.0
    %439 = vmatprep.subr.mxu0 0.0
    %440 = vmatpush1.msra.mxu0 0.0
    %441 = vmatprep.subr.mxu0 0.0
    %442 = vmatpush1.msra.mxu0 0.0
    %443 = vmatprep.subr.mxu0 0.0
    %444 = vmatpush1.msra.mxu0 0.0
    %445 = vmatprep.subr.mxu0 0.0
    %446 = vmatpush1.msra.mxu0 0.0
    %447 = vmatprep.subr.mxu0 0.0
    %448 = vmatpush1.msra.mxu0 0.0
    %449 = vmatprep.subr.mxu0 0.0
    %450 = vmatpush1.msra.mxu0 0.0
    %451 = vmatprep.subr.mxu0 0.0
    %452 = vmatpush1.msra.mxu0 0.0
    %453 = vmatprep.subr.mxu0 0.0
    %454 = vmatpush1.msra.mxu0 0.0
    %455 = vmatprep.subr.mxu0 0.0
    %456 = vmatpush1.msra.mxu0 0.0
    %457 = vmatprep.subr.mxu0 0.0
    %458 = vmatpush1.msra.mxu0 0.0
    %459 = vmatprep.subr.mxu0 0.0
    %460 = vmatpush1.msra.mxu0 0.0
    %461 = vmatprep.subr.mxu0 0.0
    %462 = vmatpush1.msra.mxu0 0.0
    %463 = vmatprep.subr.mxu0 0.0
    %464 = vmatpush1.msra.mxu0 0.0
    %465 = vmatprep.subr.mxu0 0.0
    %466 = vmatpush1.msra.mxu0 0.0
    %467 = vmatprep.subr.mxu0 0.0
    %468 = vmatpush1.msra.mxu0 0.0
    %469 = vmatprep.mubr.f32.mxu0 0.0
    %470 = vmatmul.mubr.f32.gmra.mrb[0].mxu0 %v403
    %v471 = vpop.f32.mrb[0].mxu0
    %v472 = vadd.f32 0.0, %v471
    %v473 = vpop.f32.mrb[0].mxu0
    %v474 = vadd.f32 0.0, %v473
    %475 = vdwg.mxu0
    %v477 = vrot.slane %v472, 7
    %v479 = vadd.f32 %v254, %v477
    %v480 = vxor.u32 %v479, 2147483648
    %v481 = vmul.f32 %v480, 1.442695
    %v482 = vpow.pop %v481
    %v483 = vadd.f32 %v482, 1.0
    %v484 = vrcp.pop %v483
    %v485 = vmul.f32 1.0, %v484
    %v486 = vadd.f32 %v474, %v268
    %v488 = vrot.slane %v486, 7
    %v490 = vmul.f32 %v485, %v488
    %v491 = vadd.f32 %v255, %v490
    %v492 = vtanh.pop %v491
    %v493 = vsub.f32 1.0, %v485
    %495 = vrot.lane.b32.xlu0 %v492, 64
    %v496 = vpop.permute.xlu0 %495
    %v498 = vmul.f32 %v493, %v496
    %v499 = vrot.slane %v378, 7
    %v501 = vmul.f32 %v485, %v499
    %v502 = vadd.f32 %v498, %v501
    %504 = vrot.lane.b32.xlu0 %v502, 64
    %v505 = vpop.permute.xlu0 %504
    %vm507 = vcmask 254977
    %508 = vst.msk [vmem:[#allocation2] sm:$0x2] %vm507, %v505
    %vm509 = vcmask 517377
    %510 = vst.msk [vmem:[#allocation2 + $0x5] sm:$0x2] %vm509, %v505
    %v511 = vld [vmem:[#allocation6] sm:$0xff]
    %v512 = vld [vmem:[#allocation6 + $0x8] sm:$0xff]
    %v513 = vld [vmem:[#allocation6 + $0x10] sm:$0xff]
    %v514 = vld [vmem:[#allocation6 + $0x18] sm:$0xff]
    %v515 = vld [vmem:[#allocation6 + $0x20] sm:$0xff]
    %v516 = vld [vmem:[#allocation6 + $0x28] sm:$0xff]
    %v517 = vld [vmem:[#allocation6 + $0x30] sm:$0xff]
    %v518 = vld [vmem:[#allocation6 + $0x38] sm:$0xff]
    %v519 = vld [vmem:[#allocation6 + $0x40] sm:$0xff]
    %v520 = vld [vmem:[#allocation6 + $0x48] sm:$0xff]
    %v521 = vld [vmem:[#allocation6 + $0x50] sm:$0xff]
    %v522 = vld [vmem:[#allocation6 + $0x58] sm:$0xff]
    %v523 = vld [vmem:[#allocation6 + $0x60] sm:$0xff]
    %v524 = vld [vmem:[#allocation6 + $0x68] sm:$0xff]
    %v525 = vld [vmem:[#allocation6 + $0x70] sm:$0xff]
    %v526 = vld [vmem:[#allocation6 + $0x78] sm:$0xff]
    %v527 = vrot.slane %v502, 1
    %528 = vrot.lane.b32.xlu0 %v527, 64
    %v529 = vpop.permute.xlu0 %528
    %v530 = vsel %vm285, %v529, 0
    %532 = vmatprep.subr.mxu0 %v512
    %533 = vmatpush1.msra.mxu0 %v511
    %534 = vmatprep.subr.mxu0 %v514
    %535 = vmatpush1.msra.mxu0 %v513
    %536 = vmatprep.subr.mxu0 %v516
    %537 = vmatpush1.msra.mxu0 %v515
    %538 = vmatprep.subr.mxu0 %v518
    %539 = vmatpush1.msra.mxu0 %v517
    %540 = vmatprep.subr.mxu0 %v520
    %541 = vmatpush1.msra.mxu0 %v519
    %542 = vmatprep.subr.mxu0 %v522
    %543 = vmatpush1.msra.mxu0 %v521
    %544 = vmatprep.subr.mxu0 %v524
    %545 = vmatpush1.msra.mxu0 %v523
    %546 = vmatprep.subr.mxu0 %v526
    %547 = vmatpush1.msra.mxu0 %v525
    %548 = vmatprep.subr.mxu0 0.0
    %549 = vmatpush1.msra.mxu0 0.0
    %550 = vmatprep.subr.mxu0 0.0
    %551 = vmatpush1.msra.mxu0 0.0
    %552 = vmatprep.subr.mxu0 0.0
    %553 = vmatpush1.msra.mxu0 0.0
    %554 = vmatprep.subr.mxu0 0.0
    %555 = vmatpush1.msra.mxu0 0.0
    %556 = vmatprep.subr.mxu0 0.0
    %557 = vmatpush1.msra.mxu0 0.0
    %558 = vmatprep.subr.mxu0 0.0
    %559 = vmatpush1.msra.mxu0 0.0
    %560 = vmatprep.subr.mxu0 0.0
    %561 = vmatpush1.msra.mxu0 0.0
    %562 = vmatprep.subr.mxu0 0.0
    %563 = vmatpush1.msra.mxu0 0.0
    %564 = vmatprep.subr.mxu0 0.0
    %565 = vmatpush1.msra.mxu0 0.0
    %566 = vmatprep.subr.mxu0 0.0
    %567 = vmatpush1.msra.mxu0 0.0
    %568 = vmatprep.subr.mxu0 0.0
    %569 = vmatpush1.msra.mxu0 0.0
    %570 = vmatprep.subr.mxu0 0.0
    %571 = vmatpush1.msra.mxu0 0.0
    %572 = vmatprep.subr.mxu0 0.0
    %573 = vmatpush1.msra.mxu0 0.0
    %574 = vmatprep.subr.mxu0 0.0
    %575 = vmatpush1.msra.mxu0 0.0
    %576 = vmatprep.subr.mxu0 0.0
    %577 = vmatpush1.msra.mxu0 0.0
    %578 = vmatprep.subr.mxu0 0.0
    %579 = vmatpush1.msra.mxu0 0.0
    %580 = vmatprep.subr.mxu0 0.0
    %581 = vmatpush1.msra.mxu0 0.0
    %582 = vmatprep.subr.mxu0 0.0
    %583 = vmatpush1.msra.mxu0 0.0
    %584 = vmatprep.subr.mxu0 0.0
    %585 = vmatpush1.msra.mxu0 0.0
    %586 = vmatprep.subr.mxu0 0.0
    %587 = vmatpush1.msra.mxu0 0.0
    %588 = vmatprep.subr.mxu0 0.0
    %589 = vmatpush1.msra.mxu0 0.0
    %590 = vmatprep.subr.mxu0 0.0
    %591 = vmatpush1.msra.mxu0 0.0
    %592 = vmatprep.subr.mxu0 0.0
    %593 = vmatpush1.msra.mxu0 0.0
    %594 = vmatprep.subr.mxu0 0.0
    %595 = vmatpush1.msra.mxu0 0.0
    %596 = vmatprep.mubr.f32.mxu0 0.0
    %597 = vmatmul.mubr.f32.gmra.mrb[0].mxu0 %v530
    %v598 = vpop.f32.mrb[0].mxu0
    %v599 = vadd.f32 0.0, %v598
    %v600 = vpop.f32.mrb[0].mxu0
    %v601 = vadd.f32 0.0, %v600
    %602 = vdwg.mxu0
    %v604 = vrot.slane %v599, 6
    %v606 = vadd.f32 %v260, %v604
    %v607 = vxor.u32 %v606, 2147483648
    %v608 = vmul.f32 %v607, 1.442695
    %v609 = vpow.pop %v608
    %v610 = vadd.f32 %v609, 1.0
    %v611 = vrcp.pop %v610
    %v612 = vmul.f32 1.0, %v611
    %v613 = vadd.f32 %v601, %v268
    %v615 = vrot.slane %v613, 6
    %v617 = vmul.f32 %v612, %v615
    %v618 = vadd.f32 %v261, %v617
    %v619 = vtanh.pop %v618
    %v620 = vsub.f32 1.0, %v612
    %622 = vrot.lane.b32.xlu0 %v619, 64
    %v623 = vpop.permute.xlu0 %622
    %v625 = vmul.f32 %v620, %v623
    %v626 = vrot.slane %v502, 7
    %v628 = vmul.f32 %v612, %v626
    %v629 = vadd.f32 %v625, %v628
    %631 = vrot.lane.b32.xlu0 %v629, 64
    %v632 = vpop.permute.xlu0 %631
    %vm634 = vcmask 256002
    %635 = vst.msk [vmem:[#allocation2] sm:$0x4] %vm634, %v632
    %vm636 = vcmask 518402
    %637 = vst.msk [vmem:[#allocation2 + $0x3] sm:$0x4] %vm636, %v632
    %v638 = vld [vmem:[#allocation6] sm:$0xff]
    %v639 = vld [vmem:[#allocation6 + $0x8] sm:$0xff]
    %v640 = vld [vmem:[#allocation6 + $0x10] sm:$0xff]
    %v641 = vld [vmem:[#allocation6 + $0x18] sm:$0xff]
    %v642 = vld [vmem:[#allocation6 + $0x20] sm:$0xff]
    %v643 = vld [vmem:[#allocation6 + $0x28] sm:$0xff]
    %v644 = vld [vmem:[#allocation6 + $0x30] sm:$0xff]
    %v645 = vld [vmem:[#allocation6 + $0x38] sm:$0xff]
    %v646 = vld [vmem:[#allocation6 + $0x40] sm:$0xff]
    %v647 = vld [vmem:[#allocation6 + $0x48] sm:$0xff]
    %v648 = vld [vmem:[#allocation6 + $0x50] sm:$0xff]
    %v649 = vld [vmem:[#allocation6 + $0x58] sm:$0xff]
    %v650 = vld [vmem:[#allocation6 + $0x60] sm:$0xff]
    %v651 = vld [vmem:[#allocation6 + $0x68] sm:$0xff]
    %v652 = vld [vmem:[#allocation6 + $0x70] sm:$0xff]
    %v653 = vld [vmem:[#allocation6 + $0x78] sm:$0xff]
    %v654 = vrot.slane %v629, 2
    %655 = vrot.lane.b32.xlu0 %v654, 64
    %v656 = vpop.permute.xlu0 %655
    %v657 = vsel %vm285, %v656, 0
    %659 = vmatprep.subr.mxu0 %v639
    %660 = vmatpush1.msra.mxu0 %v638
    %661 = vmatprep.subr.mxu0 %v641
    %662 = vmatpush1.msra.mxu0 %v640
    %663 = vmatprep.subr.mxu0 %v643
    %664 = vmatpush1.msra.mxu0 %v642
    %665 = vmatprep.subr.mxu0 %v645
    %666 = vmatpush1.msra.mxu0 %v644
    %667 = vmatprep.subr.mxu0 %v647
    %668 = vmatpush1.msra.mxu0 %v646
    %669 = vmatprep.subr.mxu0 %v649
    %670 = vmatpush1.msra.mxu0 %v648
    %671 = vmatprep.subr.mxu0 %v651
    %672 = vmatpush1.msra.mxu0 %v650
    %673 = vmatprep.subr.mxu0 %v653
    %674 = vmatpush1.msra.mxu0 %v652
    %675 = vmatprep.subr.mxu0 0.0
    %676 = vmatpush1.msra.mxu0 0.0
    %677 = vmatprep.subr.mxu0 0.0
    %678 = vmatpush1.msra.mxu0 0.0
    %679 = vmatprep.subr.mxu0 0.0
    %680 = vmatpush1.msra.mxu0 0.0
    %681 = vmatprep.subr.mxu0 0.0
    %682 = vmatpush1.msra.mxu0 0.0
    %683 = vmatprep.subr.mxu0 0.0
    %684 = vmatpush1.msra.mxu0 0.0
    %685 = vmatprep.subr.mxu0 0.0
    %686 = vmatpush1.msra.mxu0 0.0
    %687 = vmatprep.subr.mxu0 0.0
    %688 = vmatpush1.msra.mxu0 0.0
    %689 = vmatprep.subr.mxu0 0.0
    %690 = vmatpush1.msra.mxu0 0.0
    %691 = vmatprep.subr.mxu0 0.0
    %692 = vmatpush1.msra.mxu0 0.0
    %693 = vmatprep.subr.mxu0 0.0
    %694 = vmatpush1.msra.mxu0 0.0
    %695 = vmatprep.subr.mxu0 0.0
    %696 = vmatpush1.msra.mxu0 0.0
    %697 = vmatprep.subr.mxu0 0.0
    %698 = vmatpush1.msra.mxu0 0.0
    %699 = vmatprep.subr.mxu0 0.0
    %700 = vmatpush1.msra.mxu0 0.0
    %701 = vmatprep.subr.mxu0 0.0
    %702 = vmatpush1.msra.mxu0 0.0
    %703 = vmatprep.subr.mxu0 0.0
    %704 = vmatpush1.msra.mxu0 0.0
    %705 = vmatprep.subr.mxu0 0.0
    %706 = vmatpush1.msra.mxu0 0.0
    %707 = vmatprep.subr.mxu0 0.0
    %708 = vmatpush1.msra.mxu0 0.0
    %709 = vmatprep.subr.mxu0 0.0
    %710 = vmatpush1.msra.mxu0 0.0
    %711 = vmatprep.subr.mxu0 0.0
    %712 = vmatpush1.msra.mxu0 0.0
    %713 = vmatprep.subr.mxu0 0.0
    %714 = vmatpush1.msra.mxu0 0.0
    %715 = vmatprep.subr.mxu0 0.0
    %716 = vmatpush1.msra.mxu0 0.0
    %717 = vmatprep.subr.mxu0 0.0
    %718 = vmatpush1.msra.mxu0 0.0
    %719 = vmatprep.subr.mxu0 0.0
    %720 = vmatpush1.msra.mxu0 0.0
    %721 = vmatprep.subr.mxu0 0.0
    %722 = vmatpush1.msra.mxu0 0.0
    %723 = vmatprep.mubr.f32.mxu0 0.0
    %724 = vmatmul.mubr.f32.gmra.mrb[0].mxu0 %v657
    %v725 = vpop.f32.mrb[0].mxu0
    %v726 = vadd.f32 0.0, %v725
    %v727 = vpop.f32.mrb[0].mxu0
    %v728 = vadd.f32 0.0, %v727
    %729 = vdwg.mxu0
    %v731 = vrot.slane %v726, 5
    %v733 = vadd.f32 %v266, %v731
    %v734 = vxor.u32 %v733, 2147483648
    %v735 = vmul.f32 %v734, 1.442695
    %v736 = vpow.pop %v735
    %v737 = vadd.f32 %v736, 1.0
    %v738 = vrcp.pop %v737
    %v739 = vmul.f32 1.0, %v738
    %v740 = vadd.f32 %v728, %v268
    %v742 = vrot.slane %v740, 5
    %v744 = vmul.f32 %v739, %v742
    %v745 = vadd.f32 %v267, %v744
    %v746 = vtanh.pop %v745
    %v747 = vsub.f32 1.0, %v739
    %749 = vrot.lane.b32.xlu0 %v746, 64
    %v750 = vpop.permute.xlu0 %749
    %v752 = vmul.f32 %v747, %v750
    %v753 = vrot.slane %v629, 7
    %v755 = vmul.f32 %v739, %v753
    %v756 = vadd.f32 %v752, %v755
    %758 = vrot.lane.b32.xlu0 %v756, 64
    %v759 = vpop.permute.xlu0 %758
    %vm761 = vcmask 257027
    %762 = vst.msk [vmem:[#allocation2] sm:$0x8] %vm761, %v759
    %vm763 = vcmask 519427
    %764 = vst.msk [vmem:[#allocation2 + $0x1] sm:$0x8] %vm763, %v759
    %v765 = vld [vmem:[#allocation6] sm:$0xff]
    %v766 = vld [vmem:[#allocation6 + $0x8] sm:$0xff]
    %v767 = vld [vmem:[#allocation6 + $0x10] sm:$0xff]
    %v768 = vld [vmem:[#allocation6 + $0x18] sm:$0xff]
    %v769 = vld [vmem:[#allocation6 + $0x20] sm:$0xff]
    %v770 = vld [vmem:[#allocation6 + $0x28] sm:$0xff]
    %v771 = vld [vmem:[#allocation6 + $0x30] sm:$0xff]
    %v772 = vld [vmem:[#allocation6 + $0x38] sm:$0xff]
    %v773 = vld [vmem:[#allocation6 + $0x40] sm:$0xff]
    %v774 = vld [vmem:[#allocation6 + $0x48] sm:$0xff]
    %v775 = vld [vmem:[#allocation6 + $0x50] sm:$0xff]
    %v776 = vld [vmem:[#allocation6 + $0x58] sm:$0xff]
    %v777 = vld [vmem:[#allocation6 + $0x60] sm:$0xff]
    %v778 = vld [vmem:[#allocation6 + $0x68] sm:$0xff]
    %v779 = vld [vmem:[#allocation6 + $0x70] sm:$0xff]
    %v780 = vld [vmem:[#allocation6 + $0x78] sm:$0xff]
    %v781 = vrot.slane %v756, 3
    %782 = vrot.lane.b32.xlu0 %v781, 64
    %v783 = vpop.permute.xlu0 %782
    %v784 = vsel %vm285, %v783, 0
    %786 = vmatprep.subr.mxu0 %v766
    %787 = vmatpush1.msra.mxu0 %v765
    %788 = vmatprep.subr.mxu0 %v768
    %789 = vmatpush1.msra.mxu0 %v767
    %790 = vmatprep.subr.mxu0 %v770
    %791 = vmatpush1.msra.mxu0 %v769
    %792 = vmatprep.subr.mxu0 %v772
    %793 = vmatpush1.msra.mxu0 %v771
    %794 = vmatprep.subr.mxu0 %v774
    %795 = vmatpush1.msra.mxu0 %v773
    %796 = vmatprep.subr.mxu0 %v776
    %797 = vmatpush1.msra.mxu0 %v775
    %798 = vmatprep.subr.mxu0 %v778
    %799 = vmatpush1.msra.mxu0 %v777
    %800 = vmatprep.subr.mxu0 %v780
    %801 = vmatpush1.msra.mxu0 %v779
    %802 = vmatprep.subr.mxu0 0.0
    %803 = vmatpush1.msra.mxu0 0.0
    %804 = vmatprep.subr.mxu0 0.0
    %805 = vmatpush1.msra.mxu0 0.0
    %806 = vmatprep.subr.mxu0 0.0
    %807 = vmatpush1.msra.mxu0 0.0
    %808 = vmatprep.subr.mxu0 0.0
    %809 = vmatpush1.msra.mxu0 0.0
    %810 = vmatprep.subr.mxu0 0.0
    %811 = vmatpush1.msra.mxu0 0.0
    %812 = vmatprep.subr.mxu0 0.0
    %813 = vmatpush1.msra.mxu0 0.0
    %814 = vmatprep.subr.mxu0 0.0
    %815 = vmatpush1.msra.mxu0 0.0
    %816 = vmatprep.subr.mxu0 0.0
    %817 = vmatpush1.msra.mxu0 0.0
    %818 = vmatprep.subr.mxu0 0.0
    %819 = vmatpush1.msra.mxu0 0.0
    %820 = vmatprep.subr.mxu0 0.0
    %821 = vmatpush1.msra.mxu0 0.0
    %822 = vmatprep.subr.mxu0 0.0
    %823 = vmatpush1.msra.mxu0 0.0
    %824 = vmatprep.subr.mxu0 0.0
    %825 = vmatpush1.msra.mxu0 0.0
    %826 = vmatprep.subr.mxu0 0.0
    %827 = vmatpush1.msra.mxu0 0.0
    %828 = vmatprep.subr.mxu0 0.0
    %829 = vmatpush1.msra.mxu0 0.0
    %830 = vmatprep.subr.mxu0 0.0
    %831 = vmatpush1.msra.mxu0 0.0
    %832 = vmatprep.subr.mxu0 0.0
    %833 = vmatpush1.msra.mxu0 0.0
    %834 = vmatprep.subr.mxu0 0.0
    %835 = vmatpush1.msra.mxu0 0.0
    %836 = vmatprep.subr.mxu0 0.0
    %837 = vmatpush1.msra.mxu0 0.0
    %838 = vmatprep.subr.mxu0 0.0
    %839 = vmatpush1.msra.mxu0 0.0
    %840 = vmatprep.subr.mxu0 0.0
    %841 = vmatpush1.msra.mxu0 0.0
    %842 = vmatprep.subr.mxu0 0.0
    %843 = vmatpush1.msra.mxu0 0.0
    %844 = vmatprep.subr.mxu0 0.0
    %845 = vmatpush1.msra.mxu0 0.0
    %846 = vmatprep.subr.mxu0 0.0
    %847 = vmatpush1.msra.mxu0 0.0
    %848 = vmatprep.subr.mxu0 0.0
    %849 = vmatpush1.msra.mxu0 0.0
    %850 = vmatprep.mubr.f32.mxu0 0.0
    %851 = vmatmul.mubr.f32.gmra.mrb[0].mxu0 %v784
    %v852 = vpop.f32.mrb[0].mxu0
    %v853 = vadd.f32 0.0, %v852
    %v854 = vpop.f32.mrb[0].mxu0
    %v855 = vadd.f32 0.0, %v854
    %856 = vdwg.mxu0
    %v858 = vrot.slane %v853, 4
    %v860 = vadd.f32 %v248, %v858
    %v861 = vxor.u32 %v860, 2147483648
    %v862 = vmul.f32 %v861, 1.442695
    %v863 = vpow.pop %v862
    %v864 = vadd.f32 %v863, 1.0
    %v865 = vrcp.pop %v864
    %v866 = vmul.f32 1.0, %v865
    %v867 = vadd.f32 %v855, %v268
    %v869 = vrot.slane %v867, 4
    %v871 = vmul.f32 %v866, %v869
    %v872 = vadd.f32 %v249, %v871
    %v873 = vtanh.pop %v872
    %v874 = vsub.f32 1.0, %v866
    %876 = vrot.lane.b32.xlu0 %v873, 64
    %v877 = vpop.permute.xlu0 %876
    %v879 = vmul.f32 %v874, %v877
    %v880 = vrot.slane %v756, 7
    %v882 = vmul.f32 %v866, %v880
    %v883 = vadd.f32 %v879, %v882
    %885 = vrot.lane.b32.xlu0 %v883, 64
    %v886 = vpop.permute.xlu0 %885
    %vm888 = vcmask 258052
    %889 = vst.msk [vmem:[#allocation2] sm:$0x10] %vm888, %v886
    %vm890 = vcmask 520452
    %891 = vst.msk [vmem:[#allocation2 - $0x1] sm:$0x10] %vm890, %v886
    %v892 = vld [vmem:[#allocation6] sm:$0xff]
    %v893 = vld [vmem:[#allocation6 + $0x8] sm:$0xff]
    %v894 = vld [vmem:[#allocation6 + $0x10] sm:$0xff]
    %v895 = vld [vmem:[#allocation6 + $0x18] sm:$0xff]
    %v896 = vld [vmem:[#allocation6 + $0x20] sm:$0xff]
    %v897 = vld [vmem:[#allocation6 + $0x28] sm:$0xff]
    %v898 = vld [vmem:[#allocation6 + $0x30] sm:$0xff]
    %v899 = vld [vmem:[#allocation6 + $0x38] sm:$0xff]
    %v900 = vld [vmem:[#allocation6 + $0x40] sm:$0xff]
    %v901 = vld [vmem:[#allocation6 + $0x48] sm:$0xff]
    %v902 = vld [vmem:[#allocation6 + $0x50] sm:$0xff]
    %v903 = vld [vmem:[#allocation6 + $0x58] sm:$0xff]
    %v904 = vld [vmem:[#allocation6 + $0x60] sm:$0xff]
    %v905 = vld [vmem:[#allocation6 + $0x68] sm:$0xff]
    %v906 = vld [vmem:[#allocation6 + $0x70] sm:$0xff]
    %v907 = vld [vmem:[#allocation6 + $0x78] sm:$0xff]
    %v908 = vrot.slane %v883, 4
    %909 = vrot.lane.b32.xlu0 %v908, 64
    %v910 = vpop.permute.xlu0 %909
    %v911 = vsel %vm285, %v910, 0
    %913 = vmatprep.subr.mxu0 %v893
    %914 = vmatpush1.msra.mxu0 %v892
    %915 = vmatprep.subr.mxu0 %v895
    %916 = vmatpush1.msra.mxu0 %v894
    %917 = vmatprep.subr.mxu0 %v897
    %918 = vmatpush1.msra.mxu0 %v896
    %919 = vmatprep.subr.mxu0 %v899
    %920 = vmatpush1.msra.mxu0 %v898
    %921 = vmatprep.subr.mxu0 %v901
    %922 = vmatpush1.msra.mxu0 %v900
    %923 = vmatprep.subr.mxu0 %v903
    %924 = vmatpush1.msra.mxu0 %v902
    %925 = vmatprep.subr.mxu0 %v905
    %926 = vmatpush1.msra.mxu0 %v904
    %927 = vmatprep.subr.mxu0 %v907
    %928 = vmatpush1.msra.mxu0 %v906
    %929 = vmatprep.subr.mxu0 0.0
    %930 = vmatpush1.msra.mxu0 0.0
    %931 = vmatprep.subr.mxu0 0.0
    %932 = vmatpush1.msra.mxu0 0.0
    %933 = vmatprep.subr.mxu0 0.0
    %934 = vmatpush1.msra.mxu0 0.0
    %935 = vmatprep.subr.mxu0 0.0
    %936 = vmatpush1.msra.mxu0 0.0
    %937 = vmatprep.subr.mxu0 0.0
    %938 = vmatpush1.msra.mxu0 0.0
    %939 = vmatprep.subr.mxu0 0.0
    %940 = vmatpush1.msra.mxu0 0.0
    %941 = vmatprep.subr.mxu0 0.0
    %942 = vmatpush1.msra.mxu0 0.0
    %943 = vmatprep.subr.mxu0 0.0
    %944 = vmatpush1.msra.mxu0 0.0
    %945 = vmatprep.subr.mxu0 0.0
    %946 = vmatpush1.msra.mxu0 0.0
    %947 = vmatprep.subr.mxu0 0.0
    %948 = vmatpush1.msra.mxu0 0.0
    %949 = vmatprep.subr.mxu0 0.0
    %950 = vmatpush1.msra.mxu0 0.0
    %951 = vmatprep.subr.mxu0 0.0
    %952 = vmatpush1.msra.mxu0 0.0
    %953 = vmatprep.subr.mxu0 0.0
    %954 = vmatpush1.msra.mxu0 0.0
    %955 = vmatprep.subr.mxu0 0.0
    %956 = vmatpush1.msra.mxu0 0.0
    %957 = vmatprep.subr.mxu0 0.0
    %958 = vmatpush1.msra.mxu0 0.0
    %959 = vmatprep.subr.mxu0 0.0
    %960 = vmatpush1.msra.mxu0 0.0
    %961 = vmatprep.subr.mxu0 0.0
    %962 = vmatpush1.msra.mxu0 0.0
    %963 = vmatprep.subr.mxu0 0.0
    %964 = vmatpush1.msra.mxu0 0.0
    %965 = vmatprep.subr.mxu0 0.0
    %966 = vmatpush1.msra.mxu0 0.0
    %967 = vmatprep.subr.mxu0 0.0
    %968 = vmatpush1.msra.mxu0 0.0
    %969 = vmatprep.subr.mxu0 0.0
    %970 = vmatpush1.msra.mxu0 0.0
    %971 = vmatprep.subr.mxu0 0.0
    %972 = vmatpush1.msra.mxu0 0.0
    %973 = vmatprep.subr.mxu0 0.0
    %974 = vmatpush1.msra.mxu0 0.0
    %975 = vmatprep.subr.mxu0 0.0
    %976 = vmatpush1.msra.mxu0 0.0
    %977 = vmatprep.mubr.f32.mxu0 0.0
    %978 = vmatmul.mubr.f32.gmra.mrb[0].mxu0 %v911
    %v979 = vpop.f32.mrb[0].mxu0
    %v980 = vadd.f32 0.0, %v979
    %v981 = vpop.f32.mrb[0].mxu0
    %v982 = vadd.f32 0.0, %v981
    %983 = vdwg.mxu0
    %v985 = vrot.slane %v980, 3
    %v987 = vadd.f32 %v254, %v985
    %v988 = vxor.u32 %v987, 2147483648
    %v989 = vmul.f32 %v988, 1.442695
    %v990 = vpow.pop %v989
    %v991 = vadd.f32 %v990, 1.0
    %v992 = vrcp.pop %v991
    %v993 = vmul.f32 1.0, %v992
    %v994 = vadd.f32 %v982, %v268
    %v996 = vrot.slane %v994, 3
    %v998 = vmul.f32 %v993, %v996
    %v999 = vadd.f32 %v255, %v998
    %v1000 = vtanh.pop %v999
    %v1001 = vsub.f32 1.0, %v993
    %1003 = vrot.lane.b32.xlu0 %v1000, 64
    %v1004 = vpop.permute.xlu0 %1003
    %v1006 = vmul.f32 %v1001, %v1004
    %v1007 = vrot.slane %v883, 7
    %v1009 = vmul.f32 %v993, %v1007
    %v1010 = vadd.f32 %v1006, %v1009
    %1012 = vrot.lane.b32.xlu0 %v1010, 64
    %v1013 = vpop.permute.xlu0 %1012
    %vm1015 = vcmask 259077
    %1016 = vst.msk [vmem:[#allocation2] sm:$0x20] %vm1015, %v1013
    %vm1017 = vcmask 521477
    %1018 = vst.msk [vmem:[#allocation2 - $0x3] sm:$0x20] %vm1017, %v1013
    %v1019 = vld [vmem:[#allocation6] sm:$0xff]
    %v1020 = vld [vmem:[#allocation6 + $0x8] sm:$0xff]
    %v1021 = vld [vmem:[#allocation6 + $0x10] sm:$0xff]
    %v1022 = vld [vmem:[#allocation6 + $0x18] sm:$0xff]
    %v1023 = vld [vmem:[#allocation6 + $0x20] sm:$0xff]
    %v1024 = vld [vmem:[#allocation6 + $0x28] sm:$0xff]
    %v1025 = vld [vmem:[#allocation6 + $0x30] sm:$0xff]
    %v1026 = vld [vmem:[#allocation6 + $0x38] sm:$0xff]
    %v1027 = vld [vmem:[#allocation6 + $0x40] sm:$0xff]
    %v1028 = vld [vmem:[#allocation6 + $0x48] sm:$0xff]
    %v1029 = vld [vmem:[#allocation6 + $0x50] sm:$0xff]
    %v1030 = vld [vmem:[#allocation6 + $0x58] sm:$0xff]
    %v1031 = vld [vmem:[#allocation6 + $0x60] sm:$0xff]
    %v1032 = vld [vmem:[#allocation6 + $0x68] sm:$0xff]
    %v1033 = vld [vmem:[#allocation6 + $0x70] sm:$0xff]
    %v1034 = vld [vmem:[#allocation6 + $0x78] sm:$0xff]
    %v1035 = vrot.slane %v1010, 5
    %1036 = vrot.lane.b32.xlu0 %v1035, 64
    %v1037 = vpop.permute.xlu0 %1036
    %v1038 = vsel %vm285, %v1037, 0
    %1040 = vmatprep.subr.mxu0 %v1020
    %1041 = vmatpush1.msra.mxu0 %v1019
    %1042 = vmatprep.subr.mxu0 %v1022
    %1043 = vmatpush1.msra.mxu0 %v1021
    %1044 = vmatprep.subr.mxu0 %v1024
    %1045 = vmatpush1.msra.mxu0 %v1023
    %1046 = vmatprep.subr.mxu0 %v1026
    %1047 = vmatpush1.msra.mxu0 %v1025
    %1048 = vmatprep.subr.mxu0 %v1028
    %1049 = vmatpush1.msra.mxu0 %v1027
    %1050 = vmatprep.subr.mxu0 %v1030
    %1051 = vmatpush1.msra.mxu0 %v1029
    %1052 = vmatprep.subr.mxu0 %v1032
    %1053 = vmatpush1.msra.mxu0 %v1031
    %1054 = vmatprep.subr.mxu0 %v1034
    %1055 = vmatpush1.msra.mxu0 %v1033
    %1056 = vmatprep.subr.mxu0 0.0
    %1057 = vmatpush1.msra.mxu0 0.0
    %1058 = vmatprep.subr.mxu0 0.0
    %1059 = vmatpush1.msra.mxu0 0.0
    %1060 = vmatprep.subr.mxu0 0.0
    %1061 = vmatpush1.msra.mxu0 0.0
    %1062 = vmatprep.subr.mxu0 0.0
    %1063 = vmatpush1.msra.mxu0 0.0
    %1064 = vmatprep.subr.mxu0 0.0
    %1065 = vmatpush1.msra.mxu0 0.0
    %1066 = vmatprep.subr.mxu0 0.0
    %1067 = vmatpush1.msra.mxu0 0.0
    %1068 = vmatprep.subr.mxu0 0.0
    %1069 = vmatpush1.msra.mxu0 0.0
    %1070 = vmatprep.subr.mxu0 0.0
    %1071 = vmatpush1.msra.mxu0 0.0
    %1072 = vmatprep.subr.mxu0 0.0
    %1073 = vmatpush1.msra.mxu0 0.0
    %1074 = vmatprep.subr.mxu0 0.0
    %1075 = vmatpush1.msra.mxu0 0.0
    %1076 = vmatprep.subr.mxu0 0.0
    %1077 = vmatpush1.msra.mxu0 0.0
    %1078 = vmatprep.subr.mxu0 0.0
    %1079 = vmatpush1.msra.mxu0 0.0
    %1080 = vmatprep.subr.mxu0 0.0
    %1081 = vmatpush1.msra.mxu0 0.0
    %1082 = vmatprep.subr.mxu0 0.0
    %1083 = vmatpush1.msra.mxu0 0.0
    %1084 = vmatprep.subr.mxu0 0.0
    %1085 = vmatpush1.msra.mxu0 0.0
    %1086 = vmatprep.subr.mxu0 0.0
    %1087 = vmatpush1.msra.mxu0 0.0
    %1088 = vmatprep.subr.mxu0 0.0
    %1089 = vmatpush1.msra.mxu0 0.0
    %1090 = vmatprep.subr.mxu0 0.0
    %1091 = vmatpush1.msra.mxu0 0.0
    %1092 = vmatprep.subr.mxu0 0.0
    %1093 = vmatpush1.msra.mxu0 0.0
    %1094 = vmatprep.subr.mxu0 0.0
    %1095 = vmatpush1.msra.mxu0 0.0
    %1096 = vmatprep.subr.mxu0 0.0
    %1097 = vmatpush1.msra.mxu0 0.0
    %1098 = vmatprep.subr.mxu0 0.0
    %1099 = vmatpush1.msra.mxu0 0.0
    %1100 = vmatprep.subr.mxu0 0.0
    %1101 = vmatpush1.msra.mxu0 0.0
    %1102 = vmatprep.subr.mxu0 0.0
    %1103 = vmatpush1.msra.mxu0 0.0
    %1104 = vmatprep.mubr.f32.mxu0 0.0
    %1105 = vmatmul.mubr.f32.gmra.mrb[0].mxu0 %v1038
    %v1106 = vpop.f32.mrb[0].mxu0
    %v1107 = vadd.f32 0.0, %v1106
    %v1108 = vpop.f32.mrb[0].mxu0
    %v1109 = vadd.f32 0.0, %v1108
    %1110 = vdwg.mxu0
    %v1112 = vrot.slane %v1107, 2
    %v1114 = vadd.f32 %v260, %v1112
    %v1115 = vxor.u32 %v1114, 2147483648
    %v1116 = vmul.f32 %v1115, 1.442695
    %v1117 = vpow.pop %v1116
    %v1118 = vadd.f32 %v1117, 1.0
    %v1119 = vrcp.pop %v1118
    %v1120 = vmul.f32 1.0, %v1119
    %v1121 = vadd.f32 %v1109, %v268
    %v1123 = vrot.slane %v1121, 2
    %v1125 = vmul.f32 %v1120, %v1123
    %v1126 = vadd.f32 %v261, %v1125
    %v1127 = vtanh.pop %v1126
    %v1128 = vsub.f32 1.0, %v1120
    %1130 = vrot.lane.b32.xlu0 %v1127, 64
    %v1131 = vpop.permute.xlu0 %1130
    %v1133 = vmul.f32 %v1128, %v1131
    %v1134 = vrot.slane %v1010, 7
    %v1136 = vmul.f32 %v1120, %v1134
    %v1137 = vadd.f32 %v1133, %v1136
    %1139 = vrot.lane.b32.xlu0 %v1137, 64
    %v1140 = vpop.permute.xlu0 %1139
    %vm1142 = vcmask 260102
    %1143 = vst.msk [vmem:[#allocation2] sm:$0x40] %vm1142, %v1140
    %vm1144 = vcmask 522502
    %1145 = vst.msk [vmem:[#allocation2 - $0x5] sm:$0x40] %vm1144, %v1140
    %v1146 = vld [vmem:[#allocation6] sm:$0xff]
    %v1147 = vld [vmem:[#allocation6 + $0x8] sm:$0xff]
    %v1148 = vld [vmem:[#allocation6 + $0x10] sm:$0xff]
    %v1149 = vld [vmem:[#allocation6 + $0x18] sm:$0xff]
    %v1150 = vld [vmem:[#allocation6 + $0x20] sm:$0xff]
    %v1151 = vld [vmem:[#allocation6 + $0x28] sm:$0xff]
    %v1152 = vld [vmem:[#allocation6 + $0x30] sm:$0xff]
    %v1153 = vld [vmem:[#allocation6 + $0x38] sm:$0xff]
    %v1154 = vld [vmem:[#allocation6 + $0x40] sm:$0xff]
    %v1155 = vld [vmem:[#allocation6 + $0x48] sm:$0xff]
    %v1156 = vld [vmem:[#allocation6 + $0x50] sm:$0xff]
    %v1157 = vld [vmem:[#allocation6 + $0x58] sm:$0xff]
    %v1158 = vld [vmem:[#allocation6 + $0x60] sm:$0xff]
    %v1159 = vld [vmem:[#allocation6 + $0x68] sm:$0xff]
    %v1160 = vld [vmem:[#allocation6 + $0x70] sm:$0xff]
    %v1161 = vld [vmem:[#allocation6 + $0x78] sm:$0xff]
    %v1162 = vrot.slane %v1137, 6
    %1163 = vrot.lane.b32.xlu0 %v1162, 64
    %v1164 = vpop.permute.xlu0 %1163
    %v1165 = vsel %vm285, %v1164, 0
    %1167 = vmatprep.subr.mxu0 %v1147
    %1168 = vmatpush1.msra.mxu0 %v1146
    %1169 = vmatprep.subr.mxu0 %v1149
    %1170 = vmatpush1.msra.mxu0 %v1148
    %1171 = vmatprep.subr.mxu0 %v1151
    %1172 = vmatpush1.msra.mxu0 %v1150
    %1173 = vmatprep.subr.mxu0 %v1153
    %1174 = vmatpush1.msra.mxu0 %v1152
    %1175 = vmatprep.subr.mxu0 %v1155
    %1176 = vmatpush1.msra.mxu0 %v1154
    %1177 = vmatprep.subr.mxu0 %v1157
    %1178 = vmatpush1.msra.mxu0 %v1156
    %1179 = vmatprep.subr.mxu0 %v1159
    %1180 = vmatpush1.msra.mxu0 %v1158
    %1181 = vmatprep.subr.mxu0 %v1161
    %1182 = vmatpush1.msra.mxu0 %v1160
    %1183 = vmatprep.subr.mxu0 0.0
    %1184 = vmatpush1.msra.mxu0 0.0
    %1185 = vmatprep.subr.mxu0 0.0
    %1186 = vmatpush1.msra.mxu0 0.0
    %1187 = vmatprep.subr.mxu0 0.0
    %1188 = vmatpush1.msra.mxu0 0.0
    %1189 = vmatprep.subr.mxu0 0.0
    %1190 = vmatpush1.msra.mxu0 0.0
    %1191 = vmatprep.subr.mxu0 0.0
    %1192 = vmatpush1.msra.mxu0 0.0
    %1193 = vmatprep.subr.mxu0 0.0
    %1194 = vmatpush1.msra.mxu0 0.0
    %1195 = vmatprep.subr.mxu0 0.0
    %1196 = vmatpush1.msra.mxu0 0.0
    %1197 = vmatprep.subr.mxu0 0.0
    %1198 = vmatpush1.msra.mxu0 0.0
    %1199 = vmatprep.subr.mxu0 0.0
    %1200 = vmatpush1.msra.mxu0 0.0
    %1201 = vmatprep.subr.mxu0 0.0
    %1202 = vmatpush1.msra.mxu0 0.0
    %1203 = vmatprep.subr.mxu0 0.0
    %1204 = vmatpush1.msra.mxu0 0.0
    %1205 = vmatprep.subr.mxu0 0.0
    %1206 = vmatpush1.msra.mxu0 0.0
    %1207 = vmatprep.subr.mxu0 0.0
    %1208 = vmatpush1.msra.mxu0 0.0
    %1209 = vmatprep.subr.mxu0 0.0
    %1210 = vmatpush1.msra.mxu0 0.0
    %1211 = vmatprep.subr.mxu0 0.0
    %1212 = vmatpush1.msra.mxu0 0.0
    %1213 = vmatprep.subr.mxu0 0.0
    %1214 = vmatpush1.msra.mxu0 0.0
    %1215 = vmatprep.subr.mxu0 0.0
    %1216 = vmatpush1.msra.mxu0 0.0
    %1217 = vmatprep.subr.mxu0 0.0
    %1218 = vmatpush1.msra.mxu0 0.0
    %1219 = vmatprep.subr.mxu0 0.0
    %1220 = vmatpush1.msra.mxu0 0.0
    %1221 = vmatprep.subr.mxu0 0.0
    %1222 = vmatpush1.msra.mxu0 0.0
    %1223 = vmatprep.subr.mxu0 0.0
    %1224 = vmatpush1.msra.mxu0 0.0
    %1225 = vmatprep.subr.mxu0 0.0
    %1226 = vmatpush1.msra.mxu0 0.0
    %1227 = vmatprep.subr.mxu0 0.0
    %1228 = vmatpush1.msra.mxu0 0.0
    %1229 = vmatprep.subr.mxu0 0.0
    %1230 = vmatpush1.msra.mxu0 0.0
    %1231 = vmatprep.mubr.f32.mxu0 0.0
    %1232 = vmatmul.mubr.f32.gmra.mrb[0].mxu0 %v1165
    %v1233 = vpop.f32.mrb[0].mxu0
    %v1234 = vadd.f32 0.0, %v1233
    %v1235 = vpop.f32.mrb[0].mxu0
    %v1236 = vadd.f32 0.0, %v1235
    %1237 = vdwg.mxu0
    %v1239 = vrot.slane %v1234, 1
    %v1241 = vadd.f32 %v266, %v1239
    %v1242 = vxor.u32 %v1241, 2147483648
    %v1243 = vmul.f32 %v1242, 1.442695
    %v1244 = vpow.pop %v1243
    %v1245 = vadd.f32 %v1244, 1.0
    %v1246 = vrcp.pop %v1245
    %v1247 = vmul.f32 1.0, %v1246
    %v1248 = vadd.f32 %v1236, %v268
    %v1250 = vrot.slane %v1248, 1
    %v1252 = vmul.f32 %v1247, %v1250
    %v1253 = vadd.f32 %v267, %v1252
    %v1254 = vtanh.pop %v1253
    %v1255 = vsub.f32 1.0, %v1247
    %1257 = vrot.lane.b32.xlu0 %v1254, 64
    %v1258 = vpop.permute.xlu0 %1257
    %v1260 = vmul.f32 %v1255, %v1258
    %v1261 = vrot.slane %v1137, 7
    %v1263 = vmul.f32 %v1247, %v1261
    %v1264 = vadd.f32 %v1260, %v1263
    %1266 = vrot.lane.b32.xlu0 %v1264, 64
    %v1267 = vpop.permute.xlu0 %1266
    %vm1269 = vcmask 261127
    %1270 = vst.msk [vmem:[#allocation2] sm:$0x80] %vm1269, %v1267
    %vm1271 = vcmask 523527
    %1272 = vst.msk [vmem:[#allocation2 - $0x7] sm:$0x80] %vm1271, %v1267
    %v1273 = vld [vmem:[#allocation2] sm:$0xff]
    %v1274 = vld [vmem:[#allocation8] sm:$0xff]
    %v1275 = vld [vmem:[#allocation8 + $0x8] sm:$0xff]
    %v1276 = vld [vmem:[#allocation8 + $0x10] sm:$0xff]
    %v1277 = vld [vmem:[#allocation8 + $0x18] sm:$0xff]
    %v1278 = vld [vmem:[#allocation8 + $0x20] sm:$0xff]
    %v1279 = vld [vmem:[#allocation8 + $0x28] sm:$0xff]
    %v1280 = vld [vmem:[#allocation8 + $0x30] sm:$0xff]
    %v1281 = vld [vmem:[#allocation8 + $0x38] sm:$0xff]
    %v1282 = vld [vmem:[#allocation8 + $0x40] sm:$0xff]
    %v1283 = vld [vmem:[#allocation8 + $0x48] sm:$0xff]
    %v1284 = vld [vmem:[#allocation8 + $0x50] sm:$0xff]
    %v1285 = vld [vmem:[#allocation8 + $0x58] sm:$0xff]
    %v1286 = vld [vmem:[#allocation8 + $0x60] sm:$0xff]
    %v1287 = vld [vmem:[#allocation8 + $0x68] sm:$0xff]
    %v1288 = vld [vmem:[#allocation8 + $0x70] sm:$0xff]
    %v1289 = vld [vmem:[#allocation8 + $0x78] sm:$0xff]
    %v1290 = vld [vmem:[%s6] sm:$0x3]
    %v1292 = vlaneseq
    %v1293 = vshrl.u32 %v1292, 7
    %v1294 = vsub.s32 0, %v1293
    %v1295 = vrot.slane %v1290, %v1294
    %v1296 = vlaneseq
    %v1297 = vshrl.u32 %v1296, 7
    %v1298 = vsub.s32 1, %v1297
    %v1299 = vrot.slane %v1290, %v1298
    %v1303 = vsel %vm285, %v1273, 0
    %1305 = vmatprep.subr.mxu0 %v1275
    %1306 = vmatpush1.msra.mxu0 %v1274
    %1307 = vmatprep.subr.mxu0 %v1277
    %1308 = vmatpush1.msra.mxu0 %v1276
    %1309 = vmatprep.subr.mxu0 %v1279
    %1310 = vmatpush1.msra.mxu0 %v1278
    %1311 = vmatprep.subr.mxu0 %v1281
    %1312 = vmatpush1.msra.mxu0 %v1280
    %1313 = vmatprep.subr.mxu0 %v1283
    %1314 = vmatpush1.msra.mxu0 %v1282
    %1315 = vmatprep.subr.mxu0 %v1285
    %1316 = vmatpush1.msra.mxu0 %v1284
    %1317 = vmatprep.subr.mxu0 %v1287
    %1318 = vmatpush1.msra.mxu0 %v1286
    %1319 = vmatprep.subr.mxu0 %v1289
    %1320 = vmatpush1.msra.mxu0 %v1288
    %1321 = vmatprep.subr.mxu0 0.0
    %1322 = vmatpush1.msra.mxu0 0.0
    %1323 = vmatprep.subr.mxu0 0.0
    %1324 = vmatpush1.msra.mxu0 0.0
    %1325 = vmatprep.subr.mxu0 0.0
    %1326 = vmatpush1.msra.mxu0 0.0
    %1327 = vmatprep.subr.mxu0 0.0
    %1328 = vmatpush1.msra.mxu0 0.0
    %1329 = vmatprep.subr.mxu0 0.0
    %1330 = vmatpush1.msra.mxu0 0.0
    %1331 = vmatprep.subr.mxu0 0.0
    %1332 = vmatpush1.msra.mxu0 0.0
    %1333 = vmatprep.subr.mxu0 0.0
    %1334 = vmatpush1.msra.mxu0 0.0
    %1335 = vmatprep.subr.mxu0 0.0
    %1336 = vmatpush1.msra.mxu0 0.0
    %1337 = vmatprep.subr.mxu0 0.0
    %1338 = vmatpush1.msra.mxu0 0.0
    %1339 = vmatprep.subr.mxu0 0.0
    %1340 = vmatpush1.msra.mxu0 0.0
    %1341 = vmatprep.subr.mxu0 0.0
    %1342 = vmatpush1.msra.mxu0 0.0
    %1343 = vmatprep.subr.mxu0 0.0
    %1344 = vmatpush1.msra.mxu0 0.0
    %1345 = vmatprep.subr.mxu0 0.0
    %1346 = vmatpush1.msra.mxu0 0.0
    %1347 = vmatprep.subr.mxu0 0.0
    %1348 = vmatpush1.msra.mxu0 0.0
    %1349 = vmatprep.subr.mxu0 0.0
    %1350 = vmatpush1.msra.mxu0 0.0
    %1351 = vmatprep.subr.mxu0 0.0
    %1352 = vmatpush1.msra.mxu0 0.0
    %1353 = vmatprep.subr.mxu0 0.0
    %1354 = vmatpush1.msra.mxu0 0.0
    %1355 = vmatprep.subr.mxu0 0.0
    %1356 = vmatpush1.msra.mxu0 0.0
    %1357 = vmatprep.subr.mxu0 0.0
    %1358 = vmatpush1.msra.mxu0 0.0
    %1359 = vmatprep.subr.mxu0 0.0
    %1360 = vmatpush1.msra.mxu0 0.0
    %1361 = vmatprep.subr.mxu0 0.0
    %1362 = vmatpush1.msra.mxu0 0.0
    %1363 = vmatprep.subr.mxu0 0.0
    %1364 = vmatpush1.msra.mxu0 0.0
    %1365 = vmatprep.subr.mxu0 0.0
    %1366 = vmatpush1.msra.mxu0 0.0
    %1367 = vmatprep.subr.mxu0 0.0
    %1368 = vmatpush1.msra.mxu0 0.0
    %1369 = vmatprep.mubr.f32.mxu0 0.0
    %1370 = vmatmul.mubr.f32.gmra.mrb[0].mxu0 %v1303
    %v1371 = vpop.f32.mrb[0].mxu0
    %v1372 = vadd.f32 %v1295, %v1371
    %v1373 = vpop.f32.mrb[0].mxu0
    %v1374 = vadd.f32 %v1299, %v1373
    %1375 = vdwg.mxu0
    %v1378 = vrot.slane %v1372, 7
    %v1379 = vrot.slane %v1374, 7
    %v1382 = vsel %vm132, %v1372, %v1378
    %v1383 = vsel %vm133, %v1374, %v1379
    %v1384 = vrot.slane %v1372, 5
    %v1385 = vrot.slane %v1374, 5
    %v1388 = vsel %vm132, %v1372, %v1384
    %v1389 = vsel %vm133, %v1374, %v1385
    %v1390 = vrot.slane %v1372, 3
    %v1391 = vrot.slane %v1374, 3
    %v1394 = vsel %vm132, %v1372, %v1390
    %v1395 = vsel %vm133, %v1374, %v1391
    %v1396 = vrot.slane %v1372, 1
    %v1397 = vrot.slane %v1374, 1
    %v1400 = vsel %vm132, %v1372, %v1396
    %v1401 = vsel %vm133, %v1374, %v1397
    %v1402 = vld [vmem:[%s8] sm:$0x1]
    %v1403 = vld [vmem:[#allocation9] sm:$0xff]
    %v1404 = vld [vmem:[#allocation9 + $0x8] sm:$0xff]
    %v1405 = vld [vmem:[#allocation9 + $0x10] sm:$0xff]
    %v1406 = vld [vmem:[#allocation9 + $0x18] sm:$0xff]
    %v1407 = vld [vmem:[#allocation9 + $0x20] sm:$0xff]
    %v1408 = vld [vmem:[#allocation9 + $0x28] sm:$0xff]
    %v1409 = vld [vmem:[#allocation9 + $0x30] sm:$0xff]
    %v1410 = vld [vmem:[#allocation9 + $0x38] sm:$0xff]
    %v1411 = vld [vmem:[#allocation9 + $0x40] sm:$0xff]
    %v1412 = vld [vmem:[#allocation9 + $0x48] sm:$0xff]
    %v1413 = vld [vmem:[#allocation9 + $0x50] sm:$0xff]
    %v1414 = vld [vmem:[#allocation9 + $0x58] sm:$0xff]
    %v1415 = vld [vmem:[#allocation9 + $0x60] sm:$0xff]
    %v1416 = vld [vmem:[#allocation9 + $0x68] sm:$0xff]
    %v1417 = vld [vmem:[#allocation9 + $0x70] sm:$0xff]
    %v1418 = vld [vmem:[#allocation9 + $0x78] sm:$0xff]
    %1419 = vmatprep.subr.mxu0 %v1404
    %1420 = vmatpush1.msra.mxu0 %v1403
    %1421 = vmatprep.subr.mxu0 %v1406
    %1422 = vmatpush1.msra.mxu0 %v1405
    %1423 = vmatprep.subr.mxu0 %v1408
    %1424 = vmatpush1.msra.mxu0 %v1407
    %1425 = vmatprep.subr.mxu0 %v1410
    %1426 = vmatpush1.msra.mxu0 %v1409
    %1427 = vmatprep.subr.mxu0 %v1412
    %1428 = vmatpush1.msra.mxu0 %v1411
    %1429 = vmatprep.subr.mxu0 %v1414
    %1430 = vmatpush1.msra.mxu0 %v1413
    %1431 = vmatprep.subr.mxu0 %v1416
    %1432 = vmatpush1.msra.mxu0 %v1415
    %1433 = vmatprep.subr.mxu0 %v1418
    %1434 = vmatpush1.msra.mxu0 %v1417
    %1435 = vmatprep.subr.mxu0 0.0
    %1436 = vmatpush1.msra.mxu0 0.0
    %1437 = vmatprep.subr.mxu0 0.0
    %1438 = vmatpush1.msra.mxu0 0.0
    %1439 = vmatprep.subr.mxu0 0.0
    %1440 = vmatpush1.msra.mxu0 0.0
    %1441 = vmatprep.subr.mxu0 0.0
    %1442 = vmatpush1.msra.mxu0 0.0
    %1443 = vmatprep.subr.mxu0 0.0
    %1444 = vmatpush1.msra.mxu0 0.0
    %1445 = vmatprep.subr.mxu0 0.0
    %1446 = vmatpush1.msra.mxu0 0.0
    %1447 = vmatprep.subr.mxu0 0.0
    %1448 = vmatpush1.msra.mxu0 0.0
    %1449 = vmatprep.subr.mxu0 0.0
    %1450 = vmatpush1.msra.mxu0 0.0
    %1451 = vmatprep.subr.mxu0 0.0
    %1452 = vmatpush1.msra.mxu0 0.0
    %1453 = vmatprep.subr.mxu0 0.0
    %1454 = vmatpush1.msra.mxu0 0.0
    %1455 = vmatprep.subr.mxu0 0.0
    %1456 = vmatpush1.msra.mxu0 0.0
    %1457 = vmatprep.subr.mxu0 0.0
    %1458 = vmatpush1.msra.mxu0 0.0
    %1459 = vmatprep.subr.mxu0 0.0
    %1460 = vmatpush1.msra.mxu0 0.0
    %1461 = vmatprep.subr.mxu0 0.0
    %1462 = vmatpush1.msra.mxu0 0.0
    %1463 = vmatprep.subr.mxu0 0.0
    %1464 = vmatpush1.msra.mxu0 0.0
    %1465 = vmatprep.subr.mxu0 0.0
    %1466 = vmatpush1.msra.mxu0 0.0
    %1467 = vmatprep.subr.mxu0 0.0
    %1468 = vmatpush1.msra.mxu0 0.0
    %1469 = vmatprep.subr.mxu0 0.0
    %1470 = vmatpush1.msra.mxu0 0.0
    %1471 = vmatprep.subr.mxu0 0.0
    %1472 = vmatpush1.msra.mxu0 0.0
    %1473 = vmatprep.subr.mxu0 0.0
    %1474 = vmatpush1.msra.mxu0 0.0
    %1475 = vmatprep.subr.mxu0 0.0
    %1476 = vmatpush1.msra.mxu0 0.0
    %1477 = vmatprep.subr.mxu0 0.0
    %1478 = vmatpush1.msra.mxu0 0.0
    %1479 = vmatprep.subr.mxu0 0.0
    %1480 = vmatpush1.msra.mxu0 0.0
    %1481 = vmatprep.subr.mxu0 0.0
    %1482 = vmatpush1.msra.mxu0 0.0
    %1483 = vmatprep.mubr.f32.mxu0 0.0
    %1484 = vmatmul.mubr.f32.gmra.mrb[0].mxu0 %v287
    %v1485 = vpop.f32.mrb[0].mxu0
    %v1486 = vadd.f32 0.0, %v1485
    %v1487 = vpop.f32.mrb[0].mxu0
    %v1488 = vadd.f32 0.0, %v1487
    %1489 = vdwg.mxu0
    %v1490 = vadd.f32 %v1382, %v1486
    %v1491 = vxor.u32 %v1490, 2147483648
    %v1492 = vmul.f32 %v1491, 1.442695
    %v1493 = vpow.pop %v1492
    %v1494 = vadd.f32 %v1493, 1.0
    %v1495 = vrcp.pop %v1494
    %v1496 = vmul.f32 1.0, %v1495
    %v1497 = vadd.f32 %v1488, %v1402
    %v1498 = vmul.f32 %v1496, %v1497
    %v1499 = vadd.f32 %v1383, %v1498
    %v1500 = vtanh.pop %v1499
    %v1501 = vsub.f32 1.0, %v1496
    %1503 = vrot.lane.b32.xlu0 %v1500, 64
    %v1504 = vpop.permute.xlu0 %1503
    %v1506 = vmul.f32 %v1501, %v1504
    %v1507 = vmul.f32 %v1496, 0.0
    %v1508 = vadd.f32 %v1506, %v1507
    %1510 = vrot.lane.b32.xlu0 %v1508, 64
    %v1511 = vpop.permute.xlu0 %1510
    %1513 = vst.msk [vmem:[#allocation2] sm:$0x1] %vm383, %v1511
    %1514 = vst.msk [vmem:[#allocation2 + $0x7] sm:$0x1] %vm385, %v1511
    %v1515 = vld [vmem:[#allocation9] sm:$0xff]
    %v1516 = vld [vmem:[#allocation9 + $0x8] sm:$0xff]
    %v1517 = vld [vmem:[#allocation9 + $0x10] sm:$0xff]
    %v1518 = vld [vmem:[#allocation9 + $0x18] sm:$0xff]
    %v1519 = vld [vmem:[#allocation9 + $0x20] sm:$0xff]
    %v1520 = vld [vmem:[#allocation9 + $0x28] sm:$0xff]
    %v1521 = vld [vmem:[#allocation9 + $0x30] sm:$0xff]
    %v1522 = vld [vmem:[#allocation9 + $0x38] sm:$0xff]
    %v1523 = vld [vmem:[#allocation9 + $0x40] sm:$0xff]
    %v1524 = vld [vmem:[#allocation9 + $0x48] sm:$0xff]
    %v1525 = vld [vmem:[#allocation9 + $0x50] sm:$0xff]
    %v1526 = vld [vmem:[#allocation9 + $0x58] sm:$0xff]
    %v1527 = vld [vmem:[#allocation9 + $0x60] sm:$0xff]
    %v1528 = vld [vmem:[#allocation9 + $0x68] sm:$0xff]
    %v1529 = vld [vmem:[#allocation9 + $0x70] sm:$0xff]
    %v1530 = vld [vmem:[#allocation9 + $0x78] sm:$0xff]
    %v1531 = vsel %vm285, %v1511, 0
    %1533 = vmatprep.subr.mxu0 %v1516
    %1534 = vmatpush1.msra.mxu0 %v1515
    %1535 = vmatprep.subr.mxu0 %v1518
    %1536 = vmatpush1.msra.mxu0 %v1517
    %1537 = vmatprep.subr.mxu0 %v1520
    %1538 = vmatpush1.msra.mxu0 %v1519
    %1539 = vmatprep.subr.mxu0 %v1522
    %1540 = vmatpush1.msra.mxu0 %v1521
    %1541 = vmatprep.subr.mxu0 %v1524
    %1542 = vmatpush1.msra.mxu0 %v1523
    %1543 = vmatprep.subr.mxu0 %v1526
    %1544 = vmatpush1.msra.mxu0 %v1525
    %1545 = vmatprep.subr.mxu0 %v1528
    %1546 = vmatpush1.msra.mxu0 %v1527
    %1547 = vmatprep.subr.mxu0 %v1530
    %1548 = vmatpush1.msra.mxu0 %v1529
    %1549 = vmatprep.subr.mxu0 0.0
    %1550 = vmatpush1.msra.mxu0 0.0
    %1551 = vmatprep.subr.mxu0 0.0
    %1552 = vmatpush1.msra.mxu0 0.0
    %1553 = vmatprep.subr.mxu0 0.0
    %1554 = vmatpush1.msra.mxu0 0.0
    %1555 = vmatprep.subr.mxu0 0.0
    %1556 = vmatpush1.msra.mxu0 0.0
    %1557 = vmatprep.subr.mxu0 0.0
    %1558 = vmatpush1.msra.mxu0 0.0
    %1559 = vmatprep.subr.mxu0 0.0
    %1560 = vmatpush1.msra.mxu0 0.0
    %1561 = vmatprep.subr.mxu0 0.0
    %1562 = vmatpush1.msra.mxu0 0.0
    %1563 = vmatprep.subr.mxu0 0.0
    %1564 = vmatpush1.msra.mxu0 0.0
    %1565 = vmatprep.subr.mxu0 0.0
    %1566 = vmatpush1.msra.mxu0 0.0
    %1567 = vmatprep.subr.mxu0 0.0
    %1568 = vmatpush1.msra.mxu0 0.0
    %1569 = vmatprep.subr.mxu0 0.0
    %1570 = vmatpush1.msra.mxu0 0.0
    %1571 = vmatprep.subr.mxu0 0.0
    %1572 = vmatpush1.msra.mxu0 0.0
    %1573 = vmatprep.subr.mxu0 0.0
    %1574 = vmatpush1.msra.mxu0 0.0
    %1575 = vmatprep.subr.mxu0 0.0
    %1576 = vmatpush1.msra.mxu0 0.0
    %1577 = vmatprep.subr.mxu0 0.0
    %1578 = vmatpush1.msra.mxu0 0.0
    %1579 = vmatprep.subr.mxu0 0.0
    %1580 = vmatpush1.msra.mxu0 0.0
    %1581 = vmatprep.subr.mxu0 0.0
    %1582 = vmatpush1.msra.mxu0 0.0
    %1583 = vmatprep.subr.mxu0 0.0
    %1584 = vmatpush1.msra.mxu0 0.0
    %1585 = vmatprep.subr.mxu0 0.0
    %1586 = vmatpush1.msra.mxu0 0.0
    %1587 = vmatprep.subr.mxu0 0.0
    %1588 = vmatpush1.msra.mxu0 0.0
    %1589 = vmatprep.subr.mxu0 0.0
    %1590 = vmatpush1.msra.mxu0 0.0
    %1591 = vmatprep.subr.mxu0 0.0
    %1592 = vmatpush1.msra.mxu0 0.0
    %1593 = vmatprep.subr.mxu0 0.0
    %1594 = vmatpush1.msra.mxu0 0.0
    %1595 = vmatprep.subr.mxu0 0.0
    %1596 = vmatpush1.msra.mxu0 0.0
    %1597 = vmatprep.mubr.f32.mxu0 0.0
    %1598 = vmatmul.mubr.f32.gmra.mrb[0].mxu0 %v1531
    %v1599 = vpop.f32.mrb[0].mxu0
    %v1600 = vadd.f32 0.0, %v1599
    %v1601 = vpop.f32.mrb[0].mxu0
    %v1602 = vadd.f32 0.0, %v1601
    %1603 = vdwg.mxu0
    %v1605 = vrot.slane %v1600, 7
    %v1607 = vadd.f32 %v1388, %v1605
    %v1608 = vxor.u32 %v1607, 2147483648
    %v1609 = vmul.f32 %v1608, 1.442695
    %v1610 = vpow.pop %v1609
    %v1611 = vadd.f32 %v1610, 1.0
    %v1612 = vrcp.pop %v1611
    %v1613 = vmul.f32 1.0, %v1612
    %v1614 = vadd.f32 %v1602, %v1402
    %v1616 = vrot.slane %v1614, 7
    %v1618 = vmul.f32 %v1613, %v1616
    %v1619 = vadd.f32 %v1389, %v1618
    %v1620 = vtanh.pop %v1619
    %v1621 = vsub.f32 1.0, %v1613
    %1623 = vrot.lane.b32.xlu0 %v1620, 64
    %v1624 = vpop.permute.xlu0 %1623
    %v1626 = vmul.f32 %v1621, %v1624
    %v1627 = vrot.slane %v1508, 7
    %v1629 = vmul.f32 %v1613, %v1627
    %v1630 = vadd.f32 %v1626, %v1629
    %1632 = vrot.lane.b32.xlu0 %v1630, 64
    %v1633 = vpop.permute.xlu0 %1632
    %1635 = vst.msk [vmem:[#allocation2] sm:$0x2] %vm507, %v1633
    %1636 = vst.msk [vmem:[#allocation2 + $0x5] sm:$0x2] %vm509, %v1633
    %v1637 = vld [vmem:[#allocation9] sm:$0xff]
    %v1638 = vld [vmem:[#allocation9 + $0x8] sm:$0xff]
    %v1639 = vld [vmem:[#allocation9 + $0x10] sm:$0xff]
    %v1640 = vld [vmem:[#allocation9 + $0x18] sm:$0xff]
    %v1641 = vld [vmem:[#allocation9 + $0x20] sm:$0xff]
    %v1642 = vld [vmem:[#allocation9 + $0x28] sm:$0xff]
    %v1643 = vld [vmem:[#allocation9 + $0x30] sm:$0xff]
    %v1644 = vld [vmem:[#allocation9 + $0x38] sm:$0xff]
    %v1645 = vld [vmem:[#allocation9 + $0x40] sm:$0xff]
    %v1646 = vld [vmem:[#allocation9 + $0x48] sm:$0xff]
    %v1647 = vld [vmem:[#allocation9 + $0x50] sm:$0xff]
    %v1648 = vld [vmem:[#allocation9 + $0x58] sm:$0xff]
    %v1649 = vld [vmem:[#allocation9 + $0x60] sm:$0xff]
    %v1650 = vld [vmem:[#allocation9 + $0x68] sm:$0xff]
    %v1651 = vld [vmem:[#allocation9 + $0x70] sm:$0xff]
    %v1652 = vld [vmem:[#allocation9 + $0x78] sm:$0xff]
    %v1653 = vrot.slane %v1630, 1
    %1654 = vrot.lane.b32.xlu0 %v1653, 64
    %v1655 = vpop.permute.xlu0 %1654
    %v1656 = vsel %vm285, %v1655, 0
    %1658 = vmatprep.subr.mxu0 %v1638
    %1659 = vmatpush1.msra.mxu0 %v1637
    %1660 = vmatprep.subr.mxu0 %v1640
    %1661 = vmatpush1.msra.mxu0 %v1639
    %1662 = vmatprep.subr.mxu0 %v1642
    %1663 = vmatpush1.msra.mxu0 %v1641
    %1664 = vmatprep.subr.mxu0 %v1644
    %1665 = vmatpush1.msra.mxu0 %v1643
    %1666 = vmatprep.subr.mxu0 %v1646
    %1667 = vmatpush1.msra.mxu0 %v1645
    %1668 = vmatprep.subr.mxu0 %v1648
    %1669 = vmatpush1.msra.mxu0 %v1647
    %1670 = vmatprep.subr.mxu0 %v1650
    %1671 = vmatpush1.msra.mxu0 %v1649
    %1672 = vmatprep.subr.mxu0 %v1652
    %1673 = vmatpush1.msra.mxu0 %v1651
    %1674 = vmatprep.subr.mxu0 0.0
    %1675 = vmatpush1.msra.mxu0 0.0
    %1676 = vmatprep.subr.mxu0 0.0
    %1677 = vmatpush1.msra.mxu0 0.0
    %1678 = vmatprep.subr.mxu0 0.0
    %1679 = vmatpush1.msra.mxu0 0.0
    %1680 = vmatprep.subr.mxu0 0.0
    %1681 = vmatpush1.msra.mxu0 0.0
    %1682 = vmatprep.subr.mxu0 0.0
    %1683 = vmatpush1.msra.mxu0 0.0
    %1684 = vmatprep.subr.mxu0 0.0
    %1685 = vmatpush1.msra.mxu0 0.0
    %1686 = vmatprep.subr.mxu0 0.0
    %1687 = vmatpush1.msra.mxu0 0.0
    %1688 = vmatprep.subr.mxu0 0.0
    %1689 = vmatpush1.msra.mxu0 0.0
    %1690 = vmatprep.subr.mxu0 0.0
    %1691 = vmatpush1.msra.mxu0 0.0
    %1692 = vmatprep.subr.mxu0 0.0
    %1693 = vmatpush1.msra.mxu0 0.0
    %1694 = vmatprep.subr.mxu0 0.0
    %1695 = vmatpush1.msra.mxu0 0.0
    %1696 = vmatprep.subr.mxu0 0.0
    %1697 = vmatpush1.msra.mxu0 0.0
    %1698 = vmatprep.subr.mxu0 0.0
    %1699 = vmatpush1.msra.mxu0 0.0
    %1700 = vmatprep.subr.mxu0 0.0
    %1701 = vmatpush1.msra.mxu0 0.0
    %1702 = vmatprep.subr.mxu0 0.0
    %1703 = vmatpush1.msra.mxu0 0.0
    %1704 = vmatprep.subr.mxu0 0.0
    %1705 = vmatpush1.msra.mxu0 0.0
    %1706 = vmatprep.subr.mxu0 0.0
    %1707 = vmatpush1.msra.mxu0 0.0
    %1708 = vmatprep.subr.mxu0 0.0
    %1709 = vmatpush1.msra.mxu0 0.0
    %1710 = vmatprep.subr.mxu0 0.0
    %1711 = vmatpush1.msra.mxu0 0.0
    %1712 = vmatprep.subr.mxu0 0.0
    %1713 = vmatpush1.msra.mxu0 0.0
    %1714 = vmatprep.subr.mxu0 0.0
    %1715 = vmatpush1.msra.mxu0 0.0
    %1716 = vmatprep.subr.mxu0 0.0
    %1717 = vmatpush1.msra.mxu0 0.0
    %1718 = vmatprep.subr.mxu0 0.0
    %1719 = vmatpush1.msra.mxu0 0.0
    %1720 = vmatprep.subr.mxu0 0.0
    %1721 = vmatpush1.msra.mxu0 0.0
    %1722 = vmatprep.mubr.f32.mxu0 0.0
    %1723 = vmatmul.mubr.f32.gmra.mrb[0].mxu0 %v1656
    %v1724 = vpop.f32.mrb[0].mxu0
    %v1725 = vadd.f32 0.0, %v1724
    %v1726 = vpop.f32.mrb[0].mxu0
    %v1727 = vadd.f32 0.0, %v1726
    %1728 = vdwg.mxu0
    %v1730 = vrot.slane %v1725, 6
    %v1732 = vadd.f32 %v1394, %v1730
    %v1733 = vxor.u32 %v1732, 2147483648
    %v1734 = vmul.f32 %v1733, 1.442695
    %v1735 = vpow.pop %v1734
    %v1736 = vadd.f32 %v1735, 1.0
    %v1737 = vrcp.pop %v1736
    %v1738 = vmul.f32 1.0, %v1737
    %v1739 = vadd.f32 %v1727, %v1402
    %v1741 = vrot.slane %v1739, 6
    %v1743 = vmul.f32 %v1738, %v1741
    %v1744 = vadd.f32 %v1395, %v1743
    %v1745 = vtanh.pop %v1744
    %v1746 = vsub.f32 1.0, %v1738
    %1748 = vrot.lane.b32.xlu0 %v1745, 64
    %v1749 = vpop.permute.xlu0 %1748
    %v1751 = vmul.f32 %v1746, %v1749
    %v1752 = vrot.slane %v1630, 7
    %v1754 = vmul.f32 %v1738, %v1752
    %v1755 = vadd.f32 %v1751, %v1754
    %1757 = vrot.lane.b32.xlu0 %v1755, 64
    %v1758 = vpop.permute.xlu0 %1757
    %1760 = vst.msk [vmem:[#allocation2] sm:$0x4] %vm634, %v1758
    %1761 = vst.msk [vmem:[#allocation2 + $0x3] sm:$0x4] %vm636, %v1758
    %v1762 = vld [vmem:[#allocation9] sm:$0xff]
    %v1763 = vld [vmem:[#allocation9 + $0x8] sm:$0xff]
    %v1764 = vld [vmem:[#allocation9 + $0x10] sm:$0xff]
    %v1765 = vld [vmem:[#allocation9 + $0x18] sm:$0xff]
    %v1766 = vld [vmem:[#allocation9 + $0x20] sm:$0xff]
    %v1767 = vld [vmem:[#allocation9 + $0x28] sm:$0xff]
    %v1768 = vld [vmem:[#allocation9 + $0x30] sm:$0xff]
    %v1769 = vld [vmem:[#allocation9 + $0x38] sm:$0xff]
    %v1770 = vld [vmem:[#allocation9 + $0x40] sm:$0xff]
    %v1771 = vld [vmem:[#allocation9 + $0x48] sm:$0xff]
    %v1772 = vld [vmem:[#allocation9 + $0x50] sm:$0xff]
    %v1773 = vld [vmem:[#allocation9 + $0x58] sm:$0xff]
    %v1774 = vld [vmem:[#allocation9 + $0x60] sm:$0xff]
    %v1775 = vld [vmem:[#allocation9 + $0x68] sm:$0xff]
    %v1776 = vld [vmem:[#allocation9 + $0x70] sm:$0xff]
    %v1777 = vld [vmem:[#allocation9 + $0x78] sm:$0xff]
    %v1778 = vrot.slane %v1755, 2
    %1779 = vrot.lane.b32.xlu0 %v1778, 64
    %v1780 = vpop.permute.xlu0 %1779
    %v1781 = vsel %vm285, %v1780, 0
    %1783 = vmatprep.subr.mxu0 %v1763
    %1784 = vmatpush1.msra.mxu0 %v1762
    %1785 = vmatprep.subr.mxu0 %v1765
    %1786 = vmatpush1.msra.mxu0 %v1764
    %1787 = vmatprep.subr.mxu0 %v1767
    %1788 = vmatpush1.msra.mxu0 %v1766
    %1789 = vmatprep.subr.mxu0 %v1769
    %1790 = vmatpush1.msra.mxu0 %v1768
    %1791 = vmatprep.subr.mxu0 %v1771
    %1792 = vmatpush1.msra.mxu0 %v1770
    %1793 = vmatprep.subr.mxu0 %v1773
    %1794 = vmatpush1.msra.mxu0 %v1772
    %1795 = vmatprep.subr.mxu0 %v1775
    %1796 = vmatpush1.msra.mxu0 %v1774
    %1797 = vmatprep.subr.mxu0 %v1777
    %1798 = vmatpush1.msra.mxu0 %v1776
    %1799 = vmatprep.subr.mxu0 0.0
    %1800 = vmatpush1.msra.mxu0 0.0
    %1801 = vmatprep.subr.mxu0 0.0
    %1802 = vmatpush1.msra.mxu0 0.0
    %1803 = vmatprep.subr.mxu0 0.0
    %1804 = vmatpush1.msra.mxu0 0.0
    %1805 = vmatprep.subr.mxu0 0.0
    %1806 = vmatpush1.msra.mxu0 0.0
    %1807 = vmatprep.subr.mxu0 0.0
    %1808 = vmatpush1.msra.mxu0 0.0
    %1809 = vmatprep.subr.mxu0 0.0
    %1810 = vmatpush1.msra.mxu0 0.0
    %1811 = vmatprep.subr.mxu0 0.0
    %1812 = vmatpush1.msra.mxu0 0.0
    %1813 = vmatprep.subr.mxu0 0.0
    %1814 = vmatpush1.msra.mxu0 0.0
    %1815 = vmatprep.subr.mxu0 0.0
    %1816 = vmatpush1.msra.mxu0 0.0
    %1817 = vmatprep.subr.mxu0 0.0
    %1818 = vmatpush1.msra.mxu0 0.0
    %1819 = vmatprep.subr.mxu0 0.0
    %1820 = vmatpush1.msra.mxu0 0.0
    %1821 = vmatprep.subr.mxu0 0.0
    %1822 = vmatpush1.msra.mxu0 0.0
    %1823 = vmatprep.subr.mxu0 0.0
    %1824 = vmatpush1.msra.mxu0 0.0
    %1825 = vmatprep.subr.mxu0 0.0
    %1826 = vmatpush1.msra.mxu0 0.0
    %1827 = vmatprep.subr.mxu0 0.0
    %1828 = vmatpush1.msra.mxu0 0.0
    %1829 = vmatprep.subr.mxu0 0.0
    %1830 = vmatpush1.msra.mxu0 0.0
    %1831 = vmatprep.subr.mxu0 0.0
    %1832 = vmatpush1.msra.mxu0 0.0
    %1833 = vmatprep.subr.mxu0 0.0
    %1834 = vmatpush1.msra.mxu0 0.0
    %1835 = vmatprep.subr.mxu0 0.0
    %1836 = vmatpush1.msra.mxu0 0.0
    %1837 = vmatprep.subr.mxu0 0.0
    %1838 = vmatpush1.msra.mxu0 0.0
    %1839 = vmatprep.subr.mxu0 0.0
    %1840 = vmatpush1.msra.mxu0 0.0
    %1841 = vmatprep.subr.mxu0 0.0
    %1842 = vmatpush1.msra.mxu0 0.0
    %1843 = vmatprep.subr.mxu0 0.0
    %1844 = vmatpush1.msra.mxu0 0.0
    %1845 = vmatprep.subr.mxu0 0.0
    %1846 = vmatpush1.msra.mxu0 0.0
    %1847 = vmatprep.mubr.f32.mxu0 0.0
    %1848 = vmatmul.mubr.f32.gmra.mrb[0].mxu0 %v1781
    %v1849 = vpop.f32.mrb[0].mxu0
    %v1850 = vadd.f32 0.0, %v1849
    %v1851 = vpop.f32.mrb[0].mxu0
    %v1852 = vadd.f32 0.0, %v1851
    %1853 = vdwg.mxu0
    %v1855 = vrot.slane %v1850, 5
    %v1857 = vadd.f32 %v1400, %v1855
    %v1858 = vxor.u32 %v1857, 2147483648
    %v1859 = vmul.f32 %v1858, 1.442695
    %v1860 = vpow.pop %v1859
    %v1861 = vadd.f32 %v1860, 1.0
    %v1862 = vrcp.pop %v1861
    %v1863 = vmul.f32 1.0, %v1862
    %v1864 = vadd.f32 %v1852, %v1402
    %v1866 = vrot.slane %v1864, 5
    %v1868 = vmul.f32 %v1863, %v1866
    %v1869 = vadd.f32 %v1401, %v1868
    %v1870 = vtanh.pop %v1869
    %v1871 = vsub.f32 1.0, %v1863
    %1873 = vrot.lane.b32.xlu0 %v1870, 64
    %v1874 = vpop.permute.xlu0 %1873
    %v1876 = vmul.f32 %v1871, %v1874
    %v1877 = vrot.slane %v1755, 7
    %v1879 = vmul.f32 %v1863, %v1877
    %v1880 = vadd.f32 %v1876, %v1879
    %1882 = vrot.lane.b32.xlu0 %v1880, 64
    %v1883 = vpop.permute.xlu0 %1882
    %1885 = vst.msk [vmem:[#allocation2] sm:$0x8] %vm761, %v1883
    %1886 = vst.msk [vmem:[#allocation2 + $0x1] sm:$0x8] %vm763, %v1883
    %v1887 = vld [vmem:[#allocation9] sm:$0xff]
    %v1888 = vld [vmem:[#allocation9 + $0x8] sm:$0xff]
    %v1889 = vld [vmem:[#allocation9 + $0x10] sm:$0xff]
    %v1890 = vld [vmem:[#allocation9 + $0x18] sm:$0xff]
    %v1891 = vld [vmem:[#allocation9 + $0x20] sm:$0xff]
    %v1892 = vld [vmem:[#allocation9 + $0x28] sm:$0xff]
    %v1893 = vld [vmem:[#allocation9 + $0x30] sm:$0xff]
    %v1894 = vld [vmem:[#allocation9 + $0x38] sm:$0xff]
    %v1895 = vld [vmem:[#allocation9 + $0x40] sm:$0xff]
    %v1896 = vld [vmem:[#allocation9 + $0x48] sm:$0xff]
    %v1897 = vld [vmem:[#allocation9 + $0x50] sm:$0xff]
    %v1898 = vld [vmem:[#allocation9 + $0x58] sm:$0xff]
    %v1899 = vld [vmem:[#allocation9 + $0x60] sm:$0xff]
    %v1900 = vld [vmem:[#allocation9 + $0x68] sm:$0xff]
    %v1901 = vld [vmem:[#allocation9 + $0x70] sm:$0xff]
    %v1902 = vld [vmem:[#allocation9 + $0x78] sm:$0xff]
    %v1903 = vrot.slane %v1880, 3
    %1904 = vrot.lane.b32.xlu0 %v1903, 64
    %v1905 = vpop.permute.xlu0 %1904
    %v1906 = vsel %vm285, %v1905, 0
    %1908 = vmatprep.subr.mxu0 %v1888
    %1909 = vmatpush1.msra.mxu0 %v1887
    %1910 = vmatprep.subr.mxu0 %v1890
    %1911 = vmatpush1.msra.mxu0 %v1889
    %1912 = vmatprep.subr.mxu0 %v1892
    %1913 = vmatpush1.msra.mxu0 %v1891
    %1914 = vmatprep.subr.mxu0 %v1894
    %1915 = vmatpush1.msra.mxu0 %v1893
    %1916 = vmatprep.subr.mxu0 %v1896
    %1917 = vmatpush1.msra.mxu0 %v1895
    %1918 = vmatprep.subr.mxu0 %v1898
    %1919 = vmatpush1.msra.mxu0 %v1897
    %1920 = vmatprep.subr.mxu0 %v1900
    %1921 = vmatpush1.msra.mxu0 %v1899
    %1922 = vmatprep.subr.mxu0 %v1902
    %1923 = vmatpush1.msra.mxu0 %v1901
    %1924 = vmatprep.subr.mxu0 0.0
    %1925 = vmatpush1.msra.mxu0 0.0
    %1926 = vmatprep.subr.mxu0 0.0
    %1927 = vmatpush1.msra.mxu0 0.0
    %1928 = vmatprep.subr.mxu0 0.0
    %1929 = vmatpush1.msra.mxu0 0.0
    %1930 = vmatprep.subr.mxu0 0.0
    %1931 = vmatpush1.msra.mxu0 0.0
    %1932 = vmatprep.subr.mxu0 0.0
    %1933 = vmatpush1.msra.mxu0 0.0
    %1934 = vmatprep.subr.mxu0 0.0
    %1935 = vmatpush1.msra.mxu0 0.0
    %1936 = vmatprep.subr.mxu0 0.0
    %1937 = vmatpush1.msra.mxu0 0.0
    %1938 = vmatprep.subr.mxu0 0.0
    %1939 = vmatpush1.msra.mxu0 0.0
    %1940 = vmatprep.subr.mxu0 0.0
    %1941 = vmatpush1.msra.mxu0 0.0
    %1942 = vmatprep.subr.mxu0 0.0
    %1943 = vmatpush1.msra.mxu0 0.0
    %1944 = vmatprep.subr.mxu0 0.0
    %1945 = vmatpush1.msra.mxu0 0.0
    %1946 = vmatprep.subr.mxu0 0.0
    %1947 = vmatpush1.msra.mxu0 0.0
    %1948 = vmatprep.subr.mxu0 0.0
    %1949 = vmatpush1.msra.mxu0 0.0
    %1950 = vmatprep.subr.mxu0 0.0
    %1951 = vmatpush1.msra.mxu0 0.0
    %1952 = vmatprep.subr.mxu0 0.0
    %1953 = vmatpush1.msra.mxu0 0.0
    %1954 = vmatprep.subr.mxu0 0.0
    %1955 = vmatpush1.msra.mxu0 0.0
    %1956 = vmatprep.subr.mxu0 0.0
    %1957 = vmatpush1.msra.mxu0 0.0
    %1958 = vmatprep.subr.mxu0 0.0
    %1959 = vmatpush1.msra.mxu0 0.0
    %1960 = vmatprep.subr.mxu0 0.0
    %1961 = vmatpush1.msra.mxu0 0.0
    %1962 = vmatprep.subr.mxu0 0.0
    %1963 = vmatpush1.msra.mxu0 0.0
    %1964 = vmatprep.subr.mxu0 0.0
    %1965 = vmatpush1.msra.mxu0 0.0
    %1966 = vmatprep.subr.mxu0 0.0
    %1967 = vmatpush1.msra.mxu0 0.0
    %1968 = vmatprep.subr.mxu0 0.0
    %1969 = vmatpush1.msra.mxu0 0.0
    %1970 = vmatprep.subr.mxu0 0.0
    %1971 = vmatpush1.msra.mxu0 0.0
    %1972 = vmatprep.mubr.f32.mxu0 0.0
    %1973 = vmatmul.mubr.f32.gmra.mrb[0].mxu0 %v1906
    %v1974 = vpop.f32.mrb[0].mxu0
    %v1975 = vadd.f32 0.0, %v1974
    %v1976 = vpop.f32.mrb[0].mxu0
    %v1977 = vadd.f32 0.0, %v1976
    %1978 = vdwg.mxu0
    %v1980 = vrot.slane %v1975, 4
    %v1982 = vadd.f32 %v1382, %v1980
    %v1983 = vxor.u32 %v1982, 2147483648
    %v1984 = vmul.f32 %v1983, 1.442695
    %v1985 = vpow.pop %v1984
    %v1986 = vadd.f32 %v1985, 1.0
    %v1987 = vrcp.pop %v1986
    %v1988 = vmul.f32 1.0, %v1987
    %v1989 = vadd.f32 %v1977, %v1402
    %v1991 = vrot.slane %v1989, 4
    %v1993 = vmul.f32 %v1988, %v1991
    %v1994 = vadd.f32 %v1383, %v1993
    %v1995 = vtanh.pop %v1994
    %v1996 = vsub.f32 1.0, %v1988
    %1998 = vrot.lane.b32.xlu0 %v1995, 64
    %v1999 = vpop.permute.xlu0 %1998
    %v2001 = vmul.f32 %v1996, %v1999
    %v2002 = vrot.slane %v1880, 7
    %v2004 = vmul.f32 %v1988, %v2002
    %v2005 = vadd.f32 %v2001, %v2004
    %2007 = vrot.lane.b32.xlu0 %v2005, 64
    %v2008 = vpop.permute.xlu0 %2007
    %2010 = vst.msk [vmem:[#allocation2] sm:$0x10] %vm888, %v2008
    %2011 = vst.msk [vmem:[#allocation2 - $0x1] sm:$0x10] %vm890, %v2008
    %v2012 = vld [vmem:[#allocation9] sm:$0xff]
    %v2013 = vld [vmem:[#allocation9 + $0x8] sm:$0xff]
    %v2014 = vld [vmem:[#allocation9 + $0x10] sm:$0xff]
    %v2015 = vld [vmem:[#allocation9 + $0x18] sm:$0xff]
    %v2016 = vld [vmem:[#allocation9 + $0x20] sm:$0xff]
    %v2017 = vld [vmem:[#allocation9 + $0x28] sm:$0xff]
    %v2018 = vld [vmem:[#allocation9 + $0x30] sm:$0xff]
    %v2019 = vld [vmem:[#allocation9 + $0x38] sm:$0xff]
    %v2020 = vld [vmem:[#allocation9 + $0x40] sm:$0xff]
    %v2021 = vld [vmem:[#allocation9 + $0x48] sm:$0xff]
    %v2022 = vld [vmem:[#allocation9 + $0x50] sm:$0xff]
    %v2023 = vld [vmem:[#allocation9 + $0x58] sm:$0xff]
    %v2024 = vld [vmem:[#allocation9 + $0x60] sm:$0xff]
    %v2025 = vld [vmem:[#allocation9 + $0x68] sm:$0xff]
    %v2026 = vld [vmem:[#allocation9 + $0x70] sm:$0xff]
    %v2027 = vld [vmem:[#allocation9 + $0x78] sm:$0xff]
    %v2028 = vrot.slane %v2005, 4
    %2029 = vrot.lane.b32.xlu0 %v2028, 64
    %v2030 = vpop.permute.xlu0 %2029
    %v2031 = vsel %vm285, %v2030, 0
    %2033 = vmatprep.subr.mxu0 %v2013
    %2034 = vmatpush1.msra.mxu0 %v2012
    %2035 = vmatprep.subr.mxu0 %v2015
    %2036 = vmatpush1.msra.mxu0 %v2014
    %2037 = vmatprep.subr.mxu0 %v2017
    %2038 = vmatpush1.msra.mxu0 %v2016
    %2039 = vmatprep.subr.mxu0 %v2019
    %2040 = vmatpush1.msra.mxu0 %v2018
    %2041 = vmatprep.subr.mxu0 %v2021
    %2042 = vmatpush1.msra.mxu0 %v2020
    %2043 = vmatprep.subr.mxu0 %v2023
    %2044 = vmatpush1.msra.mxu0 %v2022
    %2045 = vmatprep.subr.mxu0 %v2025
    %2046 = vmatpush1.msra.mxu0 %v2024
    %2047 = vmatprep.subr.mxu0 %v2027
    %2048 = vmatpush1.msra.mxu0 %v2026
    %2049 = vmatprep.subr.mxu0 0.0
    %2050 = vmatpush1.msra.mxu0 0.0
    %2051 = vmatprep.subr.mxu0 0.0
    %2052 = vmatpush1.msra.mxu0 0.0
    %2053 = vmatprep.subr.mxu0 0.0
    %2054 = vmatpush1.msra.mxu0 0.0
    %2055 = vmatprep.subr.mxu0 0.0
    %2056 = vmatpush1.msra.mxu0 0.0
    %2057 = vmatprep.subr.mxu0 0.0
    %2058 = vmatpush1.msra.mxu0 0.0
    %2059 = vmatprep.subr.mxu0 0.0
    %2060 = vmatpush1.msra.mxu0 0.0
    %2061 = vmatprep.subr.mxu0 0.0
    %2062 = vmatpush1.msra.mxu0 0.0
    %2063 = vmatprep.subr.mxu0 0.0
    %2064 = vmatpush1.msra.mxu0 0.0
    %2065 = vmatprep.subr.mxu0 0.0
    %2066 = vmatpush1.msra.mxu0 0.0
    %2067 = vmatprep.subr.mxu0 0.0
    %2068 = vmatpush1.msra.mxu0 0.0
    %2069 = vmatprep.subr.mxu0 0.0
    %2070 = vmatpush1.msra.mxu0 0.0
    %2071 = vmatprep.subr.mxu0 0.0
    %2072 = vmatpush1.msra.mxu0 0.0
    %2073 = vmatprep.subr.mxu0 0.0
    %2074 = vmatpush1.msra.mxu0 0.0
    %2075 = vmatprep.subr.mxu0 0.0
    %2076 = vmatpush1.msra.mxu0 0.0
    %2077 = vmatprep.subr.mxu0 0.0
    %2078 = vmatpush1.msra.mxu0 0.0
    %2079 = vmatprep.subr.mxu0 0.0
    %2080 = vmatpush1.msra.mxu0 0.0
    %2081 = vmatprep.subr.mxu0 0.0
    %2082 = vmatpush1.msra.mxu0 0.0
    %2083 = vmatprep.subr.mxu0 0.0
    %2084 = vmatpush1.msra.mxu0 0.0
    %2085 = vmatprep.subr.mxu0 0.0
    %2086 = vmatpush1.msra.mxu0 0.0
    %2087 = vmatprep.subr.mxu0 0.0
    %2088 = vmatpush1.msra.mxu0 0.0
    %2089 = vmatprep.subr.mxu0 0.0
    %2090 = vmatpush1.msra.mxu0 0.0
    %2091 = vmatprep.subr.mxu0 0.0
    %2092 = vmatpush1.msra.mxu0 0.0
    %2093 = vmatprep.subr.mxu0 0.0
    %2094 = vmatpush1.msra.mxu0 0.0
    %2095 = vmatprep.subr.mxu0 0.0
    %2096 = vmatpush1.msra.mxu0 0.0
    %2097 = vmatprep.mubr.f32.mxu0 0.0
    %2098 = vmatmul.mubr.f32.gmra.mrb[0].mxu0 %v2031
    %v2099 = vpop.f32.mrb[0].mxu0
    %v2100 = vadd.f32 0.0, %v2099
    %v2101 = vpop.f32.mrb[0].mxu0
    %v2102 = vadd.f32 0.0, %v2101
    %2103 = vdwg.mxu0
    %v2105 = vrot.slane %v2100, 3
    %v2107 = vadd.f32 %v1388, %v2105
    %v2108 = vxor.u32 %v2107, 2147483648
    %v2109 = vmul.f32 %v2108, 1.442695
    %v2110 = vpow.pop %v2109
    %v2111 = vadd.f32 %v2110, 1.0
    %v2112 = vrcp.pop %v2111
    %v2113 = vmul.f32 1.0, %v2112
    %v2114 = vadd.f32 %v2102, %v1402
    %v2116 = vrot.slane %v2114, 3
    %v2118 = vmul.f32 %v2113, %v2116
    %v2119 = vadd.f32 %v1389, %v2118
    %v2120 = vtanh.pop %v2119
    %v2121 = vsub.f32 1.0, %v2113
    %2123 = vrot.lane.b32.xlu0 %v2120, 64
    %v2124 = vpop.permute.xlu0 %2123
    %v2126 = vmul.f32 %v2121, %v2124
    %v2127 = vrot.slane %v2005, 7
    %v2129 = vmul.f32 %v2113, %v2127
    %v2130 = vadd.f32 %v2126, %v2129
    %2132 = vrot.lane.b32.xlu0 %v2130, 64
    %v2133 = vpop.permute.xlu0 %2132
    %2135 = vst.msk [vmem:[#allocation2] sm:$0x20] %vm1015, %v2133
    %2136 = vst.msk [vmem:[#allocation2 - $0x3] sm:$0x20] %vm1017, %v2133
    %v2137 = vld [vmem:[#allocation9] sm:$0xff]
    %v2138 = vld [vmem:[#allocation9 + $0x8] sm:$0xff]
    %v2139 = vld [vmem:[#allocation9 + $0x10] sm:$0xff]
    %v2140 = vld [vmem:[#allocation9 + $0x18] sm:$0xff]
    %v2141 = vld [vmem:[#allocation9 + $0x20] sm:$0xff]
    %v2142 = vld [vmem:[#allocation9 + $0x28] sm:$0xff]
    %v2143 = vld [vmem:[#allocation9 + $0x30] sm:$0xff]
    %v2144 = vld [vmem:[#allocation9 + $0x38] sm:$0xff]
    %v2145 = vld [vmem:[#allocation9 + $0x40] sm:$0xff]
    %v2146 = vld [vmem:[#allocation9 + $0x48] sm:$0xff]
    %v2147 = vld [vmem:[#allocation9 + $0x50] sm:$0xff]
    %v2148 = vld [vmem:[#allocation9 + $0x58] sm:$0xff]
    %v2149 = vld [vmem:[#allocation9 + $0x60] sm:$0xff]
    %v2150 = vld [vmem:[#allocation9 + $0x68] sm:$0xff]
    %v2151 = vld [vmem:[#allocation9 + $0x70] sm:$0xff]
    %v2152 = vld [vmem:[#allocation9 + $0x78] sm:$0xff]
    %v2153 = vrot.slane %v2130, 5
    %2154 = vrot.lane.b32.xlu0 %v2153, 64
    %v2155 = vpop.permute.xlu0 %2154
    %v2156 = vsel %vm285, %v2155, 0
    %2158 = vmatprep.subr.mxu0 %v2138
    %2159 = vmatpush1.msra.mxu0 %v2137
    %2160 = vmatprep.subr.mxu0 %v2140
    %2161 = vmatpush1.msra.mxu0 %v2139
    %2162 = vmatprep.subr.mxu0 %v2142
    %2163 = vmatpush1.msra.mxu0 %v2141
    %2164 = vmatprep.subr.mxu0 %v2144
    %2165 = vmatpush1.msra.mxu0 %v2143
    %2166 = vmatprep.subr.mxu0 %v2146
    %2167 = vmatpush1.msra.mxu0 %v2145
    %2168 = vmatprep.subr.mxu0 %v2148
    %2169 = vmatpush1.msra.mxu0 %v2147
    %2170 = vmatprep.subr.mxu0 %v2150
    %2171 = vmatpush1.msra.mxu0 %v2149
    %2172 = vmatprep.subr.mxu0 %v2152
    %2173 = vmatpush1.msra.mxu0 %v2151
    %2174 = vmatprep.subr.mxu0 0.0
    %2175 = vmatpush1.msra.mxu0 0.0
    %2176 = vmatprep.subr.mxu0 0.0
    %2177 = vmatpush1.msra.mxu0 0.0
    %2178 = vmatprep.subr.mxu0 0.0
    %2179 = vmatpush1.msra.mxu0 0.0
    %2180 = vmatprep.subr.mxu0 0.0
    %2181 = vmatpush1.msra.mxu0 0.0
    %2182 = vmatprep.subr.mxu0 0.0
    %2183 = vmatpush1.msra.mxu0 0.0
    %2184 = vmatprep.subr.mxu0 0.0
    %2185 = vmatpush1.msra.mxu0 0.0
    %2186 = vmatprep.subr.mxu0 0.0
    %2187 = vmatpush1.msra.mxu0 0.0
    %2188 = vmatprep.subr.mxu0 0.0
    %2189 = vmatpush1.msra.mxu0 0.0
    %2190 = vmatprep.subr.mxu0 0.0
    %2191 = vmatpush1.msra.mxu0 0.0
    %2192 = vmatprep.subr.mxu0 0.0
    %2193 = vmatpush1.msra.mxu0 0.0
    %2194 = vmatprep.subr.mxu0 0.0
    %2195 = vmatpush1.msra.mxu0 0.0
    %2196 = vmatprep.subr.mxu0 0.0
    %2197 = vmatpush1.msra.mxu0 0.0
    %2198 = vmatprep.subr.mxu0 0.0
    %2199 = vmatpush1.msra.mxu0 0.0
    %2200 = vmatprep.subr.mxu0 0.0
    %2201 = vmatpush1.msra.mxu0 0.0
    %2202 = vmatprep.subr.mxu0 0.0
    %2203 = vmatpush1.msra.mxu0 0.0
    %2204 = vmatprep.subr.mxu0 0.0
    %2205 = vmatpush1.msra.mxu0 0.0
    %2206 = vmatprep.subr.mxu0 0.0
    %2207 = vmatpush1.msra.mxu0 0.0
    %2208 = vmatprep.subr.mxu0 0.0
    %2209 = vmatpush1.msra.mxu0 0.0
    %2210 = vmatprep.subr.mxu0 0.0
    %2211 = vmatpush1.msra.mxu0 0.0
    %2212 = vmatprep.subr.mxu0 0.0
    %2213 = vmatpush1.msra.mxu0 0.0
    %2214 = vmatprep.subr.mxu0 0.0
    %2215 = vmatpush1.msra.mxu0 0.0
    %2216 = vmatprep.subr.mxu0 0.0
    %2217 = vmatpush1.msra.mxu0 0.0
    %2218 = vmatprep.subr.mxu0 0.0
    %2219 = vmatpush1.msra.mxu0 0.0
    %2220 = vmatprep.subr.mxu0 0.0
    %2221 = vmatpush1.msra.mxu0 0.0
    %2222 = vmatprep.mubr.f32.mxu0 0.0
    %2223 = vmatmul.mubr.f32.gmra.mrb[0].mxu0 %v2156
    %v2224 = vpop.f32.mrb[0].mxu0
    %v2225 = vadd.f32 0.0, %v2224
    %v2226 = vpop.f32.mrb[0].mxu0
    %v2227 = vadd.f32 0.0, %v2226
    %2228 = vdwg.mxu0
    %v2230 = vrot.slane %v2225, 2
    %v2232 = vadd.f32 %v1394, %v2230
    %v2233 = vxor.u32 %v2232, 2147483648
    %v2234 = vmul.f32 %v2233, 1.442695
    %v2235 = vpow.pop %v2234
    %v2236 = vadd.f32 %v2235, 1.0
    %v2237 = vrcp.pop %v2236
    %v2238 = vmul.f32 1.0, %v2237
    %v2239 = vadd.f32 %v2227, %v1402
    %v2241 = vrot.slane %v2239, 2
    %v2243 = vmul.f32 %v2238, %v2241
    %v2244 = vadd.f32 %v1395, %v2243
    %v2245 = vtanh.pop %v2244
    %v2246 = vsub.f32 1.0, %v2238
    %2248 = vrot.lane.b32.xlu0 %v2245, 64
    %v2249 = vpop.permute.xlu0 %2248
    %v2251 = vmul.f32 %v2246, %v2249
    %v2252 = vrot.slane %v2130, 7
    %v2254 = vmul.f32 %v2238, %v2252
    %v2255 = vadd.f32 %v2251, %v2254
    %2257 = vrot.lane.b32.xlu0 %v2255, 64
    %v2258 = vpop.permute.xlu0 %2257
    %2260 = vst.msk [vmem:[#allocation2] sm:$0x40] %vm1142, %v2258
    %2261 = vst.msk [vmem:[#allocation2 - $0x5] sm:$0x40] %vm1144, %v2258
    %v2262 = vld [vmem:[#allocation9] sm:$0xff]
    %v2263 = vld [vmem:[#allocation9 + $0x8] sm:$0xff]
    %v2264 = vld [vmem:[#allocation9 + $0x10] sm:$0xff]
    %v2265 = vld [vmem:[#allocation9 + $0x18] sm:$0xff]
    %v2266 = vld [vmem:[#allocation9 + $0x20] sm:$0xff]
    %v2267 = vld [vmem:[#allocation9 + $0x28] sm:$0xff]
    %v2268 = vld [vmem:[#allocation9 + $0x30] sm:$0xff]
    %v2269 = vld [vmem:[#allocation9 + $0x38] sm:$0xff]
    %v2270 = vld [vmem:[#allocation9 + $0x40] sm:$0xff]
    %v2271 = vld [vmem:[#allocation9 + $0x48] sm:$0xff]
    %v2272 = vld [vmem:[#allocation9 + $0x50] sm:$0xff]
    %v2273 = vld [vmem:[#allocation9 + $0x58] sm:$0xff]
    %v2274 = vld [vmem:[#allocation9 + $0x60] sm:$0xff]
    %v2275 = vld [vmem:[#allocation9 + $0x68] sm:$0xff]
    %v2276 = vld [vmem:[#allocation9 + $0x70] sm:$0xff]
    %v2277 = vld [vmem:[#allocation9 + $0x78] sm:$0xff]
    %v2278 = vrot.slane %v2255, 6
    %2279 = vrot.lane.b32.xlu0 %v2278, 64
    %v2280 = vpop.permute.xlu0 %2279
    %v2281 = vsel %vm285, %v2280, 0
    %2283 = vmatprep.subr.mxu0 %v2263
    %2284 = vmatpush1.msra.mxu0 %v2262
    %2285 = vmatprep.subr.mxu0 %v2265
    %2286 = vmatpush1.msra.mxu0 %v2264
    %2287 = vmatprep.subr.mxu0 %v2267
    %2288 = vmatpush1.msra.mxu0 %v2266
    %2289 = vmatprep.subr.mxu0 %v2269
    %2290 = vmatpush1.msra.mxu0 %v2268
    %2291 = vmatprep.subr.mxu0 %v2271
    %2292 = vmatpush1.msra.mxu0 %v2270
    %2293 = vmatprep.subr.mxu0 %v2273
    %2294 = vmatpush1.msra.mxu0 %v2272
    %2295 = vmatprep.subr.mxu0 %v2275
    %2296 = vmatpush1.msra.mxu0 %v2274
    %2297 = vmatprep.subr.mxu0 %v2277
    %2298 = vmatpush1.msra.mxu0 %v2276
    %2299 = vmatprep.subr.mxu0 0.0
    %2300 = vmatpush1.msra.mxu0 0.0
    %2301 = vmatprep.subr.mxu0 0.0
    %2302 = vmatpush1.msra.mxu0 0.0
    %2303 = vmatprep.subr.mxu0 0.0
    %2304 = vmatpush1.msra.mxu0 0.0
    %2305 = vmatprep.subr.mxu0 0.0
    %2306 = vmatpush1.msra.mxu0 0.0
    %2307 = vmatprep.subr.mxu0 0.0
    %2308 = vmatpush1.msra.mxu0 0.0
    %2309 = vmatprep.subr.mxu0 0.0
    %2310 = vmatpush1.msra.mxu0 0.0
    %2311 = vmatprep.subr.mxu0 0.0
    %2312 = vmatpush1.msra.mxu0 0.0
    %2313 = vmatprep.subr.mxu0 0.0
    %2314 = vmatpush1.msra.mxu0 0.0
    %2315 = vmatprep.subr.mxu0 0.0
    %2316 = vmatpush1.msra.mxu0 0.0
    %2317 = vmatprep.subr.mxu0 0.0
    %2318 = vmatpush1.msra.mxu0 0.0
    %2319 = vmatprep.subr.mxu0 0.0
    %2320 = vmatpush1.msra.mxu0 0.0
    %2321 = vmatprep.subr.mxu0 0.0
    %2322 = vmatpush1.msra.mxu0 0.0
    %2323 = vmatprep.subr.mxu0 0.0
    %2324 = vmatpush1.msra.mxu0 0.0
    %2325 = vmatprep.subr.mxu0 0.0
    %2326 = vmatpush1.msra.mxu0 0.0
    %2327 = vmatprep.subr.mxu0 0.0
    %2328 = vmatpush1.msra.mxu0 0.0
    %2329 = vmatprep.subr.mxu0 0.0
    %2330 = vmatpush1.msra.mxu0 0.0
    %2331 = vmatprep.subr.mxu0 0.0
    %2332 = vmatpush1.msra.mxu0 0.0
    %2333 = vmatprep.subr.mxu0 0.0
    %2334 = vmatpush1.msra.mxu0 0.0
    %2335 = vmatprep.subr.mxu0 0.0
    %2336 = vmatpush1.msra.mxu0 0.0
    %2337 = vmatprep.subr.mxu0 0.0
    %2338 = vmatpush1.msra.mxu0 0.0
    %2339 = vmatprep.subr.mxu0 0.0
    %2340 = vmatpush1.msra.mxu0 0.0
    %2341 = vmatprep.subr.mxu0 0.0
    %2342 = vmatpush1.msra.mxu0 0.0
    %2343 = vmatprep.subr.mxu0 0.0
    %2344 = vmatpush1.msra.mxu0 0.0
    %2345 = vmatprep.subr.mxu0 0.0
    %2346 = vmatpush1.msra.mxu0 0.0
    %2347 = vmatprep.mubr.f32.mxu0 0.0
    %2348 = vmatmul.mubr.f32.gmra.mrb[0].mxu0 %v2281
    %v2349 = vpop.f32.mrb[0].mxu0
    %v2350 = vadd.f32 0.0, %v2349
    %v2351 = vpop.f32.mrb[0].mxu0
    %v2352 = vadd.f32 0.0, %v2351
    %2353 = vdwg.mxu0
    %v2355 = vrot.slane %v2350, 1
    %v2357 = vadd.f32 %v1400, %v2355
    %v2358 = vxor.u32 %v2357, 2147483648
    %v2359 = vmul.f32 %v2358, 1.442695
    %v2360 = vpow.pop %v2359
    %v2361 = vadd.f32 %v2360, 1.0
    %v2362 = vrcp.pop %v2361
    %v2363 = vmul.f32 1.0, %v2362
    %v2364 = vadd.f32 %v2352, %v1402
    %v2366 = vrot.slane %v2364, 1
    %v2368 = vmul.f32 %v2363, %v2366
    %v2369 = vadd.f32 %v1401, %v2368
    %v2370 = vtanh.pop %v2369
    %v2371 = vsub.f32 1.0, %v2363
    %2373 = vrot.lane.b32.xlu0 %v2370, 64
    %v2374 = vpop.permute.xlu0 %2373
    %v2376 = vmul.f32 %v2371, %v2374
    %v2377 = vrot.slane %v2255, 7
    %v2379 = vmul.f32 %v2363, %v2377
    %v2380 = vadd.f32 %v2376, %v2379
    %2382 = vrot.lane.b32.xlu0 %v2380, 64
    %v2383 = vpop.permute.xlu0 %2382
    %2385 = vst.msk [vmem:[#allocation2] sm:$0x80] %vm1269, %v2383
    %2386 = vst.msk [vmem:[#allocation2 - $0x7] sm:$0x80] %vm1271, %v2383
    %v2387 = vld [vmem:[#allocation2] sm:$0xff]
    %v2388 = vld [vmem:[#allocation11] sm:$0xff]
    %v2389 = vld [vmem:[#allocation11 + $0x8] sm:$0xff]
    %v2390 = vld [vmem:[#allocation11 + $0x10] sm:$0xff]
    %v2391 = vld [vmem:[#allocation11 + $0x18] sm:$0xff]
    %v2392 = vld [vmem:[#allocation11 + $0x20] sm:$0xff]
    %v2393 = vld [vmem:[#allocation11 + $0x28] sm:$0xff]
    %v2394 = vld [vmem:[#allocation11 + $0x30] sm:$0xff]
    %v2395 = vld [vmem:[#allocation11 + $0x38] sm:$0xff]
    %v2396 = vld [vmem:[%s10] sm:$0x1]
    %v2398 = vlaneseq
    %v2399 = vshrl.u32 %v2398, 7
    %v2400 = vsub.s32 0, %v2399
    %v2401 = vrot.slane %v2396, %v2400
    %v2404 = vsel %vm285, %v2387, 0
    %2406 = vmatprep.subr.mxu0 0.0
    %2407 = vmatpush1.msra.mxu0 %v2388
    %2408 = vmatprep.subr.mxu0 0.0
    %2409 = vmatpush1.msra.mxu0 %v2389
    %2410 = vmatprep.subr.mxu0 0.0
    %2411 = vmatpush1.msra.mxu0 %v2390
    %2412 = vmatprep.subr.mxu0 0.0
    %2413 = vmatpush1.msra.mxu0 %v2391
    %2414 = vmatprep.subr.mxu0 0.0
    %2415 = vmatpush1.msra.mxu0 %v2392
    %2416 = vmatprep.subr.mxu0 0.0
    %2417 = vmatpush1.msra.mxu0 %v2393
    %2418 = vmatprep.subr.mxu0 0.0
    %2419 = vmatpush1.msra.mxu0 %v2394
    %2420 = vmatprep.subr.mxu0 0.0
    %2421 = vmatpush1.msra.mxu0 %v2395
    %2422 = vmatprep.subr.mxu0 0.0
    %2423 = vmatpush1.msra.mxu0 0.0
    %2424 = vmatprep.subr.mxu0 0.0
    %2425 = vmatpush1.msra.mxu0 0.0
    %2426 = vmatprep.subr.mxu0 0.0
    %2427 = vmatpush1.msra.mxu0 0.0
    %2428 = vmatprep.subr.mxu0 0.0
    %2429 = vmatpush1.msra.mxu0 0.0
    %2430 = vmatprep.subr.mxu0 0.0
    %2431 = vmatpush1.msra.mxu0 0.0
    %2432 = vmatprep.subr.mxu0 0.0
    %2433 = vmatpush1.msra.mxu0 0.0
    %2434 = vmatprep.subr.mxu0 0.0
    %2435 = vmatpush1.msra.mxu0 0.0
    %2436 = vmatprep.subr.mxu0 0.0
    %2437 = vmatpush1.msra.mxu0 0.0
    %2438 = vmatprep.subr.mxu0 0.0
    %2439 = vmatpush1.msra.mxu0 0.0
    %2440 = vmatprep.subr.mxu0 0.0
    %2441 = vmatpush1.msra.mxu0 0.0
    %2442 = vmatprep.subr.mxu0 0.0
    %2443 = vmatpush1.msra.mxu0 0.0
    %2444 = vmatprep.subr.mxu0 0.0
    %2445 = vmatpush1.msra.mxu0 0.0
    %2446 = vmatprep.subr.mxu0 0.0
    %2447 = vmatpush1.msra.mxu0 0.0
    %2448 = vmatprep.subr.mxu0 0.0
    %2449 = vmatpush1.msra.mxu0 0.0
    %2450 = vmatprep.subr.mxu0 0.0
    %2451 = vmatpush1.msra.mxu0 0.0
    %2452 = vmatprep.subr.mxu0 0.0
    %2453 = vmatpush1.msra.mxu0 0.0
    %2454 = vmatprep.subr.mxu0 0.0
    %2455 = vmatpush1.msra.mxu0 0.0
    %2456 = vmatprep.subr.mxu0 0.0
    %2457 = vmatpush1.msra.mxu0 0.0
    %2458 = vmatprep.subr.mxu0 0.0
    %2459 = vmatpush1.msra.mxu0 0.0
    %2460 = vmatprep.subr.mxu0 0.0
    %2461 = vmatpush1.msra.mxu0 0.0
    %2462 = vmatprep.subr.mxu0 0.0
    %2463 = vmatpush1.msra.mxu0 0.0
    %2464 = vmatprep.subr.mxu0 0.0
    %2465 = vmatpush1.msra.mxu0 0.0
    %2466 = vmatprep.subr.mxu0 0.0
    %2467 = vmatpush1.msra.mxu0 0.0
    %2468 = vmatprep.subr.mxu0 0.0
    %2469 = vmatpush1.msra.mxu0 0.0
    %2470 = vmatprep.mubr.f32.mxu0 0.0
    %2471 = vmatmul.mubr.f32.gmra.mrb[0].mxu0 %v2404
    %v2472 = vpop.f32.mrb[0].mxu0
    %v2473 = vadd.f32 %v2401, %v2472
    %v2474 = vpop.f32.mrb[0].mxu0
    %2475 = vdwg.mxu0
    %2476 = vmax.xlane.f32.xlu0 %v2473
    %v2477 = vpop.xlane.xlu0 %2476
    %v2478 = vsub.f32 %v2473, %v2477
    %v2479 = vmul.f32 %v2478, 1.442695
    %v2480 = vpow.pop %v2479
    %2481 = vadd.xlane.f32.xlu0 %v2480
    %v2482 = vpop.xlane.xlu0 %2481
    %v2483 = vlog2.pop %v2482
    %v2484 = vmul.f32 %v2483, 0.6931472
    %v2485 = vsub.f32 %v2478, %v2484
    %2486 = vst [vmem:[#allocation12] sm:$0xff] %v2485
    // Predicated region
    $region66: #{gru_classifier1_forward.1} parent=1 // pred_check
      _
    $region67: #{gru_classifier1_forward.1} parent=1 // pred_check_branch
      %2488 = sbr.rel (0) target = $region69
    $region68: #{gru_classifier1_forward.1} parent=1 // pred_region
      %s2490 = ssub.s32 128, 128
      %2491 = vsyncadd [#allocation5], %s2490
      %s2493 = sshll.u32 [#allocation12], 4
      %s2494 = int_to_ptr.vmem [resolvable:$true] %s2493
      %2496 = dma.vmem_to_hbm [thread:$0]  %s2494, 128, %s11, [#allocation5]
    $region69: #{gru_classifier1_forward.1} parent=1 // pred_fallthru
      _
    // Predicated region
    $region70: #{gru_classifier1_forward.1} parent=1 // pred_check
      _
    $region71: #{gru_classifier1_forward.1} parent=1 // pred_check_branch
      %2498 = sbr.rel (0) target = $region73
    $region72: #{gru_classifier1_forward.1} parent=1 // pred_region
      %2499 = dma.done [#allocation5], 128
    $region73: #{gru_classifier1_forward.1} parent=1 // pred_fallthru
      _
    %2500 = vsyncpa [#allocation4], 1
    %2501 = vsyncpa [#allocation7], 1
    %2502 = vsyncpa [#allocation10], 1
    %2503 = vsyncpa [#allocation5], 1

</llo_original>
